<compile_context>
chip_gen: v6e
topology: v6e:2x2x1
jax: 0.10.0
libtpu: 0.0.40
codegen_flags: <defaults>
</compile_context>

<pallas_src>
import math
from functools import partial

import jax
import jax.numpy as jnp
from jax.experimental import pallas as pl
from jax.experimental.pallas import tpu as pltpu

LATENT_DIM = 40
NUM_QUERIES = 16
NUM_HEADS = 4
HEAD_DIM = LATENT_DIM // NUM_HEADS       # 10
INPUT_DIM = 640
OUT_PAD = 128                            # width of every lane-aligned block / padded output
N_BLOCKS = NUM_HEADS + 1                 # K block + one 128-wide block per head (V @ Wo)
KVP_COLS = N_BLOCKS * OUT_PAD            # fused projection output width (640)


def qformer_kernel(x_ref, w_ref, qexp_ref, bias_ref, out_ref):
    """One grid step = Bt batch elements.

    x_ref:    (Bt, L, Din)   f32 tokens (cast to bf16 in-kernel)
    w_ref:    (Din, 5*128)   bf16 fused projection: cols [0,128)=K, [128(h+1),128(h+2))=V_h@Wo_h
    qexp_ref: (128, H*NQ)    bf16 block-diagonal, pre-scaled (queries @ Wq + bq) / sqrt(HD)
    bias_ref: (1, 128)       f32 folded output bias (first 40 lanes)
    out_ref:  (Bt*NQ, 128)   f32 lane-dense padded output
    """
    Bt, L, Din = x_ref.shape
    HNQ = NUM_HEADS * NUM_QUERIES

    # Single well-shaped Din-contraction matmul; every output block is 128-lane aligned.
    x2 = x_ref[...].reshape(Bt * L, Din).astype(jnp.bfloat16)
    kvp = jnp.dot(x2, w_ref[...], preferred_element_type=jnp.float32)      # (Bt*L, 640)

    # Flat scores matmul: H*NQ = 64 on the lane axis (one MXU call, no per-batch einsum).
    k_blk = kvp[:, :OUT_PAD].astype(jnp.bfloat16)                          # aligned slice
    s = jnp.dot(k_blk, qexp_ref[...], preferred_element_type=jnp.float32)  # (Bt*L, 64)

    # Softmax over keys: reduce over L = sublane (axis=1) reduction per batch group.
    s3 = s.reshape(Bt, L, HNQ)
    s3 = s3 - jnp.max(s3, axis=1, keepdims=True)
    e = jnp.exp(s3)
    p = e * pl.reciprocal(jnp.sum(e, axis=1, keepdims=True), approx=True)  # (Bt, L, 64)
    p_t = jnp.swapaxes(p, 1, 2).astype(jnp.bfloat16)                       # (Bt, 64, L)

    # Per-head attention output.  Wo is folded into each head's V projection and each head
    # block is already 128 lanes wide, so partial results accumulate straight into the
    # padded accumulator: no concatenate, no sub-128 output slices, unmasked final store.
    acc = jnp.zeros((Bt, NUM_QUERIES, OUT_PAD), jnp.float32)
    for h in range(NUM_HEADS):
        p_h = p_t[:, h * NUM_QUERIES:(h + 1) * NUM_QUERIES, :]             # (Bt, NQ, L)
        v_h = kvp[:, (h + 1) * OUT_PAD:(h + 2) * OUT_PAD]                  # aligned slice
        v_h = v_h.reshape(Bt, L, OUT_PAD).astype(jnp.bfloat16)
        acc = acc + jnp.einsum('bql,bld->bqd', p_h, v_h,
                               preferred_element_type=jnp.float32)

    # All biases fold into one constant: the K bias cancels under softmax (constant shift
    # over keys) and the V / out-proj biases collapse because softmax rows sum to 1.
    out_ref[...] = acc.reshape(Bt * NUM_QUERIES, OUT_PAD) + bias_ref[...]


def _hw_info():
    """(vmem_capacity_bytes, tensorcores_per_chip) with conservative fallbacks."""
    cap, cores = None, 1
    try:
        info = pltpu.get_tpu_info()
        cap = getattr(info, "vmem_capacity_bytes", None)
        for attr in ("num_cores", "core_count", "num_tensorcores", "tensorcore_count"):
            v = getattr(info, attr, None)
            if isinstance(v, int) and v > 1:
                cores = v
                break
    except Exception:
        pass
    try:
        kind = jax.devices()[0].device_kind.lower()
    except Exception:
        kind = ""
    if "7x" in kind or "v7" in kind:      # v7x: 2 TensorCores / chip, 64 MiB VMEM per TC
        cores = max(cores, 2)
        cap = cap or (64 << 20)
    if not cap:
        cap = 64 << 20                    # conservative default (smallest generation)
    return int(cap), int(cores)


def _vmem_estimate(bt, L, Din):
    """Rough per-step VMEM footprint: double-buffered blocks + kernel intermediates."""
    toks = 2 * bt * L * Din * 4                                    # f32 token block
    outb = 2 * bt * NUM_QUERIES * OUT_PAD * 4                      # f32 output block
    wts = 2 * (Din * KVP_COLS * 2 + OUT_PAD * NUM_HEADS * NUM_QUERIES * 2 + OUT_PAD * 4)
    inter = (bt * L * KVP_COLS * 4 * 2                             # kvp + bf16 copies
             + bt * L * NUM_HEADS * NUM_QUERIES * 4 * 4            # scores / softmax temps
             + bt * NUM_QUERIES * OUT_PAD * 4 * 6)                 # per-head outputs + acc
    return toks + outb + wts + inter


def _plan(B, L, Din):
    """Pick (Bt, steps, vmem_limit): fewest grid steps (a multiple of the TensorCore count
    on multi-core chips, grid=(1,) allowed on v5e/v6e) whose per-step block fits a derated
    VMEM budget.  Caller pads B up to steps*Bt."""
    cap, cores = _hw_info()
    budget = min(cap // 3, 22 << 20)      # ~20-24 MiB derate (covers v7x's 64 MiB per TC)
    steps = cores if B >= cores else 1
    while True:
        bt = -(-B // steps)               # cdiv
        if _vmem_estimate(bt, L, Din) <= budget or bt == 1:
            break
        steps += cores
    vmem_limit = int(min(cap * 3 // 4, max(32 << 20, 2 * _vmem_estimate(bt, L, Din))))
    return bt, steps, vmem_limit


@partial(jax.jit, static_argnums=(2, 3, 4))
def _qformer_pallas(token_embs, params, bt, steps, vmem_limit):
    B, L, Din = token_embs.shape
    scale = 1.0 / math.sqrt(HEAD_DIM)

    # torch.nn.MultiheadAttention packs in_proj_weight rows as [Wq; Wk; Wv].
    wq = params["in_proj_w"][0 * LATENT_DIM:1 * LATENT_DIM]
    wk = params["in_proj_w"][1 * LATENT_DIM:2 * LATENT_DIM]
    wv = params["in_proj_w"][2 * LATENT_DIM:3 * LATENT_DIM]
    bq = params["in_proj_b"][0 * LATENT_DIM:1 * LATENT_DIM]
    bv = params["in_proj_b"][2 * LATENT_DIM:3 * LATENT_DIM]
    # (bk is dropped: it shifts all scores of a (batch, head, query) row by the same
    #  constant across keys, which the softmax is invariant to.)

    # Hoisted, batch-invariant query projection -> block-diagonal, pre-scaled, zero-padded
    # to 128 contraction rows so it matmuls directly against the K block of kvp.
    q = params["queries"] @ wq.T + bq                              # (NQ, LAT)
    qexp_t = jnp.zeros((OUT_PAD, NUM_HEADS * NUM_QUERIES), jnp.float32)
    for h in range(NUM_HEADS):
        d0 = h * HEAD_DIM
        qexp_t = qexp_t.at[d0:d0 + HEAD_DIM,
                           h * NUM_QUERIES:(h + 1) * NUM_QUERIES].set(
            scale * q[:, d0:d0 + HEAD_DIM].T)

    # Fused projection weight, 128-lane-aligned blocks:
    #   cols [0, 40)                 : K  = proj -> Wk
    #   cols [128(h+1), 128(h+1)+40) : per-head V @ Wo = proj -> Wv_h -> Wo_h (Wo folded in)
    w_fused = jnp.zeros((Din, KVP_COLS), jnp.float32)
    w_fused = w_fused.at[:, :LATENT_DIM].set(params["proj_w"].T @ wk.T)
    wo_t = params["out_proj_w"].T                                  # (LAT, LAT)
    b_total = params["out_proj_b"]
    for h in range(NUM_HEADS):
        d0 = h * HEAD_DIM
        wo_h = wo_t[d0:d0 + HEAD_DIM, :]                           # (HD, LAT)
        wvo_h = params["proj_w"].T @ wv.T[:, d0:d0 + HEAD_DIM] @ wo_h
        w_fused = w_fused.at[:, (h + 1) * OUT_PAD:(h + 1) * OUT_PAD + LATENT_DIM].set(wvo_h)
        b_total = b_total + (params["proj_b"] @ wv.T[:, d0:d0 + HEAD_DIM]
                             + bv[d0:d0 + HEAD_DIM]) @ wo_h
    bias_pad = jnp.zeros((1, OUT_PAD), jnp.float32).at[0, :LATENT_DIM].set(b_total)

    w_fused = w_fused.astype(jnp.bfloat16)
    qexp_t = qexp_t.astype(jnp.bfloat16)

    # Pad the batch so it divides into `steps` blocks of Bt (padded rows discarded below).
    b_pad = bt * steps
    x = token_embs
    if b_pad != B:
        x = jnp.pad(x, ((0, b_pad - B), (0, 0), (0, 0)))

    out_padded = pl.pallas_call(
        qformer_kernel,
        out_shape=jax.ShapeDtypeStruct((b_pad * NUM_QUERIES, OUT_PAD), jnp.float32),
        grid_spec=pltpu.PrefetchScalarGridSpec(
            num_scalar_prefetch=0,
            grid=(steps,),
            in_specs=[
                pl.BlockSpec((bt, L, Din), lambda b: (b, 0, 0)),                  # tokens f32
                pl.BlockSpec((Din, KVP_COLS), lambda b: (0, 0)),                  # fused W
                pl.BlockSpec((OUT_PAD, NUM_HEADS * NUM_QUERIES), lambda b: (0, 0)),
                pl.BlockSpec((1, OUT_PAD), lambda b: (0, 0)),
            ],
            out_specs=pl.BlockSpec((bt * NUM_QUERIES, OUT_PAD), lambda b: (b, 0)),
        ),
        compiler_params=pltpu.CompilerParams(
            dimension_semantics=("parallel",),
            vmem_limit_bytes=vmem_limit,
        ),
    )(x, w_fused, qexp_t, bias_pad)

    return out_padded[:B * NUM_QUERIES, :LATENT_DIM].reshape(B, NUM_QUERIES, LATENT_DIM)


def qformer_forward(token_embs, params):
    B, L, Din = token_embs.shape
    bt, steps, vmem_limit = _plan(B, L, Din)
    return _qformer_pallas(token_embs, params, bt, steps, vmem_limit)


def qformer_reference(token_embs, params):
    """Pure-JAX f32 reference mirroring torch.nn.MultiheadAttention semantics."""
    B, L, _ = token_embs.shape
    kv = token_embs @ params["proj_w"].T + params["proj_b"]            # (B, L, LAT)
    q0 = jnp.broadcast_to(params["queries"][None], (B, NUM_QUERIES, LATENT_DIM))

    wq = params["in_proj_w"][0 * LATENT_DIM:1 * LATENT_DIM]
    wk = params["in_proj_w"][1 * LATENT_DIM:2 * LATENT_DIM]
    wv = params["in_proj_w"][2 * LATENT_DIM:3 * LATENT_DIM]
    bq = params["in_proj_b"][0 * LATENT_DIM:1 * LATENT_DIM]
    bk = params["in_proj_b"][1 * LATENT_DIM:2 * LATENT_DIM]
    bv = params["in_proj_b"][2 * LATENT_DIM:3 * LATENT_DIM]

    q = q0 @ wq.T + bq
    k = kv @ wk.T + bk
    v = kv @ wv.T + bv

    def split(t):
        return t.reshape(B, -1, NUM_HEADS, HEAD_DIM).transpose(0, 2, 1, 3)

    qh, kh, vh = split(q), split(k), split(v)                          # (B, H, *, HD)
    scores = jnp.einsum("bhqd,bhkd->bhqk", qh, kh) / math.sqrt(HEAD_DIM)
    p = jax.nn.softmax(scores, axis=-1)
    o = jnp.einsum("bhqk,bhkd->bhqd", p, vh)
    o = o.transpose(0, 2, 1, 3).reshape(B, NUM_QUERIES, LATENT_DIM)
    return o @ params["out_proj_w"].T + params["out_proj_b"]


def init_params(key):
    ks = jax.random.split(key, 7)
    return {
        "queries": jax.random.normal(ks[0], (NUM_QUERIES, LATENT_DIM), jnp.float32),
        "proj_w": jax.random.normal(ks[1], (LATENT_DIM, INPUT_DIM), jnp.float32) * 0.02,
        "proj_b": jax.random.normal(ks[2], (LATENT_DIM,), jnp.float32) * 0.02,
        "in_proj_w": jax.random.normal(ks[3], (3 * LATENT_DIM, LATENT_DIM), jnp.float32) * 0.1,
        "in_proj_b": jax.random.normal(ks[4], (3 * LATENT_DIM,), jnp.float32) * 0.1,
        "out_proj_w": jax.random.normal(ks[5], (LATENT_DIM, LATENT_DIM), jnp.float32) * 0.1,
        "out_proj_b": jax.random.normal(ks[6], (LATENT_DIM,), jnp.float32) * 0.1,
    }


if __name__ == "__main__":
    key = jax.random.PRNGKey(0)
    k_params, k_x = jax.random.split(key)

    # Small demo shapes; the planner gives grid=(1,) with Bt=B on 1-TC chips (v5e/v6e) and
    # an even step count (Bt=B//2) on v7x.
    B, L = 16, 8
    params = init_params(k_params)
    token_embs = jax.random.normal(k_x, (B, L, INPUT_DIM), jnp.float32)

    out = qformer_forward(token_embs, params)
    out = jax.block_until_ready(out)

    ref = qformer_reference(token_embs, params)
    assert out.shape == (B, NUM_QUERIES, LATENT_DIM)
    # bf16 MXU operands + approx reciprocal + offline weight folding -> loosened tolerance.
    assert jnp.allclose(out, ref, atol=2e-2, rtol=2e-2), "mismatch vs JAX reference"

    print("KERNEL_OK")
</pallas_src>

<mosaic_0001>
module attributes {stable_mosaic.version = 11 : i64} {
  func.func @qformer_kernel(%arg0: i32, %arg1: memref<16x8x640xf32, #tpu.memory_space<vmem>>, %arg2: memref<640x640xbf16, #tpu.memory_space<vmem>>, %arg3: memref<128x64xbf16, #tpu.memory_space<vmem>>, %arg4: memref<1x128xf32, #tpu.memory_space<vmem>>, %arg5: memref<256x128xf32, #tpu.memory_space<vmem>>) attributes {dimension_semantics = [#tpu.dimension_semantics<parallel>], iteration_bounds = array<i64: 1>, scalar_prefetch = 0 : i64, scratch_operands = 0 : i64, tpu.core_type = #tpu.core_type<tc>, window_params = [{transform_indices = @transform_0, window_bounds = array<i64: 16, 8, 640>}, {pipeline_mode = #tpu.pipeline_mode<synchronous>, transform_indices = @transform_1, window_bounds = array<i64: 640, 640>}, {pipeline_mode = #tpu.pipeline_mode<synchronous>, transform_indices = @transform_2, window_bounds = array<i64: 128, 64>}, {pipeline_mode = #tpu.pipeline_mode<synchronous>, transform_indices = @transform_3, window_bounds = array<i64: 1, 128>}, {transform_indices = @transform_4, window_bounds = array<i64: 256, 128>}]} {
    %c0 = arith.constant 0 : index
    %c0_0 = arith.constant 0 : index
    %c0_1 = arith.constant 0 : index
    %0 = vector.load %arg1[%c0, %c0_0, %c0_1] : memref<16x8x640xf32, #tpu.memory_space<vmem>>, vector<16x8x640xf32>
    %1 = vector.shape_cast %0 : vector<16x8x640xf32> to vector<128x640xf32>
    %2 = arith.truncf %1 : vector<128x640xf32> to vector<128x640xbf16>
    %c0_2 = arith.constant 0 : index
    %c0_3 = arith.constant 0 : index
    %3 = vector.load %arg2[%c0_2, %c0_3] : memref<640x640xbf16, #tpu.memory_space<vmem>>, vector<640x640xbf16>
    %cst = arith.constant dense<0.000000e+00> : vector<128x640xf32>
    %4 = tpu.matmul %2, %3, %cst {dimension_numbers = #tpu.dot_dimension_numbers<[1], [0], [0], [1], [0, 0, 1, 1], [], []>} : vector<128x640xbf16>, vector<640x640xbf16>, vector<128x640xf32> -> vector<128x640xf32>
    %5 = vector.extract_strided_slice %4 {offsets = [0, 0], sizes = [128, 128], strides = [1, 1]} : vector<128x640xf32> to vector<128x128xf32>
    %6 = arith.truncf %5 : vector<128x128xf32> to vector<128x128xbf16>
    %c0_4 = arith.constant 0 : index
    %c0_5 = arith.constant 0 : index
    %7 = vector.load %arg3[%c0_4, %c0_5] : memref<128x64xbf16, #tpu.memory_space<vmem>>, vector<128x64xbf16>
    %cst_6 = arith.constant dense<0.000000e+00> : vector<128x64xf32>
    %8 = tpu.matmul %6, %7, %cst_6 {dimension_numbers = #tpu.dot_dimension_numbers<[1], [0], [0], [1], [0, 0, 1, 1], [], []>} : vector<128x128xbf16>, vector<128x64xbf16>, vector<128x64xf32> -> vector<128x64xf32>
    %9 = vector.shape_cast %8 : vector<128x64xf32> to vector<16x8x64xf32>
    %cst_7 = arith.constant dense<0xFF800000> : vector<16x64xf32>
    %10 = vector.multi_reduction <maximumf>, %9, %cst_7 [1] : vector<16x8x64xf32> to vector<16x64xf32>
    %11 = vector.shape_cast %10 : vector<16x64xf32> to vector<16x1x64xf32>
    %12 = vector.broadcast %11 : vector<16x1x64xf32> to vector<16x8x64xf32>
    %13 = arith.subf %9, %12 : vector<16x8x64xf32>
    %14 = math.exp %13 : vector<16x8x64xf32>
    %cst_8 = arith.constant dense<0.000000e+00> : vector<16x64xf32>
    %15 = vector.multi_reduction <add>, %14, %cst_8 [1] : vector<16x8x64xf32> to vector<16x64xf32>
    %16 = vector.shape_cast %15 : vector<16x64xf32> to vector<16x1x64xf32>
    %17 = tpu.reciprocal %16 {approx = true} : vector<16x1x64xf32> -> vector<16x1x64xf32>
    %18 = vector.broadcast %17 : vector<16x1x64xf32> to vector<16x8x64xf32>
    %19 = arith.mulf %14, %18 : vector<16x8x64xf32>
    %20 = tpu.transpose %19, [0, 2, 1] : vector<16x8x64xf32> -> vector<16x64x8xf32>
    %21 = arith.truncf %20 : vector<16x64x8xf32> to vector<16x64x8xbf16>
    %cst_9 = arith.constant 0.000000e+00 : f32
    %22 = vector.broadcast %cst_9 : f32 to vector<16x16x128xf32>
    %23 = vector.extract_strided_slice %21 {offsets = [0, 0, 0], sizes = [16, 16, 8], strides = [1, 1, 1]} : vector<16x64x8xbf16> to vector<16x16x8xbf16>
    %24 = vector.extract_strided_slice %4 {offsets = [0, 128], sizes = [128, 128], strides = [1, 1]} : vector<128x640xf32> to vector<128x128xf32>
    %25 = vector.shape_cast %24 : vector<128x128xf32> to vector<16x8x128xf32>
    %26 = arith.truncf %25 : vector<16x8x128xf32> to vector<16x8x128xbf16>
    "tpu.trace_start"() <{level = 10 : i32, message = "bql,bld->bqd"}> : () -> ()
    %cst_10 = arith.constant dense<0.000000e+00> : vector<16x16x128xf32>
    %27 = tpu.matmul %23, %26, %cst_10 {dimension_numbers = #tpu.dot_dimension_numbers<[2], [1], [1], [2], [0, 0, 0, 1, 1, 2], [0], [0]>} : vector<16x16x8xbf16>, vector<16x8x128xbf16>, vector<16x16x128xf32> -> vector<16x16x128xf32>
    "tpu.trace_stop"() : () -> ()
    %28 = arith.addf %22, %27 : vector<16x16x128xf32>
    %29 = vector.extract_strided_slice %21 {offsets = [0, 16, 0], sizes = [16, 16, 8], strides = [1, 1, 1]} : vector<16x64x8xbf16> to vector<16x16x8xbf16>
    %30 = vector.extract_strided_slice %4 {offsets = [0, 256], sizes = [128, 128], strides = [1, 1]} : vector<128x640xf32> to vector<128x128xf32>
    %31 = vector.shape_cast %30 : vector<128x128xf32> to vector<16x8x128xf32>
    %32 = arith.truncf %31 : vector<16x8x128xf32> to vector<16x8x128xbf16>
    "tpu.trace_start"() <{level = 10 : i32, message = "bql,bld->bqd"}> : () -> ()
    %cst_11 = arith.constant dense<0.000000e+00> : vector<16x16x128xf32>
    %33 = tpu.matmul %29, %32, %cst_11 {dimension_numbers = #tpu.dot_dimension_numbers<[2], [1], [1], [2], [0, 0, 0, 1, 1, 2], [0], [0]>} : vector<16x16x8xbf16>, vector<16x8x128xbf16>, vector<16x16x128xf32> -> vector<16x16x128xf32>
    "tpu.trace_stop"() : () -> ()
    %34 = arith.addf %28, %33 : vector<16x16x128xf32>
    %35 = vector.extract_strided_slice %21 {offsets = [0, 32, 0], sizes = [16, 16, 8], strides = [1, 1, 1]} : vector<16x64x8xbf16> to vector<16x16x8xbf16>
    %36 = vector.extract_strided_slice %4 {offsets = [0, 384], sizes = [128, 128], strides = [1, 1]} : vector<128x640xf32> to vector<128x128xf32>
    %37 = vector.shape_cast %36 : vector<128x128xf32> to vector<16x8x128xf32>
    %38 = arith.truncf %37 : vector<16x8x128xf32> to vector<16x8x128xbf16>
    "tpu.trace_start"() <{level = 10 : i32, message = "bql,bld->bqd"}> : () -> ()
    %cst_12 = arith.constant dense<0.000000e+00> : vector<16x16x128xf32>
    %39 = tpu.matmul %35, %38, %cst_12 {dimension_numbers = #tpu.dot_dimension_numbers<[2], [1], [1], [2], [0, 0, 0, 1, 1, 2], [0], [0]>} : vector<16x16x8xbf16>, vector<16x8x128xbf16>, vector<16x16x128xf32> -> vector<16x16x128xf32>
    "tpu.trace_stop"() : () -> ()
    %40 = arith.addf %34, %39 : vector<16x16x128xf32>
    %41 = vector.extract_strided_slice %21 {offsets = [0, 48, 0], sizes = [16, 16, 8], strides = [1, 1, 1]} : vector<16x64x8xbf16> to vector<16x16x8xbf16>
    %42 = vector.extract_strided_slice %4 {offsets = [0, 512], sizes = [128, 128], strides = [1, 1]} : vector<128x640xf32> to vector<128x128xf32>
    %43 = vector.shape_cast %42 : vector<128x128xf32> to vector<16x8x128xf32>
    %44 = arith.truncf %43 : vector<16x8x128xf32> to vector<16x8x128xbf16>
    "tpu.trace_start"() <{level = 10 : i32, message = "bql,bld->bqd"}> : () -> ()
    %cst_13 = arith.constant dense<0.000000e+00> : vector<16x16x128xf32>
    %45 = tpu.matmul %41, %44, %cst_13 {dimension_numbers = #tpu.dot_dimension_numbers<[2], [1], [1], [2], [0, 0, 0, 1, 1, 2], [0], [0]>} : vector<16x16x8xbf16>, vector<16x8x128xbf16>, vector<16x16x128xf32> -> vector<16x16x128xf32>
    "tpu.trace_stop"() : () -> ()
    %46 = arith.addf %40, %45 : vector<16x16x128xf32>
    %47 = vector.shape_cast %46 : vector<16x16x128xf32> to vector<256x128xf32>
    %c0_14 = arith.constant 0 : index
    %c0_15 = arith.constant 0 : index
    %48 = vector.load %arg4[%c0_14, %c0_15] : memref<1x128xf32, #tpu.memory_space<vmem>>, vector<1x128xf32>
    %49 = vector.broadcast %48 : vector<1x128xf32> to vector<256x128xf32>
    %50 = arith.addf %47, %49 : vector<256x128xf32>
    %c0_16 = arith.constant 0 : index
    %c0_17 = arith.constant 0 : index
    %51 = vector.load %arg5[%c0_16, %c0_17] : memref<256x128xf32, #tpu.memory_space<vmem>>, vector<256x128xf32>
    tpu.vector_store %arg5[%c0_16, %c0_17], %50 {strides = array<i32>} : memref<256x128xf32, #tpu.memory_space<vmem>>, vector<256x128xf32>,
    return
  }
  func.func @transform_0(%arg0: i32) -> (i32, i32, i32) {
    %c0_i32 = arith.constant 0 : i32
    %c0_i32_0 = arith.constant 0 : i32
    %c0_i32_1 = arith.constant 0 : i32
    return %arg0, %c0_i32, %c0_i32_0 : i32, i32, i32
  }
  func.func @transform_1(%arg0: i32) -> (i32, i32) {
    %c0_i32 = arith.constant 0 : i32
    %c0_i32_0 = arith.constant 0 : i32
    %c0_i32_1 = arith.constant 0 : i32
    return %c0_i32, %c0_i32_0 : i32, i32
  }
  func.func @transform_2(%arg0: i32) -> (i32, i32) {
    %c0_i32 = arith.constant 0 : i32
    %c0_i32_0 = arith.constant 0 : i32
    %c0_i32_1 = arith.constant 0 : i32
    return %c0_i32, %c0_i32_0 : i32, i32
  }
  func.func @transform_3(%arg0: i32) -> (i32, i32) {
    %c0_i32 = arith.constant 0 : i32
    %c0_i32_0 = arith.constant 0 : i32
    %c0_i32_1 = arith.constant 0 : i32
    return %c0_i32, %c0_i32_0 : i32, i32
  }
  func.func @transform_4(%arg0: i32) -> (i32, i32) {
    %c0_i32 = arith.constant 0 : i32
    %c0_i32_0 = arith.constant 0 : i32
    return %arg0, %c0_i32 : i32, i32
  }
}

</mosaic_0001>

<llo_original>
// kernel: _qformer_pallas.1
$region0: #{_qformer_pallas.1}
  #allocation0 [shape = 'u32[]', space=smem, size = 0x4, offset = 0x4, fixed_abs, tag = 'smem constant byte address 0x4 - core index']
  #allocation1 [shape = 'u32[144,128]{1,0:T(1,128)}', space=vmem, size = 0x12000, scoped, tag = 'internal scratch']
  %s0 = inlined_call_operand.vmem [shape: f32[16,8,640], index: 0, kind: input, shape index: {}]
  %s1 = inlined_call_operand.vmem [shape: bf16[640,640], index: 1, kind: input, shape index: {}]
  %s2 = inlined_call_operand.vmem [shape: bf16[128,64], index: 2, kind: input, shape index: {}]
  %s3 = inlined_call_operand.vmem [shape: f32[1,128], index: 3, kind: input, shape index: {}]
  %s4 = inlined_call_operand.hbm [shape: f32[256,128], index: 4, kind: output, shape index: {}]
  %s5 = sld [smem:[#allocation0]]
  $region26: #{_qformer_pallas.1} parent=0
    _
  %s7 = ssub.s32 1, %s5
  %s8 = scalar_select 0, %s7, %s5
  $region1: #{_qformer_pallas.1} parent=0
    #allocation2 [shape = 'u8[131072]{0}', space=vmem, size = 0x20000, scoped, tag = 'output window, operand 0, single buffered']
    #allocation3 [shape = 's32[1]{0}', space=sflag, size = 0x4, scoped, tag = 'scoped memory for _qformer_pallas.1']
    %9 = vsyncpa [#allocation3], 0
    // Predicated region
    $region2: #{_qformer_pallas.1} parent=1 // pred_check
      _
    $region3: #{_qformer_pallas.1} parent=1 // pred_check_branch
      %11 = sbr.rel (0) target = $region5
    $region4: #{_qformer_pallas.1} parent=1 // pred_region
      _
    $region5: #{_qformer_pallas.1} parent=1 // pred_fallthru
      _
    // Predicated region
    $region6: #{_qformer_pallas.1} parent=1 // pred_check
      _
    $region7: #{_qformer_pallas.1} parent=1 // pred_check_branch
      %13 = sbr.rel (0) target = $region9
    $region8: #{_qformer_pallas.1} parent=1 // pred_region
      _
    $region9: #{_qformer_pallas.1} parent=1 // pred_fallthru
      _
    // Predicated region
    $region10: #{_qformer_pallas.1} parent=1 // pred_check
      _
    $region11: #{_qformer_pallas.1} parent=1 // pred_check_branch
      %15 = sbr.rel (0) target = $region13
    $region12: #{_qformer_pallas.1} parent=1 // pred_region
      _
    $region13: #{_qformer_pallas.1} parent=1 // pred_fallthru
      _
    // Predicated region
    $region14: #{_qformer_pallas.1} parent=1 // pred_check
      _
    $region15: #{_qformer_pallas.1} parent=1 // pred_check_branch
      %17 = sbr.rel (0) target = $region17
    $region16: #{_qformer_pallas.1} parent=1 // pred_region
      _
    $region17: #{_qformer_pallas.1} parent=1 // pred_fallthru
      _
    %v19 = vld [vmem:[%s0] sm:$0xff]
    %v20 = vld [vmem:[%s0 + $0x8] sm:$0xff]
    %v21 = vld [vmem:[%s0 + $0x10] sm:$0xff]
    %v22 = vld [vmem:[%s0 + $0x18] sm:$0xff]
    %v23 = vld [vmem:[%s0 + $0x20] sm:$0xff]
    %v24 = vld [vmem:[%s0 + $0x28] sm:$0xff]
    %v25 = vld [vmem:[%s0 + $0x30] sm:$0xff]
    %v26 = vld [vmem:[%s0 + $0x38] sm:$0xff]
    %v27 = vld [vmem:[%s0 + $0x40] sm:$0xff]
    %v28 = vld [vmem:[%s0 + $0x48] sm:$0xff]
    %v29 = vld [vmem:[%s0 + $0x50] sm:$0xff]
    %v30 = vld [vmem:[%s0 + $0x58] sm:$0xff]
    %v31 = vld [vmem:[%s0 + $0x60] sm:$0xff]
    %v32 = vld [vmem:[%s0 + $0x68] sm:$0xff]
    %v33 = vld [vmem:[%s0 + $0x70] sm:$0xff]
    %v34 = vld [vmem:[%s0 + $0x78] sm:$0xff]
    %v35 = vld [vmem:[%s0 + $0x80] sm:$0xff]
    %v36 = vld [vmem:[%s0 + $0x88] sm:$0xff]
    %v37 = vld [vmem:[%s0 + $0x90] sm:$0xff]
    %v38 = vld [vmem:[%s0 + $0x98] sm:$0xff]
    %v39 = vld [vmem:[%s0 + $0xa0] sm:$0xff]
    %v40 = vld [vmem:[%s0 + $0xa8] sm:$0xff]
    %v41 = vld [vmem:[%s0 + $0xb0] sm:$0xff]
    %v42 = vld [vmem:[%s0 + $0xb8] sm:$0xff]
    %v43 = vld [vmem:[%s0 + $0xc0] sm:$0xff]
    %v44 = vld [vmem:[%s0 + $0xc8] sm:$0xff]
    %v45 = vld [vmem:[%s0 + $0xd0] sm:$0xff]
    %v46 = vld [vmem:[%s0 + $0xd8] sm:$0xff]
    %v47 = vld [vmem:[%s0 + $0xe0] sm:$0xff]
    %v48 = vld [vmem:[%s0 + $0xe8] sm:$0xff]
    %v49 = vld [vmem:[%s0 + $0xf0] sm:$0xff]
    %v50 = vld [vmem:[%s0 + $0xf8] sm:$0xff]
    %v51 = vld [vmem:[%s0 + $0x100] sm:$0xff]
    %v52 = vld [vmem:[%s0 + $0x108] sm:$0xff]
    %v53 = vld [vmem:[%s0 + $0x110] sm:$0xff]
    %v54 = vld [vmem:[%s0 + $0x118] sm:$0xff]
    %v55 = vld [vmem:[%s0 + $0x120] sm:$0xff]
    %v56 = vld [vmem:[%s0 + $0x128] sm:$0xff]
    %v57 = vld [vmem:[%s0 + $0x130] sm:$0xff]
    %v58 = vld [vmem:[%s0 + $0x138] sm:$0xff]
    %v59 = vld [vmem:[%s0 + $0x140] sm:$0xff]
    %v60 = vld [vmem:[%s0 + $0x148] sm:$0xff]
    %v61 = vld [vmem:[%s0 + $0x150] sm:$0xff]
    %v62 = vld [vmem:[%s0 + $0x158] sm:$0xff]
    %v63 = vld [vmem:[%s0 + $0x160] sm:$0xff]
    %v64 = vld [vmem:[%s0 + $0x168] sm:$0xff]
    %v65 = vld [vmem:[%s0 + $0x170] sm:$0xff]
    %v66 = vld [vmem:[%s0 + $0x178] sm:$0xff]
    %v67 = vld [vmem:[%s0 + $0x180] sm:$0xff]
    %v68 = vld [vmem:[%s0 + $0x188] sm:$0xff]
    %v69 = vld [vmem:[%s0 + $0x190] sm:$0xff]
    %v70 = vld [vmem:[%s0 + $0x198] sm:$0xff]
    %v71 = vld [vmem:[%s0 + $0x1a0] sm:$0xff]
    %v72 = vld [vmem:[%s0 + $0x1a8] sm:$0xff]
    %v73 = vld [vmem:[%s0 + $0x1b0] sm:$0xff]
    %v74 = vld [vmem:[%s0 + $0x1b8] sm:$0xff]
    %v75 = vld [vmem:[%s0 + $0x1c0] sm:$0xff]
    %v76 = vld [vmem:[%s0 + $0x1c8] sm:$0xff]
    %v77 = vld [vmem:[%s0 + $0x1d0] sm:$0xff]
    %v78 = vld [vmem:[%s0 + $0x1d8] sm:$0xff]
    %v79 = vld [vmem:[%s0 + $0x1e0] sm:$0xff]
    %v80 = vld [vmem:[%s0 + $0x1e8] sm:$0xff]
    %v81 = vld [vmem:[%s0 + $0x1f0] sm:$0xff]
    %v82 = vld [vmem:[%s0 + $0x1f8] sm:$0xff]
    %v83 = vld [vmem:[%s0 + $0x200] sm:$0xff]
    %v84 = vld [vmem:[%s0 + $0x208] sm:$0xff]
    %v85 = vld [vmem:[%s0 + $0x210] sm:$0xff]
    %v86 = vld [vmem:[%s0 + $0x218] sm:$0xff]
    %v87 = vld [vmem:[%s0 + $0x220] sm:$0xff]
    %v88 = vld [vmem:[%s0 + $0x228] sm:$0xff]
    %v89 = vld [vmem:[%s0 + $0x230] sm:$0xff]
    %v90 = vld [vmem:[%s0 + $0x238] sm:$0xff]
    %v91 = vld [vmem:[%s0 + $0x240] sm:$0xff]
    %v92 = vld [vmem:[%s0 + $0x248] sm:$0xff]
    %v93 = vld [vmem:[%s0 + $0x250] sm:$0xff]
    %v94 = vld [vmem:[%s0 + $0x258] sm:$0xff]
    %v95 = vld [vmem:[%s0 + $0x260] sm:$0xff]
    %v96 = vld [vmem:[%s0 + $0x268] sm:$0xff]
    %v97 = vld [vmem:[%s0 + $0x270] sm:$0xff]
    %v98 = vld [vmem:[%s0 + $0x278] sm:$0xff]
    %v99 = vpack.c.bf16 %v24, %v19
    %v100 = vpack.c.bf16 %v25, %v20
    %v101 = vpack.c.bf16 %v26, %v21
    %v102 = vpack.c.bf16 %v27, %v22
    %v103 = vpack.c.bf16 %v28, %v23
    %v104 = vpack.c.bf16 %v34, %v29
    %v105 = vpack.c.bf16 %v35, %v30
    %v106 = vpack.c.bf16 %v36, %v31
    %v107 = vpack.c.bf16 %v37, %v32
    %v108 = vpack.c.bf16 %v38, %v33
    %v109 = vpack.c.bf16 %v44, %v39
    %v110 = vpack.c.bf16 %v45, %v40
    %v111 = vpack.c.bf16 %v46, %v41
    %v112 = vpack.c.bf16 %v47, %v42
    %v113 = vpack.c.bf16 %v48, %v43
    %v114 = vpack.c.bf16 %v54, %v49
    %v115 = vpack.c.bf16 %v55, %v50
    %v116 = vpack.c.bf16 %v56, %v51
    %v117 = vpack.c.bf16 %v57, %v52
    %v118 = vpack.c.bf16 %v58, %v53
    %v119 = vpack.c.bf16 %v64, %v59
    %v120 = vpack.c.bf16 %v65, %v60
    %v121 = vpack.c.bf16 %v66, %v61
    %v122 = vpack.c.bf16 %v67, %v62
    %v123 = vpack.c.bf16 %v68, %v63
    %v124 = vpack.c.bf16 %v74, %v69
    %v125 = vpack.c.bf16 %v75, %v70
    %v126 = vpack.c.bf16 %v76, %v71
    %v127 = vpack.c.bf16 %v77, %v72
    %v128 = vpack.c.bf16 %v78, %v73
    %v129 = vpack.c.bf16 %v84, %v79
    %v130 = vpack.c.bf16 %v85, %v80
    %v131 = vpack.c.bf16 %v86, %v81
    %v132 = vpack.c.bf16 %v87, %v82
    %v133 = vpack.c.bf16 %v88, %v83
    %v134 = vpack.c.bf16 %v94, %v89
    %v135 = vpack.c.bf16 %v95, %v90
    %v136 = vpack.c.bf16 %v96, %v91
    %v137 = vpack.c.bf16 %v97, %v92
    %v138 = vpack.c.bf16 %v98, %v93
    %v139 = vld [vmem:[%s1] sm:$0xff]
    %v140 = vld [vmem:[%s1 + $0x8] sm:$0xff]
    %v141 = vld [vmem:[%s1 + $0x10] sm:$0xf]
    %v142 = vld [vmem:[%s1 + $0x14] sm:$0xff]
    %v143 = vld [vmem:[%s1 + $0x1c] sm:$0xff]
    %v144 = vld [vmem:[%s1 + $0x24] sm:$0xf]
    %v145 = vld [vmem:[%s1 + $0x28] sm:$0xff]
    %v146 = vld [vmem:[%s1 + $0x30] sm:$0xff]
    %v147 = vld [vmem:[%s1 + $0x38] sm:$0xf]
    %v148 = vld [vmem:[%s1 + $0x3c] sm:$0xff]
    %v149 = vld [vmem:[%s1 + $0x44] sm:$0xff]
    %v150 = vld [vmem:[%s1 + $0x4c] sm:$0xf]
    %v151 = vld [vmem:[%s1 + $0x50] sm:$0xff]
    %v152 = vld [vmem:[%s1 + $0x58] sm:$0xff]
    %v153 = vld [vmem:[%s1 + $0x60] sm:$0xf]
    %v154 = vld [vmem:[%s1 + $0x64] sm:$0xff]
    %v155 = vld [vmem:[%s1 + $0x6c] sm:$0xff]
    %v156 = vld [vmem:[%s1 + $0x74] sm:$0xf]
    %v157 = vld [vmem:[%s1 + $0x78] sm:$0xff]
    %v158 = vld [vmem:[%s1 + $0x80] sm:$0xff]
    %v159 = vld [vmem:[%s1 + $0x88] sm:$0xf]
    %v160 = vld [vmem:[%s1 + $0x8c] sm:$0xff]
    %v161 = vld [vmem:[%s1 + $0x94] sm:$0xff]
    %v162 = vld [vmem:[%s1 + $0x9c] sm:$0xf]
    %v163 = vld [vmem:[%s1 + $0xa0] sm:$0xff]
    %v164 = vld [vmem:[%s1 + $0xa8] sm:$0xff]
    %v165 = vld [vmem:[%s1 + $0xb0] sm:$0xf]
    %v166 = vld [vmem:[%s1 + $0xb4] sm:$0xff]
    %v167 = vld [vmem:[%s1 + $0xbc] sm:$0xff]
    %v168 = vld [vmem:[%s1 + $0xc4] sm:$0xf]
    %v169 = vld [vmem:[%s1 + $0xc8] sm:$0xff]
    %v170 = vld [vmem:[%s1 + $0xd0] sm:$0xff]
    %v171 = vld [vmem:[%s1 + $0xd8] sm:$0xf]
    %v172 = vld [vmem:[%s1 + $0xdc] sm:$0xff]
    %v173 = vld [vmem:[%s1 + $0xe4] sm:$0xff]
    %v174 = vld [vmem:[%s1 + $0xec] sm:$0xf]
    %v175 = vld [vmem:[%s1 + $0xf0] sm:$0xff]
    %v176 = vld [vmem:[%s1 + $0xf8] sm:$0xff]
    %v177 = vld [vmem:[%s1 + $0x100] sm:$0xf]
    %v178 = vld [vmem:[%s1 + $0x104] sm:$0xff]
    %v179 = vld [vmem:[%s1 + $0x10c] sm:$0xff]
    %v180 = vld [vmem:[%s1 + $0x114] sm:$0xf]
    %v181 = vld [vmem:[%s1 + $0x118] sm:$0xff]
    %v182 = vld [vmem:[%s1 + $0x120] sm:$0xff]
    %v183 = vld [vmem:[%s1 + $0x128] sm:$0xf]
    %v184 = vld [vmem:[%s1 + $0x12c] sm:$0xff]
    %v185 = vld [vmem:[%s1 + $0x134] sm:$0xff]
    %v186 = vld [vmem:[%s1 + $0x13c] sm:$0xf]
    %v187 = vld [vmem:[%s1 + $0x140] sm:$0xff]
    %v188 = vld [vmem:[%s1 + $0x148] sm:$0xff]
    %v189 = vld [vmem:[%s1 + $0x150] sm:$0xf]
    %v190 = vld [vmem:[%s1 + $0x154] sm:$0xff]
    %v191 = vld [vmem:[%s1 + $0x15c] sm:$0xff]
    %v192 = vld [vmem:[%s1 + $0x164] sm:$0xf]
    %v193 = vld [vmem:[%s1 + $0x168] sm:$0xff]
    %v194 = vld [vmem:[%s1 + $0x170] sm:$0xff]
    %v195 = vld [vmem:[%s1 + $0x178] sm:$0xf]
    %v196 = vld [vmem:[%s1 + $0x17c] sm:$0xff]
    %v197 = vld [vmem:[%s1 + $0x184] sm:$0xff]
    %v198 = vld [vmem:[%s1 + $0x18c] sm:$0xf]
    %v199 = vld [vmem:[%s1 + $0x190] sm:$0xff]
    %v200 = vld [vmem:[%s1 + $0x198] sm:$0xff]
    %v201 = vld [vmem:[%s1 + $0x1a0] sm:$0xf]
    %v202 = vld [vmem:[%s1 + $0x1a4] sm:$0xff]
    %v203 = vld [vmem:[%s1 + $0x1ac] sm:$0xff]
    %v204 = vld [vmem:[%s1 + $0x1b4] sm:$0xf]
    %v205 = vld [vmem:[%s1 + $0x1b8] sm:$0xff]
    %v206 = vld [vmem:[%s1 + $0x1c0] sm:$0xff]
    %v207 = vld [vmem:[%s1 + $0x1c8] sm:$0xf]
    %v208 = vld [vmem:[%s1 + $0x1cc] sm:$0xff]
    %v209 = vld [vmem:[%s1 + $0x1d4] sm:$0xff]
    %v210 = vld [vmem:[%s1 + $0x1dc] sm:$0xf]
    %v211 = vld [vmem:[%s1 + $0x1e0] sm:$0xff]
    %v212 = vld [vmem:[%s1 + $0x1e8] sm:$0xff]
    %v213 = vld [vmem:[%s1 + $0x1f0] sm:$0xf]
    %v214 = vld [vmem:[%s1 + $0x1f4] sm:$0xff]
    %v215 = vld [vmem:[%s1 + $0x1fc] sm:$0xff]
    %v216 = vld [vmem:[%s1 + $0x204] sm:$0xf]
    %v217 = vld [vmem:[%s1 + $0x208] sm:$0xff]
    %v218 = vld [vmem:[%s1 + $0x210] sm:$0xff]
    %v219 = vld [vmem:[%s1 + $0x218] sm:$0xf]
    %v220 = vld [vmem:[%s1 + $0x21c] sm:$0xff]
    %v221 = vld [vmem:[%s1 + $0x224] sm:$0xff]
    %v222 = vld [vmem:[%s1 + $0x22c] sm:$0xf]
    %v223 = vld [vmem:[%s1 + $0x230] sm:$0xff]
    %v224 = vld [vmem:[%s1 + $0x238] sm:$0xff]
    %v225 = vld [vmem:[%s1 + $0x240] sm:$0xf]
    %v226 = vld [vmem:[%s1 + $0x244] sm:$0xff]
    %v227 = vld [vmem:[%s1 + $0x24c] sm:$0xff]
    %v228 = vld [vmem:[%s1 + $0x254] sm:$0xf]
    %v229 = vld [vmem:[%s1 + $0x258] sm:$0xff]
    %v230 = vld [vmem:[%s1 + $0x260] sm:$0xff]
    %v231 = vld [vmem:[%s1 + $0x268] sm:$0xf]
    %v232 = vld [vmem:[%s1 + $0x26c] sm:$0xff]
    %v233 = vld [vmem:[%s1 + $0x274] sm:$0xff]
    %v234 = vld [vmem:[%s1 + $0x27c] sm:$0xf]
    %v235 = vld [vmem:[%s1 + $0x280] sm:$0xff]
    %v236 = vld [vmem:[%s1 + $0x288] sm:$0xff]
    %v237 = vld [vmem:[%s1 + $0x290] sm:$0xf]
    %v238 = vld [vmem:[%s1 + $0x294] sm:$0xff]
    %v239 = vld [vmem:[%s1 + $0x29c] sm:$0xff]
    %v240 = vld [vmem:[%s1 + $0x2a4] sm:$0xf]
    %v241 = vld [vmem:[%s1 + $0x2a8] sm:$0xff]
    %v242 = vld [vmem:[%s1 + $0x2b0] sm:$0xff]
    %v243 = vld [vmem:[%s1 + $0x2b8] sm:$0xf]
    %v244 = vld [vmem:[%s1 + $0x2bc] sm:$0xff]
    %v245 = vld [vmem:[%s1 + $0x2c4] sm:$0xff]
    %v246 = vld [vmem:[%s1 + $0x2cc] sm:$0xf]
    %v247 = vld [vmem:[%s1 + $0x2d0] sm:$0xff]
    %v248 = vld [vmem:[%s1 + $0x2d8] sm:$0xff]
    %v249 = vld [vmem:[%s1 + $0x2e0] sm:$0xf]
    %v250 = vld [vmem:[%s1 + $0x2e4] sm:$0xff]
    %v251 = vld [vmem:[%s1 + $0x2ec] sm:$0xff]
    %v252 = vld [vmem:[%s1 + $0x2f4] sm:$0xf]
    %v253 = vld [vmem:[%s1 + $0x2f8] sm:$0xff]
    %v254 = vld [vmem:[%s1 + $0x300] sm:$0xff]
    %v255 = vld [vmem:[%s1 + $0x308] sm:$0xf]
    %v256 = vld [vmem:[%s1 + $0x30c] sm:$0xff]
    %v257 = vld [vmem:[%s1 + $0x314] sm:$0xff]
    %v258 = vld [vmem:[%s1 + $0x31c] sm:$0xf]
    %v259 = vld [vmem:[%s1 + $0x320] sm:$0xff]
    %v260 = vld [vmem:[%s1 + $0x328] sm:$0xff]
    %v261 = vld [vmem:[%s1 + $0x330] sm:$0xf]
    %v262 = vld [vmem:[%s1 + $0x334] sm:$0xff]
    %v263 = vld [vmem:[%s1 + $0x33c] sm:$0xff]
    %v264 = vld [vmem:[%s1 + $0x344] sm:$0xf]
    %v265 = vld [vmem:[%s1 + $0x348] sm:$0xff]
    %v266 = vld [vmem:[%s1 + $0x350] sm:$0xff]
    %v267 = vld [vmem:[%s1 + $0x358] sm:$0xf]
    %v268 = vld [vmem:[%s1 + $0x35c] sm:$0xff]
    %v269 = vld [vmem:[%s1 + $0x364] sm:$0xff]
    %v270 = vld [vmem:[%s1 + $0x36c] sm:$0xf]
    %v271 = vld [vmem:[%s1 + $0x370] sm:$0xff]
    %v272 = vld [vmem:[%s1 + $0x378] sm:$0xff]
    %v273 = vld [vmem:[%s1 + $0x380] sm:$0xf]
    %v274 = vld [vmem:[%s1 + $0x384] sm:$0xff]
    %v275 = vld [vmem:[%s1 + $0x38c] sm:$0xff]
    %v276 = vld [vmem:[%s1 + $0x394] sm:$0xf]
    %v277 = vld [vmem:[%s1 + $0x398] sm:$0xff]
    %v278 = vld [vmem:[%s1 + $0x3a0] sm:$0xff]
    %v279 = vld [vmem:[%s1 + $0x3a8] sm:$0xf]
    %v280 = vld [vmem:[%s1 + $0x3ac] sm:$0xff]
    %v281 = vld [vmem:[%s1 + $0x3b4] sm:$0xff]
    %v282 = vld [vmem:[%s1 + $0x3bc] sm:$0xf]
    %v283 = vld [vmem:[%s1 + $0x3c0] sm:$0xff]
    %v284 = vld [vmem:[%s1 + $0x3c8] sm:$0xff]
    %v285 = vld [vmem:[%s1 + $0x3d0] sm:$0xf]
    %v286 = vld [vmem:[%s1 + $0x3d4] sm:$0xff]
    %v287 = vld [vmem:[%s1 + $0x3dc] sm:$0xff]
    %v288 = vld [vmem:[%s1 + $0x3e4] sm:$0xf]
    %v289 = vld [vmem:[%s1 + $0x3e8] sm:$0xff]
    %v290 = vld [vmem:[%s1 + $0x3f0] sm:$0xff]
    %v291 = vld [vmem:[%s1 + $0x3f8] sm:$0xf]
    %v292 = vld [vmem:[%s1 + $0x3fc] sm:$0xff]
    %v293 = vld [vmem:[%s1 + $0x404] sm:$0xff]
    %v294 = vld [vmem:[%s1 + $0x40c] sm:$0xf]
    %v295 = vld [vmem:[%s1 + $0x410] sm:$0xff]
    %v296 = vld [vmem:[%s1 + $0x418] sm:$0xff]
    %v297 = vld [vmem:[%s1 + $0x420] sm:$0xf]
    %v298 = vld [vmem:[%s1 + $0x424] sm:$0xff]
    %v299 = vld [vmem:[%s1 + $0x42c] sm:$0xff]
    %v300 = vld [vmem:[%s1 + $0x434] sm:$0xf]
    %v301 = vld [vmem:[%s1 + $0x438] sm:$0xff]
    %v302 = vld [vmem:[%s1 + $0x440] sm:$0xff]
    %v303 = vld [vmem:[%s1 + $0x448] sm:$0xf]
    %v304 = vld [vmem:[%s1 + $0x44c] sm:$0xff]
    %v305 = vld [vmem:[%s1 + $0x454] sm:$0xff]
    %v306 = vld [vmem:[%s1 + $0x45c] sm:$0xf]
    %v307 = vld [vmem:[%s1 + $0x460] sm:$0xff]
    %v308 = vld [vmem:[%s1 + $0x468] sm:$0xff]
    %v309 = vld [vmem:[%s1 + $0x470] sm:$0xf]
    %v310 = vld [vmem:[%s1 + $0x474] sm:$0xff]
    %v311 = vld [vmem:[%s1 + $0x47c] sm:$0xff]
    %v312 = vld [vmem:[%s1 + $0x484] sm:$0xf]
    %v313 = vld [vmem:[%s1 + $0x488] sm:$0xff]
    %v314 = vld [vmem:[%s1 + $0x490] sm:$0xff]
    %v315 = vld [vmem:[%s1 + $0x498] sm:$0xf]
    %v316 = vld [vmem:[%s1 + $0x49c] sm:$0xff]
    %v317 = vld [vmem:[%s1 + $0x4a4] sm:$0xff]
    %v318 = vld [vmem:[%s1 + $0x4ac] sm:$0xf]
    %v319 = vld [vmem:[%s1 + $0x4b0] sm:$0xff]
    %v320 = vld [vmem:[%s1 + $0x4b8] sm:$0xff]
    %v321 = vld [vmem:[%s1 + $0x4c0] sm:$0xf]
    %v322 = vld [vmem:[%s1 + $0x4c4] sm:$0xff]
    %v323 = vld [vmem:[%s1 + $0x4cc] sm:$0xff]
    %v324 = vld [vmem:[%s1 + $0x4d4] sm:$0xf]
    %v325 = vld [vmem:[%s1 + $0x4d8] sm:$0xff]
    %v326 = vld [vmem:[%s1 + $0x4e0] sm:$0xff]
    %v327 = vld [vmem:[%s1 + $0x4e8] sm:$0xf]
    %v328 = vld [vmem:[%s1 + $0x4ec] sm:$0xff]
    %v329 = vld [vmem:[%s1 + $0x4f4] sm:$0xff]
    %v330 = vld [vmem:[%s1 + $0x4fc] sm:$0xf]
    %v331 = vld [vmem:[%s1 + $0x500] sm:$0xff]
    %v332 = vld [vmem:[%s1 + $0x508] sm:$0xff]
    %v333 = vld [vmem:[%s1 + $0x510] sm:$0xf]
    %v334 = vld [vmem:[%s1 + $0x514] sm:$0xff]
    %v335 = vld [vmem:[%s1 + $0x51c] sm:$0xff]
    %v336 = vld [vmem:[%s1 + $0x524] sm:$0xf]
    %v337 = vld [vmem:[%s1 + $0x528] sm:$0xff]
    %v338 = vld [vmem:[%s1 + $0x530] sm:$0xff]
    %v339 = vld [vmem:[%s1 + $0x538] sm:$0xf]
    %v340 = vld [vmem:[%s1 + $0x53c] sm:$0xff]
    %v341 = vld [vmem:[%s1 + $0x544] sm:$0xff]
    %v342 = vld [vmem:[%s1 + $0x54c] sm:$0xf]
    %v343 = vld [vmem:[%s1 + $0x550] sm:$0xff]
    %v344 = vld [vmem:[%s1 + $0x558] sm:$0xff]
    %v345 = vld [vmem:[%s1 + $0x560] sm:$0xf]
    %v346 = vld [vmem:[%s1 + $0x564] sm:$0xff]
    %v347 = vld [vmem:[%s1 + $0x56c] sm:$0xff]
    %v348 = vld [vmem:[%s1 + $0x574] sm:$0xf]
    %v349 = vld [vmem:[%s1 + $0x578] sm:$0xff]
    %v350 = vld [vmem:[%s1 + $0x580] sm:$0xff]
    %v351 = vld [vmem:[%s1 + $0x588] sm:$0xf]
    %v352 = vld [vmem:[%s1 + $0x58c] sm:$0xff]
    %v353 = vld [vmem:[%s1 + $0x594] sm:$0xff]
    %v354 = vld [vmem:[%s1 + $0x59c] sm:$0xf]
    %v355 = vld [vmem:[%s1 + $0x5a0] sm:$0xff]
    %v356 = vld [vmem:[%s1 + $0x5a8] sm:$0xff]
    %v357 = vld [vmem:[%s1 + $0x5b0] sm:$0xf]
    %v358 = vld [vmem:[%s1 + $0x5b4] sm:$0xff]
    %v359 = vld [vmem:[%s1 + $0x5bc] sm:$0xff]
    %v360 = vld [vmem:[%s1 + $0x5c4] sm:$0xf]
    %v361 = vld [vmem:[%s1 + $0x5c8] sm:$0xff]
    %v362 = vld [vmem:[%s1 + $0x5d0] sm:$0xff]
    %v363 = vld [vmem:[%s1 + $0x5d8] sm:$0xf]
    %v364 = vld [vmem:[%s1 + $0x5dc] sm:$0xff]
    %v365 = vld [vmem:[%s1 + $0x5e4] sm:$0xff]
    %v366 = vld [vmem:[%s1 + $0x5ec] sm:$0xf]
    %v367 = vld [vmem:[%s1 + $0x5f0] sm:$0xff]
    %v368 = vld [vmem:[%s1 + $0x5f8] sm:$0xff]
    %v369 = vld [vmem:[%s1 + $0x600] sm:$0xf]
    %v370 = vld [vmem:[%s1 + $0x604] sm:$0xff]
    %v371 = vld [vmem:[%s1 + $0x60c] sm:$0xff]
    %v372 = vld [vmem:[%s1 + $0x614] sm:$0xf]
    %v373 = vld [vmem:[%s1 + $0x618] sm:$0xff]
    %v374 = vld [vmem:[%s1 + $0x620] sm:$0xff]
    %v375 = vld [vmem:[%s1 + $0x628] sm:$0xf]
    %v376 = vld [vmem:[%s1 + $0x62c] sm:$0xff]
    %v377 = vld [vmem:[%s1 + $0x634] sm:$0xff]
    %v378 = vld [vmem:[%s1 + $0x63c] sm:$0xf]
    %v619 = vunpack.c.l.b16 %v139
    %v620 = vunpack.c.h.b16 %v139
    %v621 = vunpack.c.l.b16 %v140
    %v622 = vunpack.c.h.b16 %v140
    %v623 = vunpack.c.l.b16 %v141
    %v624 = vunpack.c.l.b16 %v142
    %v625 = vunpack.c.h.b16 %v142
    %v626 = vunpack.c.l.b16 %v143
    %v627 = vunpack.c.h.b16 %v143
    %v628 = vunpack.c.l.b16 %v144
    %v629 = vunpack.c.l.b16 %v145
    %v630 = vunpack.c.h.b16 %v145
    %v631 = vunpack.c.l.b16 %v146
    %v632 = vunpack.c.h.b16 %v146
    %v633 = vunpack.c.l.b16 %v147
    %v634 = vunpack.c.l.b16 %v148
    %v635 = vunpack.c.h.b16 %v148
    %v636 = vunpack.c.l.b16 %v149
    %v637 = vunpack.c.h.b16 %v149
    %v638 = vunpack.c.l.b16 %v150
    %v639 = vunpack.c.l.b16 %v151
    %v640 = vunpack.c.h.b16 %v151
    %v641 = vunpack.c.l.b16 %v152
    %v642 = vunpack.c.h.b16 %v152
    %v643 = vunpack.c.l.b16 %v153
    %v644 = vunpack.c.l.b16 %v154
    %v645 = vunpack.c.h.b16 %v154
    %v646 = vunpack.c.l.b16 %v155
    %v647 = vunpack.c.h.b16 %v155
    %v648 = vunpack.c.l.b16 %v156
    %v649 = vunpack.c.l.b16 %v157
    %v650 = vunpack.c.h.b16 %v157
    %v651 = vunpack.c.l.b16 %v158
    %v652 = vunpack.c.h.b16 %v158
    %v653 = vunpack.c.l.b16 %v159
    %v654 = vunpack.c.l.b16 %v160
    %v655 = vunpack.c.h.b16 %v160
    %v656 = vunpack.c.l.b16 %v161
    %v657 = vunpack.c.h.b16 %v161
    %v658 = vunpack.c.l.b16 %v162
    %v659 = vunpack.c.l.b16 %v163
    %v660 = vunpack.c.h.b16 %v163
    %v661 = vunpack.c.l.b16 %v164
    %v662 = vunpack.c.h.b16 %v164
    %v663 = vunpack.c.l.b16 %v165
    %v664 = vunpack.c.l.b16 %v166
    %v665 = vunpack.c.h.b16 %v166
    %v666 = vunpack.c.l.b16 %v167
    %v667 = vunpack.c.h.b16 %v167
    %v668 = vunpack.c.l.b16 %v168
    %v669 = vunpack.c.l.b16 %v169
    %v670 = vunpack.c.h.b16 %v169
    %v671 = vunpack.c.l.b16 %v170
    %v672 = vunpack.c.h.b16 %v170
    %v673 = vunpack.c.l.b16 %v171
    %v674 = vunpack.c.l.b16 %v172
    %v675 = vunpack.c.h.b16 %v172
    %v676 = vunpack.c.l.b16 %v173
    %v677 = vunpack.c.h.b16 %v173
    %v678 = vunpack.c.l.b16 %v174
    %v679 = vunpack.c.l.b16 %v175
    %v680 = vunpack.c.h.b16 %v175
    %v681 = vunpack.c.l.b16 %v176
    %v682 = vunpack.c.h.b16 %v176
    %v683 = vunpack.c.l.b16 %v177
    %v684 = vunpack.c.l.b16 %v178
    %v685 = vunpack.c.h.b16 %v178
    %v686 = vunpack.c.l.b16 %v179
    %v687 = vunpack.c.h.b16 %v179
    %v688 = vunpack.c.l.b16 %v180
    %v689 = vunpack.c.l.b16 %v181
    %v690 = vunpack.c.h.b16 %v181
    %v691 = vunpack.c.l.b16 %v182
    %v692 = vunpack.c.h.b16 %v182
    %v693 = vunpack.c.l.b16 %v183
    %v694 = vunpack.c.l.b16 %v184
    %v695 = vunpack.c.h.b16 %v184
    %v696 = vunpack.c.l.b16 %v185
    %v697 = vunpack.c.h.b16 %v185
    %v698 = vunpack.c.l.b16 %v186
    %v699 = vunpack.c.l.b16 %v187
    %v700 = vunpack.c.h.b16 %v187
    %v701 = vunpack.c.l.b16 %v188
    %v702 = vunpack.c.h.b16 %v188
    %v703 = vunpack.c.l.b16 %v189
    %v704 = vunpack.c.l.b16 %v190
    %v705 = vunpack.c.h.b16 %v190
    %v706 = vunpack.c.l.b16 %v191
    %v707 = vunpack.c.h.b16 %v191
    %v708 = vunpack.c.l.b16 %v192
    %v709 = vunpack.c.l.b16 %v193
    %v710 = vunpack.c.h.b16 %v193
    %v711 = vunpack.c.l.b16 %v194
    %v712 = vunpack.c.h.b16 %v194
    %v713 = vunpack.c.l.b16 %v195
    %v714 = vunpack.c.l.b16 %v196
    %v715 = vunpack.c.h.b16 %v196
    %v716 = vunpack.c.l.b16 %v197
    %v717 = vunpack.c.h.b16 %v197
    %v718 = vunpack.c.l.b16 %v198
    %v719 = vunpack.c.l.b16 %v199
    %v720 = vunpack.c.h.b16 %v199
    %v721 = vunpack.c.l.b16 %v200
    %v722 = vunpack.c.h.b16 %v200
    %v723 = vunpack.c.l.b16 %v201
    %v724 = vunpack.c.l.b16 %v202
    %v725 = vunpack.c.h.b16 %v202
    %v726 = vunpack.c.l.b16 %v203
    %v727 = vunpack.c.h.b16 %v203
    %v728 = vunpack.c.l.b16 %v204
    %v729 = vunpack.c.l.b16 %v205
    %v730 = vunpack.c.h.b16 %v205
    %v731 = vunpack.c.l.b16 %v206
    %v732 = vunpack.c.h.b16 %v206
    %v733 = vunpack.c.l.b16 %v207
    %v734 = vunpack.c.l.b16 %v208
    %v735 = vunpack.c.h.b16 %v208
    %v736 = vunpack.c.l.b16 %v209
    %v737 = vunpack.c.h.b16 %v209
    %v738 = vunpack.c.l.b16 %v210
    %v739 = vunpack.c.l.b16 %v211
    %v740 = vunpack.c.h.b16 %v211
    %v741 = vunpack.c.l.b16 %v212
    %v742 = vunpack.c.h.b16 %v212
    %v743 = vunpack.c.l.b16 %v213
    %v744 = vunpack.c.l.b16 %v214
    %v745 = vunpack.c.h.b16 %v214
    %v746 = vunpack.c.l.b16 %v215
    %v747 = vunpack.c.h.b16 %v215
    %v748 = vunpack.c.l.b16 %v216
    %v749 = vunpack.c.l.b16 %v217
    %v750 = vunpack.c.h.b16 %v217
    %v751 = vunpack.c.l.b16 %v218
    %v752 = vunpack.c.h.b16 %v218
    %v753 = vunpack.c.l.b16 %v219
    %v754 = vunpack.c.l.b16 %v220
    %v755 = vunpack.c.h.b16 %v220
    %v756 = vunpack.c.l.b16 %v221
    %v757 = vunpack.c.h.b16 %v221
    %v758 = vunpack.c.l.b16 %v222
    %v759 = vunpack.c.l.b16 %v223
    %v760 = vunpack.c.h.b16 %v223
    %v761 = vunpack.c.l.b16 %v224
    %v762 = vunpack.c.h.b16 %v224
    %v763 = vunpack.c.l.b16 %v225
    %v764 = vunpack.c.l.b16 %v226
    %v765 = vunpack.c.h.b16 %v226
    %v766 = vunpack.c.l.b16 %v227
    %v767 = vunpack.c.h.b16 %v227
    %v768 = vunpack.c.l.b16 %v228
    %v769 = vunpack.c.l.b16 %v229
    %v770 = vunpack.c.h.b16 %v229
    %v771 = vunpack.c.l.b16 %v230
    %v772 = vunpack.c.h.b16 %v230
    %v773 = vunpack.c.l.b16 %v231
    %v774 = vunpack.c.l.b16 %v232
    %v775 = vunpack.c.h.b16 %v232
    %v776 = vunpack.c.l.b16 %v233
    %v777 = vunpack.c.h.b16 %v233
    %v778 = vunpack.c.l.b16 %v234
    %v779 = vunpack.c.l.b16 %v235
    %v780 = vunpack.c.h.b16 %v235
    %v781 = vunpack.c.l.b16 %v236
    %v782 = vunpack.c.h.b16 %v236
    %v783 = vunpack.c.l.b16 %v237
    %v784 = vunpack.c.l.b16 %v238
    %v785 = vunpack.c.h.b16 %v238
    %v786 = vunpack.c.l.b16 %v239
    %v787 = vunpack.c.h.b16 %v239
    %v788 = vunpack.c.l.b16 %v240
    %v789 = vunpack.c.l.b16 %v241
    %v790 = vunpack.c.h.b16 %v241
    %v791 = vunpack.c.l.b16 %v242
    %v792 = vunpack.c.h.b16 %v242
    %v793 = vunpack.c.l.b16 %v243
    %v794 = vunpack.c.l.b16 %v244
    %v795 = vunpack.c.h.b16 %v244
    %v796 = vunpack.c.l.b16 %v245
    %v797 = vunpack.c.h.b16 %v245
    %v798 = vunpack.c.l.b16 %v246
    %v799 = vunpack.c.l.b16 %v247
    %v800 = vunpack.c.h.b16 %v247
    %v801 = vunpack.c.l.b16 %v248
    %v802 = vunpack.c.h.b16 %v248
    %v803 = vunpack.c.l.b16 %v249
    %v804 = vunpack.c.l.b16 %v250
    %v805 = vunpack.c.h.b16 %v250
    %v806 = vunpack.c.l.b16 %v251
    %v807 = vunpack.c.h.b16 %v251
    %v808 = vunpack.c.l.b16 %v252
    %v809 = vunpack.c.l.b16 %v253
    %v810 = vunpack.c.h.b16 %v253
    %v811 = vunpack.c.l.b16 %v254
    %v812 = vunpack.c.h.b16 %v254
    %v813 = vunpack.c.l.b16 %v255
    %v814 = vunpack.c.l.b16 %v256
    %v815 = vunpack.c.h.b16 %v256
    %v816 = vunpack.c.l.b16 %v257
    %v817 = vunpack.c.h.b16 %v257
    %v818 = vunpack.c.l.b16 %v258
    %v819 = vunpack.c.l.b16 %v259
    %v820 = vunpack.c.h.b16 %v259
    %v821 = vunpack.c.l.b16 %v260
    %v822 = vunpack.c.h.b16 %v260
    %v823 = vunpack.c.l.b16 %v261
    %v824 = vunpack.c.l.b16 %v262
    %v825 = vunpack.c.h.b16 %v262
    %v826 = vunpack.c.l.b16 %v263
    %v827 = vunpack.c.h.b16 %v263
    %v828 = vunpack.c.l.b16 %v264
    %v829 = vunpack.c.l.b16 %v265
    %v830 = vunpack.c.h.b16 %v265
    %v831 = vunpack.c.l.b16 %v266
    %v832 = vunpack.c.h.b16 %v266
    %v833 = vunpack.c.l.b16 %v267
    %v834 = vunpack.c.l.b16 %v268
    %v835 = vunpack.c.h.b16 %v268
    %v836 = vunpack.c.l.b16 %v269
    %v837 = vunpack.c.h.b16 %v269
    %v838 = vunpack.c.l.b16 %v270
    %v839 = vunpack.c.l.b16 %v271
    %v840 = vunpack.c.h.b16 %v271
    %v841 = vunpack.c.l.b16 %v272
    %v842 = vunpack.c.h.b16 %v272
    %v843 = vunpack.c.l.b16 %v273
    %v844 = vunpack.c.l.b16 %v274
    %v845 = vunpack.c.h.b16 %v274
    %v846 = vunpack.c.l.b16 %v275
    %v847 = vunpack.c.h.b16 %v275
    %v848 = vunpack.c.l.b16 %v276
    %v849 = vunpack.c.l.b16 %v277
    %v850 = vunpack.c.h.b16 %v277
    %v851 = vunpack.c.l.b16 %v278
    %v852 = vunpack.c.h.b16 %v278
    %v853 = vunpack.c.l.b16 %v279
    %v854 = vunpack.c.l.b16 %v280
    %v855 = vunpack.c.h.b16 %v280
    %v856 = vunpack.c.l.b16 %v281
    %v857 = vunpack.c.h.b16 %v281
    %v858 = vunpack.c.l.b16 %v282
    %v859 = vunpack.c.l.b16 %v283
    %v860 = vunpack.c.h.b16 %v283
    %v861 = vunpack.c.l.b16 %v284
    %v862 = vunpack.c.h.b16 %v284
    %v863 = vunpack.c.l.b16 %v285
    %v864 = vunpack.c.l.b16 %v286
    %v865 = vunpack.c.h.b16 %v286
    %v866 = vunpack.c.l.b16 %v287
    %v867 = vunpack.c.h.b16 %v287
    %v868 = vunpack.c.l.b16 %v288
    %v869 = vunpack.c.l.b16 %v289
    %v870 = vunpack.c.h.b16 %v289
    %v871 = vunpack.c.l.b16 %v290
    %v872 = vunpack.c.h.b16 %v290
    %v873 = vunpack.c.l.b16 %v291
    %v874 = vunpack.c.l.b16 %v292
    %v875 = vunpack.c.h.b16 %v292
    %v876 = vunpack.c.l.b16 %v293
    %v877 = vunpack.c.h.b16 %v293
    %v878 = vunpack.c.l.b16 %v294
    %v879 = vunpack.c.l.b16 %v295
    %v880 = vunpack.c.h.b16 %v295
    %v881 = vunpack.c.l.b16 %v296
    %v882 = vunpack.c.h.b16 %v296
    %v883 = vunpack.c.l.b16 %v297
    %v884 = vunpack.c.l.b16 %v298
    %v885 = vunpack.c.h.b16 %v298
    %v886 = vunpack.c.l.b16 %v299
    %v887 = vunpack.c.h.b16 %v299
    %v888 = vunpack.c.l.b16 %v300
    %v889 = vunpack.c.l.b16 %v301
    %v890 = vunpack.c.h.b16 %v301
    %v891 = vunpack.c.l.b16 %v302
    %v892 = vunpack.c.h.b16 %v302
    %v893 = vunpack.c.l.b16 %v303
    %v894 = vunpack.c.l.b16 %v304
    %v895 = vunpack.c.h.b16 %v304
    %v896 = vunpack.c.l.b16 %v305
    %v897 = vunpack.c.h.b16 %v305
    %v898 = vunpack.c.l.b16 %v306
    %v899 = vunpack.c.l.b16 %v307
    %v900 = vunpack.c.h.b16 %v307
    %v901 = vunpack.c.l.b16 %v308
    %v902 = vunpack.c.h.b16 %v308
    %v903 = vunpack.c.l.b16 %v309
    %v904 = vunpack.c.l.b16 %v310
    %v905 = vunpack.c.h.b16 %v310
    %v906 = vunpack.c.l.b16 %v311
    %v907 = vunpack.c.h.b16 %v311
    %v908 = vunpack.c.l.b16 %v312
    %v909 = vunpack.c.l.b16 %v313
    %v910 = vunpack.c.h.b16 %v313
    %v911 = vunpack.c.l.b16 %v314
    %v912 = vunpack.c.h.b16 %v314
    %v913 = vunpack.c.l.b16 %v315
    %v914 = vunpack.c.l.b16 %v316
    %v915 = vunpack.c.h.b16 %v316
    %v916 = vunpack.c.l.b16 %v317
    %v917 = vunpack.c.h.b16 %v317
    %v918 = vunpack.c.l.b16 %v318
    %v919 = vunpack.c.l.b16 %v319
    %v920 = vunpack.c.h.b16 %v319
    %v921 = vunpack.c.l.b16 %v320
    %v922 = vunpack.c.h.b16 %v320
    %v923 = vunpack.c.l.b16 %v321
    %v924 = vunpack.c.l.b16 %v322
    %v925 = vunpack.c.h.b16 %v322
    %v926 = vunpack.c.l.b16 %v323
    %v927 = vunpack.c.h.b16 %v323
    %v928 = vunpack.c.l.b16 %v324
    %v929 = vunpack.c.l.b16 %v325
    %v930 = vunpack.c.h.b16 %v325
    %v931 = vunpack.c.l.b16 %v326
    %v932 = vunpack.c.h.b16 %v326
    %v933 = vunpack.c.l.b16 %v327
    %v934 = vunpack.c.l.b16 %v328
    %v935 = vunpack.c.h.b16 %v328
    %v936 = vunpack.c.l.b16 %v329
    %v937 = vunpack.c.h.b16 %v329
    %v938 = vunpack.c.l.b16 %v330
    %v939 = vunpack.c.l.b16 %v331
    %v940 = vunpack.c.h.b16 %v331
    %v941 = vunpack.c.l.b16 %v332
    %v942 = vunpack.c.h.b16 %v332
    %v943 = vunpack.c.l.b16 %v333
    %v944 = vunpack.c.l.b16 %v334
    %v945 = vunpack.c.h.b16 %v334
    %v946 = vunpack.c.l.b16 %v335
    %v947 = vunpack.c.h.b16 %v335
    %v948 = vunpack.c.l.b16 %v336
    %v949 = vunpack.c.l.b16 %v337
    %v950 = vunpack.c.h.b16 %v337
    %v951 = vunpack.c.l.b16 %v338
    %v952 = vunpack.c.h.b16 %v338
    %v953 = vunpack.c.l.b16 %v339
    %v954 = vunpack.c.l.b16 %v340
    %v955 = vunpack.c.h.b16 %v340
    %v956 = vunpack.c.l.b16 %v341
    %v957 = vunpack.c.h.b16 %v341
    %v958 = vunpack.c.l.b16 %v342
    %v959 = vunpack.c.l.b16 %v343
    %v960 = vunpack.c.h.b16 %v343
    %v961 = vunpack.c.l.b16 %v344
    %v962 = vunpack.c.h.b16 %v344
    %v963 = vunpack.c.l.b16 %v345
    %v964 = vunpack.c.l.b16 %v346
    %v965 = vunpack.c.h.b16 %v346
    %v966 = vunpack.c.l.b16 %v347
    %v967 = vunpack.c.h.b16 %v347
    %v968 = vunpack.c.l.b16 %v348
    %v969 = vunpack.c.l.b16 %v349
    %v970 = vunpack.c.h.b16 %v349
    %v971 = vunpack.c.l.b16 %v350
    %v972 = vunpack.c.h.b16 %v350
    %v973 = vunpack.c.l.b16 %v351
    %v974 = vunpack.c.l.b16 %v352
    %v975 = vunpack.c.h.b16 %v352
    %v976 = vunpack.c.l.b16 %v353
    %v977 = vunpack.c.h.b16 %v353
    %v978 = vunpack.c.l.b16 %v354
    %v979 = vunpack.c.l.b16 %v355
    %v980 = vunpack.c.h.b16 %v355
    %v981 = vunpack.c.l.b16 %v356
    %v982 = vunpack.c.h.b16 %v356
    %v983 = vunpack.c.l.b16 %v357
    %v984 = vunpack.c.l.b16 %v358
    %v985 = vunpack.c.h.b16 %v358
    %v986 = vunpack.c.l.b16 %v359
    %v987 = vunpack.c.h.b16 %v359
    %v988 = vunpack.c.l.b16 %v360
    %v989 = vunpack.c.l.b16 %v361
    %v990 = vunpack.c.h.b16 %v361
    %v991 = vunpack.c.l.b16 %v362
    %v992 = vunpack.c.h.b16 %v362
    %v993 = vunpack.c.l.b16 %v363
    %v994 = vunpack.c.l.b16 %v364
    %v995 = vunpack.c.h.b16 %v364
    %v996 = vunpack.c.l.b16 %v365
    %v997 = vunpack.c.h.b16 %v365
    %v998 = vunpack.c.l.b16 %v366
    %v999 = vunpack.c.l.b16 %v367
    %v1000 = vunpack.c.h.b16 %v367
    %v1001 = vunpack.c.l.b16 %v368
    %v1002 = vunpack.c.h.b16 %v368
    %v1003 = vunpack.c.l.b16 %v369
    %v1004 = vunpack.c.l.b16 %v370
    %v1005 = vunpack.c.h.b16 %v370
    %v1006 = vunpack.c.l.b16 %v371
    %v1007 = vunpack.c.h.b16 %v371
    %v1008 = vunpack.c.l.b16 %v372
    %v1009 = vunpack.c.l.b16 %v373
    %v1010 = vunpack.c.h.b16 %v373
    %v1011 = vunpack.c.l.b16 %v374
    %v1012 = vunpack.c.h.b16 %v374
    %v1013 = vunpack.c.l.b16 %v375
    %v1014 = vunpack.c.l.b16 %v376
    %v1015 = vunpack.c.h.b16 %v376
    %v1016 = vunpack.c.l.b16 %v377
    %v1017 = vunpack.c.h.b16 %v377
    %v1018 = vunpack.c.l.b16 %v378
    %v1019 = vpack.c.b16 %v624, %v619
    %v1020 = vpack.c.b16 %v625, %v620
    %v1021 = vpack.c.b16 %v626, %v621
    %v1022 = vpack.c.b16 %v627, %v622
    %v1023 = vpack.c.b16 %v628, %v623
    %v1024 = vpack.c.b16 %v634, %v629
    %v1025 = vpack.c.b16 %v635, %v630
    %v1026 = vpack.c.b16 %v636, %v631
    %v1027 = vpack.c.b16 %v637, %v632
    %v1028 = vpack.c.b16 %v638, %v633
    %v1029 = vpack.c.b16 %v644, %v639
    %v1030 = vpack.c.b16 %v645, %v640
    %v1031 = vpack.c.b16 %v646, %v641
    %v1032 = vpack.c.b16 %v647, %v642
    %v1033 = vpack.c.b16 %v648, %v643
    %v1034 = vpack.c.b16 %v654, %v649
    %v1035 = vpack.c.b16 %v655, %v650
    %v1036 = vpack.c.b16 %v656, %v651
    %v1037 = vpack.c.b16 %v657, %v652
    %v1038 = vpack.c.b16 %v658, %v653
    %v1039 = vpack.c.b16 %v664, %v659
    %v1040 = vpack.c.b16 %v665, %v660
    %v1041 = vpack.c.b16 %v666, %v661
    %v1042 = vpack.c.b16 %v667, %v662
    %v1043 = vpack.c.b16 %v668, %v663
    %v1044 = vpack.c.b16 %v674, %v669
    %v1045 = vpack.c.b16 %v675, %v670
    %v1046 = vpack.c.b16 %v676, %v671
    %v1047 = vpack.c.b16 %v677, %v672
    %v1048 = vpack.c.b16 %v678, %v673
    %v1049 = vpack.c.b16 %v684, %v679
    %v1050 = vpack.c.b16 %v685, %v680
    %v1051 = vpack.c.b16 %v686, %v681
    %v1052 = vpack.c.b16 %v687, %v682
    %v1053 = vpack.c.b16 %v688, %v683
    %v1054 = vpack.c.b16 %v694, %v689
    %v1055 = vpack.c.b16 %v695, %v690
    %v1056 = vpack.c.b16 %v696, %v691
    %v1057 = vpack.c.b16 %v697, %v692
    %v1058 = vpack.c.b16 %v698, %v693
    %v1059 = vpack.c.b16 %v704, %v699
    %v1060 = vpack.c.b16 %v705, %v700
    %v1061 = vpack.c.b16 %v706, %v701
    %v1062 = vpack.c.b16 %v707, %v702
    %v1063 = vpack.c.b16 %v708, %v703
    %v1064 = vpack.c.b16 %v714, %v709
    %v1065 = vpack.c.b16 %v715, %v710
    %v1066 = vpack.c.b16 %v716, %v711
    %v1067 = vpack.c.b16 %v717, %v712
    %v1068 = vpack.c.b16 %v718, %v713
    %v1069 = vpack.c.b16 %v724, %v719
    %v1070 = vpack.c.b16 %v725, %v720
    %v1071 = vpack.c.b16 %v726, %v721
    %v1072 = vpack.c.b16 %v727, %v722
    %v1073 = vpack.c.b16 %v728, %v723
    %v1074 = vpack.c.b16 %v734, %v729
    %v1075 = vpack.c.b16 %v735, %v730
    %v1076 = vpack.c.b16 %v736, %v731
    %v1077 = vpack.c.b16 %v737, %v732
    %v1078 = vpack.c.b16 %v738, %v733
    %v1079 = vpack.c.b16 %v744, %v739
    %v1080 = vpack.c.b16 %v745, %v740
    %v1081 = vpack.c.b16 %v746, %v741
    %v1082 = vpack.c.b16 %v747, %v742
    %v1083 = vpack.c.b16 %v748, %v743
    %v1084 = vpack.c.b16 %v754, %v749
    %v1085 = vpack.c.b16 %v755, %v750
    %v1086 = vpack.c.b16 %v756, %v751
    %v1087 = vpack.c.b16 %v757, %v752
    %v1088 = vpack.c.b16 %v758, %v753
    %v1089 = vpack.c.b16 %v764, %v759
    %v1090 = vpack.c.b16 %v765, %v760
    %v1091 = vpack.c.b16 %v766, %v761
    %v1092 = vpack.c.b16 %v767, %v762
    %v1093 = vpack.c.b16 %v768, %v763
    %v1094 = vpack.c.b16 %v774, %v769
    %v1095 = vpack.c.b16 %v775, %v770
    %v1096 = vpack.c.b16 %v776, %v771
    %v1097 = vpack.c.b16 %v777, %v772
    %v1098 = vpack.c.b16 %v778, %v773
    %v1099 = vpack.c.b16 %v784, %v779
    %v1100 = vpack.c.b16 %v785, %v780
    %v1101 = vpack.c.b16 %v786, %v781
    %v1102 = vpack.c.b16 %v787, %v782
    %v1103 = vpack.c.b16 %v788, %v783
    %v1104 = vpack.c.b16 %v794, %v789
    %v1105 = vpack.c.b16 %v795, %v790
    %v1106 = vpack.c.b16 %v796, %v791
    %v1107 = vpack.c.b16 %v797, %v792
    %v1108 = vpack.c.b16 %v798, %v793
    %v1109 = vpack.c.b16 %v804, %v799
    %v1110 = vpack.c.b16 %v805, %v800
    %v1111 = vpack.c.b16 %v806, %v801
    %v1112 = vpack.c.b16 %v807, %v802
    %v1113 = vpack.c.b16 %v808, %v803
    %v1114 = vpack.c.b16 %v814, %v809
    %v1115 = vpack.c.b16 %v815, %v810
    %v1116 = vpack.c.b16 %v816, %v811
    %v1117 = vpack.c.b16 %v817, %v812
    %v1118 = vpack.c.b16 %v818, %v813
    %v1119 = vpack.c.b16 %v824, %v819
    %v1120 = vpack.c.b16 %v825, %v820
    %v1121 = vpack.c.b16 %v826, %v821
    %v1122 = vpack.c.b16 %v827, %v822
    %v1123 = vpack.c.b16 %v828, %v823
    %v1124 = vpack.c.b16 %v834, %v829
    %v1125 = vpack.c.b16 %v835, %v830
    %v1126 = vpack.c.b16 %v836, %v831
    %v1127 = vpack.c.b16 %v837, %v832
    %v1128 = vpack.c.b16 %v838, %v833
    %v1129 = vpack.c.b16 %v844, %v839
    %v1130 = vpack.c.b16 %v845, %v840
    %v1131 = vpack.c.b16 %v846, %v841
    %v1132 = vpack.c.b16 %v847, %v842
    %v1133 = vpack.c.b16 %v848, %v843
    %v1134 = vpack.c.b16 %v854, %v849
    %v1135 = vpack.c.b16 %v855, %v850
    %v1136 = vpack.c.b16 %v856, %v851
    %v1137 = vpack.c.b16 %v857, %v852
    %v1138 = vpack.c.b16 %v858, %v853
    %v1139 = vpack.c.b16 %v864, %v859
    %v1140 = vpack.c.b16 %v865, %v860
    %v1141 = vpack.c.b16 %v866, %v861
    %v1142 = vpack.c.b16 %v867, %v862
    %v1143 = vpack.c.b16 %v868, %v863
    %v1144 = vpack.c.b16 %v874, %v869
    %v1145 = vpack.c.b16 %v875, %v870
    %v1146 = vpack.c.b16 %v876, %v871
    %v1147 = vpack.c.b16 %v877, %v872
    %v1148 = vpack.c.b16 %v878, %v873
    %v1149 = vpack.c.b16 %v884, %v879
    %v1150 = vpack.c.b16 %v885, %v880
    %v1151 = vpack.c.b16 %v886, %v881
    %v1152 = vpack.c.b16 %v887, %v882
    %v1153 = vpack.c.b16 %v888, %v883
    %v1154 = vpack.c.b16 %v894, %v889
    %v1155 = vpack.c.b16 %v895, %v890
    %v1156 = vpack.c.b16 %v896, %v891
    %v1157 = vpack.c.b16 %v897, %v892
    %v1158 = vpack.c.b16 %v898, %v893
    %v1159 = vpack.c.b16 %v904, %v899
    %v1160 = vpack.c.b16 %v905, %v900
    %v1161 = vpack.c.b16 %v906, %v901
    %v1162 = vpack.c.b16 %v907, %v902
    %v1163 = vpack.c.b16 %v908, %v903
    %v1164 = vpack.c.b16 %v914, %v909
    %v1165 = vpack.c.b16 %v915, %v910
    %v1166 = vpack.c.b16 %v916, %v911
    %v1167 = vpack.c.b16 %v917, %v912
    %v1168 = vpack.c.b16 %v918, %v913
    %v1169 = vpack.c.b16 %v924, %v919
    %v1170 = vpack.c.b16 %v925, %v920
    %v1171 = vpack.c.b16 %v926, %v921
    %v1172 = vpack.c.b16 %v927, %v922
    %v1173 = vpack.c.b16 %v928, %v923
    %v1174 = vpack.c.b16 %v934, %v929
    %v1175 = vpack.c.b16 %v935, %v930
    %v1176 = vpack.c.b16 %v936, %v931
    %v1177 = vpack.c.b16 %v937, %v932
    %v1178 = vpack.c.b16 %v938, %v933
    %v1179 = vpack.c.b16 %v944, %v939
    %v1180 = vpack.c.b16 %v945, %v940
    %v1181 = vpack.c.b16 %v946, %v941
    %v1182 = vpack.c.b16 %v947, %v942
    %v1183 = vpack.c.b16 %v948, %v943
    %v1184 = vpack.c.b16 %v954, %v949
    %v1185 = vpack.c.b16 %v955, %v950
    %v1186 = vpack.c.b16 %v956, %v951
    %v1187 = vpack.c.b16 %v957, %v952
    %v1188 = vpack.c.b16 %v958, %v953
    %v1189 = vpack.c.b16 %v964, %v959
    %v1190 = vpack.c.b16 %v965, %v960
    %v1191 = vpack.c.b16 %v966, %v961
    %v1192 = vpack.c.b16 %v967, %v962
    %v1193 = vpack.c.b16 %v968, %v963
    %v1194 = vpack.c.b16 %v974, %v969
    %v1195 = vpack.c.b16 %v975, %v970
    %v1196 = vpack.c.b16 %v976, %v971
    %v1197 = vpack.c.b16 %v977, %v972
    %v1198 = vpack.c.b16 %v978, %v973
    %v1199 = vpack.c.b16 %v984, %v979
    %v1200 = vpack.c.b16 %v985, %v980
    %v1201 = vpack.c.b16 %v986, %v981
    %v1202 = vpack.c.b16 %v987, %v982
    %v1203 = vpack.c.b16 %v988, %v983
    %v1204 = vpack.c.b16 %v994, %v989
    %v1205 = vpack.c.b16 %v995, %v990
    %v1206 = vpack.c.b16 %v996, %v991
    %v1207 = vpack.c.b16 %v997, %v992
    %v1208 = vpack.c.b16 %v998, %v993
    %v1209 = vpack.c.b16 %v1004, %v999
    %v1210 = vpack.c.b16 %v1005, %v1000
    %v1211 = vpack.c.b16 %v1006, %v1001
    %v1212 = vpack.c.b16 %v1007, %v1002
    %v1213 = vpack.c.b16 %v1008, %v1003
    %v1214 = vpack.c.b16 %v1014, %v1009
    %v1215 = vpack.c.b16 %v1015, %v1010
    %v1216 = vpack.c.b16 %v1016, %v1011
    %v1217 = vpack.c.b16 %v1017, %v1012
    %v1218 = vpack.c.b16 %v1018, %v1013
    %1419 = vmatprep.subr.bf16.mxu0 %v1055
    %1420 = vmatpush1.bf16.msra.mxu0 %v1054
    %1421 = vmatprep.subr.bf16.mxu0 %v1050
    %1422 = vmatpush1.bf16.msra.mxu0 %v1049
    %1423 = vmatprep.subr.bf16.mxu0 %v1045
    %1424 = vmatpush1.bf16.msra.mxu0 %v1044
    %1425 = vmatprep.subr.bf16.mxu0 %v1040
    %1426 = vmatpush1.bf16.msra.mxu0 %v1039
    %1427 = vmatprep.subr.bf16.mxu0 %v1035
    %1428 = vmatpush1.bf16.msra.mxu0 %v1034
    %1429 = vmatprep.subr.bf16.mxu0 %v1030
    %1430 = vmatpush1.bf16.msra.mxu0 %v1029
    %1431 = vmatprep.subr.bf16.mxu0 %v1025
    %1432 = vmatpush1.bf16.msra.mxu0 %v1024
    %1433 = vmatprep.subr.bf16.mxu0 %v1020
    %1434 = vmatpush1.bf16.msra.mxu0 %v1019
    %1435 = vmatprep.subr.bf16.mxu0 %v1095
    %1436 = vmatpush2.bf16.msra.mxu0 %v1094
    %1437 = vmatprep.subr.bf16.mxu0 %v1090
    %1438 = vmatpush2.bf16.msra.mxu0 %v1089
    %1439 = vmatprep.subr.bf16.mxu0 %v1085
    %1440 = vmatpush2.bf16.msra.mxu0 %v1084
    %1441 = vmatprep.subr.bf16.mxu0 %v1080
    %1442 = vmatpush2.bf16.msra.mxu0 %v1079
    %1443 = vmatprep.subr.bf16.mxu0 %v1075
    %1444 = vmatpush2.bf16.msra.mxu0 %v1074
    %1445 = vmatprep.subr.bf16.mxu0 %v1070
    %1446 = vmatpush2.bf16.msra.mxu0 %v1069
    %1447 = vmatprep.subr.bf16.mxu0 %v1065
    %1448 = vmatpush2.bf16.msra.mxu0 %v1064
    %1449 = vmatprep.subr.bf16.mxu0 %v1060
    %1450 = vmatpush2.bf16.msra.mxu0 %v1059
    %1451 = vmatprep.mubr.bf16.mxu0 %v100
    %1452 = vmatmul.mubr.bf16.gmra.mxu0 %v99
    %v1453 = vpop.f32.mrf.mxu0
    %v1454 = vadd.f32 0.0, %v1453
    %v1455 = vpop.f32.mrf.mxu0
    %v1456 = vadd.f32 0.0, %v1455
    %v1457 = vpop.f32.mrf.mxu0
    %v1458 = vadd.f32 0.0, %v1457
    %v1459 = vpop.f32.mrf.mxu0
    %v1460 = vadd.f32 0.0, %v1459
    %1461 = vmatprep.mubr.bf16.mxu0 %v105
    %1462 = vmatmul.mubr.bf16.gmra.mxu0 %v104
    %v1463 = vpop.f32.mrf.mxu0
    %v1464 = vadd.f32 0.0, %v1463
    %v1465 = vpop.f32.mrf.mxu0
    %v1466 = vadd.f32 0.0, %v1465
    %v1467 = vpop.f32.mrf.mxu0
    %v1468 = vadd.f32 0.0, %v1467
    %v1469 = vpop.f32.mrf.mxu0
    %v1470 = vadd.f32 0.0, %v1469
    %1471 = vmatprep.mubr.bf16.mxu0 %v110
    %1472 = vmatmul.mubr.bf16.gmra.mxu0 %v109
    %v1473 = vpop.f32.mrf.mxu0
    %v1474 = vadd.f32 0.0, %v1473
    %v1475 = vpop.f32.mrf.mxu0
    %v1476 = vadd.f32 0.0, %v1475
    %v1477 = vpop.f32.mrf.mxu0
    %v1478 = vadd.f32 0.0, %v1477
    %v1479 = vpop.f32.mrf.mxu0
    %v1480 = vadd.f32 0.0, %v1479
    %1481 = vmatprep.mubr.bf16.mxu0 %v115
    %1482 = vmatmul.mubr.bf16.gmra.mxu0 %v114
    %v1483 = vpop.f32.mrf.mxu0
    %v1484 = vadd.f32 0.0, %v1483
    %v1485 = vpop.f32.mrf.mxu0
    %v1486 = vadd.f32 0.0, %v1485
    %v1487 = vpop.f32.mrf.mxu0
    %v1488 = vadd.f32 0.0, %v1487
    %v1489 = vpop.f32.mrf.mxu0
    %v1490 = vadd.f32 0.0, %v1489
    %1491 = vmatprep.mubr.bf16.mxu0 %v120
    %1492 = vmatmul.mubr.bf16.gmra.mxu0 %v119
    %v1493 = vpop.f32.mrf.mxu0
    %v1494 = vadd.f32 0.0, %v1493
    %v1495 = vpop.f32.mrf.mxu0
    %v1496 = vadd.f32 0.0, %v1495
    %v1497 = vpop.f32.mrf.mxu0
    %v1498 = vadd.f32 0.0, %v1497
    %v1499 = vpop.f32.mrf.mxu0
    %v1500 = vadd.f32 0.0, %v1499
    %1501 = vmatprep.mubr.bf16.mxu0 %v125
    %1502 = vmatmul.mubr.bf16.gmra.mxu0 %v124
    %v1503 = vpop.f32.mrf.mxu0
    %v1504 = vadd.f32 0.0, %v1503
    %v1505 = vpop.f32.mrf.mxu0
    %v1506 = vadd.f32 0.0, %v1505
    %v1507 = vpop.f32.mrf.mxu0
    %v1508 = vadd.f32 0.0, %v1507
    %v1509 = vpop.f32.mrf.mxu0
    %v1510 = vadd.f32 0.0, %v1509
    %1511 = vmatprep.mubr.bf16.mxu0 %v130
    %1512 = vmatmul.mubr.bf16.gmra.mxu0 %v129
    %v1513 = vpop.f32.mrf.mxu0
    %v1514 = vadd.f32 0.0, %v1513
    %v1515 = vpop.f32.mrf.mxu0
    %v1516 = vadd.f32 0.0, %v1515
    %v1517 = vpop.f32.mrf.mxu0
    %v1518 = vadd.f32 0.0, %v1517
    %v1519 = vpop.f32.mrf.mxu0
    %v1520 = vadd.f32 0.0, %v1519
    %1521 = vmatprep.mubr.bf16.mxu0 %v135
    %1522 = vmatmul.mubr.bf16.gmra.mxu0 %v134
    %v1523 = vpop.f32.mrf.mxu0
    %v1524 = vadd.f32 0.0, %v1523
    %v1525 = vpop.f32.mrf.mxu0
    %v1526 = vadd.f32 0.0, %v1525
    %v1527 = vpop.f32.mrf.mxu0
    %v1528 = vadd.f32 0.0, %v1527
    %v1529 = vpop.f32.mrf.mxu0
    %v1530 = vadd.f32 0.0, %v1529
    %1531 = vdwg.mxu0
    %1532 = vmatprep.subr.bf16.mxu0 %v1135
    %1533 = vmatpush1.bf16.msra.mxu0 %v1134
    %1534 = vmatprep.subr.bf16.mxu0 %v1130
    %1535 = vmatpush1.bf16.msra.mxu0 %v1129
    %1536 = vmatprep.subr.bf16.mxu0 %v1125
    %1537 = vmatpush1.bf16.msra.mxu0 %v1124
    %1538 = vmatprep.subr.bf16.mxu0 %v1120
    %1539 = vmatpush1.bf16.msra.mxu0 %v1119
    %1540 = vmatprep.subr.bf16.mxu0 %v1115
    %1541 = vmatpush1.bf16.msra.mxu0 %v1114
    %1542 = vmatprep.subr.bf16.mxu0 %v1110
    %1543 = vmatpush1.bf16.msra.mxu0 %v1109
    %1544 = vmatprep.subr.bf16.mxu0 %v1105
    %1545 = vmatpush1.bf16.msra.mxu0 %v1104
    %1546 = vmatprep.subr.bf16.mxu0 %v1100
    %1547 = vmatpush1.bf16.msra.mxu0 %v1099
    %1548 = vmatprep.subr.bf16.mxu0 %v1175
    %1549 = vmatpush2.bf16.msra.mxu0 %v1174
    %1550 = vmatprep.subr.bf16.mxu0 %v1170
    %1551 = vmatpush2.bf16.msra.mxu0 %v1169
    %1552 = vmatprep.subr.bf16.mxu0 %v1165
    %1553 = vmatpush2.bf16.msra.mxu0 %v1164
    %1554 = vmatprep.subr.bf16.mxu0 %v1160
    %1555 = vmatpush2.bf16.msra.mxu0 %v1159
    %1556 = vmatprep.subr.bf16.mxu0 %v1155
    %1557 = vmatpush2.bf16.msra.mxu0 %v1154
    %1558 = vmatprep.subr.bf16.mxu0 %v1150
    %1559 = vmatpush2.bf16.msra.mxu0 %v1149
    %1560 = vmatprep.subr.bf16.mxu0 %v1145
    %1561 = vmatpush2.bf16.msra.mxu0 %v1144
    %1562 = vmatprep.subr.bf16.mxu0 %v1140
    %1563 = vmatpush2.bf16.msra.mxu0 %v1139
    %1564 = vmatprep.mubr.bf16.mxu0 %v102
    %1565 = vmatmul.mubr.bf16.gmra.mxu0 %v101
    %v1566 = vpop.f32.mrf.mxu0
    %v1567 = vadd.f32 %v1454, %v1566
    %v1568 = vpop.f32.mrf.mxu0
    %v1569 = vadd.f32 %v1456, %v1568
    %v1570 = vpop.f32.mrf.mxu0
    %v1571 = vadd.f32 %v1458, %v1570
    %v1572 = vpop.f32.mrf.mxu0
    %v1573 = vadd.f32 %v1460, %v1572
    %1574 = vmatprep.mubr.bf16.mxu0 %v107
    %1575 = vmatmul.mubr.bf16.gmra.mxu0 %v106
    %v1576 = vpop.f32.mrf.mxu0
    %v1577 = vadd.f32 %v1464, %v1576
    %v1578 = vpop.f32.mrf.mxu0
    %v1579 = vadd.f32 %v1466, %v1578
    %v1580 = vpop.f32.mrf.mxu0
    %v1581 = vadd.f32 %v1468, %v1580
    %v1582 = vpop.f32.mrf.mxu0
    %v1583 = vadd.f32 %v1470, %v1582
    %1584 = vmatprep.mubr.bf16.mxu0 %v112
    %1585 = vmatmul.mubr.bf16.gmra.mxu0 %v111
    %v1586 = vpop.f32.mrf.mxu0
    %v1587 = vadd.f32 %v1474, %v1586
    %v1588 = vpop.f32.mrf.mxu0
    %v1589 = vadd.f32 %v1476, %v1588
    %v1590 = vpop.f32.mrf.mxu0
    %v1591 = vadd.f32 %v1478, %v1590
    %v1592 = vpop.f32.mrf.mxu0
    %v1593 = vadd.f32 %v1480, %v1592
    %1594 = vmatprep.mubr.bf16.mxu0 %v117
    %1595 = vmatmul.mubr.bf16.gmra.mxu0 %v116
    %v1596 = vpop.f32.mrf.mxu0
    %v1597 = vadd.f32 %v1484, %v1596
    %v1598 = vpop.f32.mrf.mxu0
    %v1599 = vadd.f32 %v1486, %v1598
    %v1600 = vpop.f32.mrf.mxu0
    %v1601 = vadd.f32 %v1488, %v1600
    %v1602 = vpop.f32.mrf.mxu0
    %v1603 = vadd.f32 %v1490, %v1602
    %1604 = vmatprep.mubr.bf16.mxu0 %v122
    %1605 = vmatmul.mubr.bf16.gmra.mxu0 %v121
    %v1606 = vpop.f32.mrf.mxu0
    %v1607 = vadd.f32 %v1494, %v1606
    %v1608 = vpop.f32.mrf.mxu0
    %v1609 = vadd.f32 %v1496, %v1608
    %v1610 = vpop.f32.mrf.mxu0
    %v1611 = vadd.f32 %v1498, %v1610
    %v1612 = vpop.f32.mrf.mxu0
    %v1613 = vadd.f32 %v1500, %v1612
    %1614 = vmatprep.mubr.bf16.mxu0 %v127
    %1615 = vmatmul.mubr.bf16.gmra.mxu0 %v126
    %v1616 = vpop.f32.mrf.mxu0
    %v1617 = vadd.f32 %v1504, %v1616
    %v1618 = vpop.f32.mrf.mxu0
    %v1619 = vadd.f32 %v1506, %v1618
    %v1620 = vpop.f32.mrf.mxu0
    %v1621 = vadd.f32 %v1508, %v1620
    %v1622 = vpop.f32.mrf.mxu0
    %v1623 = vadd.f32 %v1510, %v1622
    %1624 = vmatprep.mubr.bf16.mxu0 %v132
    %1625 = vmatmul.mubr.bf16.gmra.mxu0 %v131
    %v1626 = vpop.f32.mrf.mxu0
    %v1627 = vadd.f32 %v1514, %v1626
    %v1628 = vpop.f32.mrf.mxu0
    %v1629 = vadd.f32 %v1516, %v1628
    %v1630 = vpop.f32.mrf.mxu0
    %v1631 = vadd.f32 %v1518, %v1630
    %v1632 = vpop.f32.mrf.mxu0
    %v1633 = vadd.f32 %v1520, %v1632
    %1634 = vmatprep.mubr.bf16.mxu0 %v137
    %1635 = vmatmul.mubr.bf16.gmra.mxu0 %v136
    %v1636 = vpop.f32.mrf.mxu0
    %v1637 = vadd.f32 %v1524, %v1636
    %v1638 = vpop.f32.mrf.mxu0
    %v1639 = vadd.f32 %v1526, %v1638
    %v1640 = vpop.f32.mrf.mxu0
    %v1641 = vadd.f32 %v1528, %v1640
    %v1642 = vpop.f32.mrf.mxu0
    %v1643 = vadd.f32 %v1530, %v1642
    %1644 = vdwg.mxu0
    %1645 = vmatprep.subr.bf16.mxu0 %v1215
    %1646 = vmatpush1.bf16.msra.mxu0 %v1214
    %1647 = vmatprep.subr.bf16.mxu0 %v1210
    %1648 = vmatpush1.bf16.msra.mxu0 %v1209
    %1649 = vmatprep.subr.bf16.mxu0 %v1205
    %1650 = vmatpush1.bf16.msra.mxu0 %v1204
    %1651 = vmatprep.subr.bf16.mxu0 %v1200
    %1652 = vmatpush1.bf16.msra.mxu0 %v1199
    %1653 = vmatprep.subr.bf16.mxu0 %v1195
    %1654 = vmatpush1.bf16.msra.mxu0 %v1194
    %1655 = vmatprep.subr.bf16.mxu0 %v1190
    %1656 = vmatpush1.bf16.msra.mxu0 %v1189
    %1657 = vmatprep.subr.bf16.mxu0 %v1185
    %1658 = vmatpush1.bf16.msra.mxu0 %v1184
    %1659 = vmatprep.subr.bf16.mxu0 %v1180
    %1660 = vmatpush1.bf16.msra.mxu0 %v1179
    %1661 = vmatprep.subr.bf16.mxu0 0
    %1662 = vmatpush2.bf16.msra.mxu0 0
    %1663 = vmatprep.subr.bf16.mxu0 0
    %1664 = vmatpush2.bf16.msra.mxu0 0
    %1665 = vmatprep.subr.bf16.mxu0 0
    %1666 = vmatpush2.bf16.msra.mxu0 0
    %1667 = vmatprep.subr.bf16.mxu0 0
    %1668 = vmatpush2.bf16.msra.mxu0 0
    %1669 = vmatprep.subr.bf16.mxu0 0
    %1670 = vmatpush2.bf16.msra.mxu0 0
    %1671 = vmatprep.subr.bf16.mxu0 0
    %1672 = vmatpush2.bf16.msra.mxu0 0
    %1673 = vmatprep.subr.bf16.mxu0 0
    %1674 = vmatpush2.bf16.msra.mxu0 0
    %1675 = vmatprep.subr.bf16.mxu0 0
    %1676 = vmatpush2.bf16.msra.mxu0 0
    %1677 = vmatprep.mubr.bf16.mxu0 0
    %1678 = vmatmul.mubr.bf16.gmra.mxu0 %v103
    %v1679 = vpop.f32.mrf.mxu0
    %v1680 = vadd.f32 %v1567, %v1679
    %v1681 = vpop.f32.mrf.mxu0
    %v1682 = vadd.f32 %v1569, %v1681
    %v1683 = vpop.f32.mrf.mxu0
    %v1684 = vadd.f32 %v1571, %v1683
    %v1685 = vpop.f32.mrf.mxu0
    %v1686 = vadd.f32 %v1573, %v1685
    %1687 = vmatprep.mubr.bf16.mxu0 0
    %1688 = vmatmul.mubr.bf16.gmra.mxu0 %v108
    %v1689 = vpop.f32.mrf.mxu0
    %v1690 = vadd.f32 %v1577, %v1689
    %v1691 = vpop.f32.mrf.mxu0
    %v1692 = vadd.f32 %v1579, %v1691
    %v1693 = vpop.f32.mrf.mxu0
    %v1694 = vadd.f32 %v1581, %v1693
    %v1695 = vpop.f32.mrf.mxu0
    %v1696 = vadd.f32 %v1583, %v1695
    %1697 = vmatprep.mubr.bf16.mxu0 0
    %1698 = vmatmul.mubr.bf16.gmra.mxu0 %v113
    %v1699 = vpop.f32.mrf.mxu0
    %v1700 = vadd.f32 %v1587, %v1699
    %v1701 = vpop.f32.mrf.mxu0
    %v1702 = vadd.f32 %v1589, %v1701
    %v1703 = vpop.f32.mrf.mxu0
    %v1704 = vadd.f32 %v1591, %v1703
    %v1705 = vpop.f32.mrf.mxu0
    %v1706 = vadd.f32 %v1593, %v1705
    %1707 = vmatprep.mubr.bf16.mxu0 0
    %1708 = vmatmul.mubr.bf16.gmra.mxu0 %v118
    %v1709 = vpop.f32.mrf.mxu0
    %v1710 = vadd.f32 %v1597, %v1709
    %v1711 = vpop.f32.mrf.mxu0
    %v1712 = vadd.f32 %v1599, %v1711
    %v1713 = vpop.f32.mrf.mxu0
    %v1714 = vadd.f32 %v1601, %v1713
    %v1715 = vpop.f32.mrf.mxu0
    %v1716 = vadd.f32 %v1603, %v1715
    %1717 = vmatprep.mubr.bf16.mxu0 0
    %1718 = vmatmul.mubr.bf16.gmra.mxu0 %v123
    %v1719 = vpop.f32.mrf.mxu0
    %v1720 = vadd.f32 %v1607, %v1719
    %v1721 = vpop.f32.mrf.mxu0
    %v1722 = vadd.f32 %v1609, %v1721
    %v1723 = vpop.f32.mrf.mxu0
    %v1724 = vadd.f32 %v1611, %v1723
    %v1725 = vpop.f32.mrf.mxu0
    %v1726 = vadd.f32 %v1613, %v1725
    %1727 = vmatprep.mubr.bf16.mxu0 0
    %1728 = vmatmul.mubr.bf16.gmra.mxu0 %v128
    %v1729 = vpop.f32.mrf.mxu0
    %v1730 = vadd.f32 %v1617, %v1729
    %v1731 = vpop.f32.mrf.mxu0
    %v1732 = vadd.f32 %v1619, %v1731
    %v1733 = vpop.f32.mrf.mxu0
    %v1734 = vadd.f32 %v1621, %v1733
    %v1735 = vpop.f32.mrf.mxu0
    %v1736 = vadd.f32 %v1623, %v1735
    %1737 = vmatprep.mubr.bf16.mxu0 0
    %1738 = vmatmul.mubr.bf16.gmra.mxu0 %v133
    %v1739 = vpop.f32.mrf.mxu0
    %v1740 = vadd.f32 %v1627, %v1739
    %v1741 = vpop.f32.mrf.mxu0
    %v1742 = vadd.f32 %v1629, %v1741
    %v1743 = vpop.f32.mrf.mxu0
    %v1744 = vadd.f32 %v1631, %v1743
    %v1745 = vpop.f32.mrf.mxu0
    %v1746 = vadd.f32 %v1633, %v1745
    %1747 = vmatprep.mubr.bf16.mxu0 0
    %1748 = vmatmul.mubr.bf16.gmra.mxu0 %v138
    %v1749 = vpop.f32.mrf.mxu0
    %v1750 = vadd.f32 %v1637, %v1749
    %v1751 = vpop.f32.mrf.mxu0
    %v1752 = vadd.f32 %v1639, %v1751
    %v1753 = vpop.f32.mrf.mxu0
    %v1754 = vadd.f32 %v1641, %v1753
    %v1755 = vpop.f32.mrf.mxu0
    %v1756 = vadd.f32 %v1643, %v1755
    %1757 = vdwg.mxu0
    %1758 = vmatprep.subr.bf16.mxu0 %v1057
    %1759 = vmatpush1.bf16.msra.mxu0 %v1056
    %1760 = vmatprep.subr.bf16.mxu0 %v1052
    %1761 = vmatpush1.bf16.msra.mxu0 %v1051
    %1762 = vmatprep.subr.bf16.mxu0 %v1047
    %1763 = vmatpush1.bf16.msra.mxu0 %v1046
    %1764 = vmatprep.subr.bf16.mxu0 %v1042
    %1765 = vmatpush1.bf16.msra.mxu0 %v1041
    %1766 = vmatprep.subr.bf16.mxu0 %v1037
    %1767 = vmatpush1.bf16.msra.mxu0 %v1036
    %1768 = vmatprep.subr.bf16.mxu0 %v1032
    %1769 = vmatpush1.bf16.msra.mxu0 %v1031
    %1770 = vmatprep.subr.bf16.mxu0 %v1027
    %1771 = vmatpush1.bf16.msra.mxu0 %v1026
    %1772 = vmatprep.subr.bf16.mxu0 %v1022
    %1773 = vmatpush1.bf16.msra.mxu0 %v1021
    %1774 = vmatprep.subr.bf16.mxu0 %v1097
    %1775 = vmatpush2.bf16.msra.mxu0 %v1096
    %1776 = vmatprep.subr.bf16.mxu0 %v1092
    %1777 = vmatpush2.bf16.msra.mxu0 %v1091
    %1778 = vmatprep.subr.bf16.mxu0 %v1087
    %1779 = vmatpush2.bf16.msra.mxu0 %v1086
    %1780 = vmatprep.subr.bf16.mxu0 %v1082
    %1781 = vmatpush2.bf16.msra.mxu0 %v1081
    %1782 = vmatprep.subr.bf16.mxu0 %v1077
    %1783 = vmatpush2.bf16.msra.mxu0 %v1076
    %1784 = vmatprep.subr.bf16.mxu0 %v1072
    %1785 = vmatpush2.bf16.msra.mxu0 %v1071
    %1786 = vmatprep.subr.bf16.mxu0 %v1067
    %1787 = vmatpush2.bf16.msra.mxu0 %v1066
    %1788 = vmatprep.subr.bf16.mxu0 %v1062
    %1789 = vmatpush2.bf16.msra.mxu0 %v1061
    %1790 = vmatprep.mubr.bf16.mxu0 %v100
    %1791 = vmatmul.mubr.bf16.gmra.mxu0 %v99
    %v1792 = vpop.f32.mrf.mxu0
    %v1793 = vadd.f32 0.0, %v1792
    %v1794 = vpop.f32.mrf.mxu0
    %v1795 = vadd.f32 0.0, %v1794
    %v1796 = vpop.f32.mrf.mxu0
    %v1797 = vadd.f32 0.0, %v1796
    %v1798 = vpop.f32.mrf.mxu0
    %v1799 = vadd.f32 0.0, %v1798
    %1800 = vmatprep.mubr.bf16.mxu0 %v105
    %1801 = vmatmul.mubr.bf16.gmra.mxu0 %v104
    %v1802 = vpop.f32.mrf.mxu0
    %v1803 = vadd.f32 0.0, %v1802
    %v1804 = vpop.f32.mrf.mxu0
    %v1805 = vadd.f32 0.0, %v1804
    %v1806 = vpop.f32.mrf.mxu0
    %v1807 = vadd.f32 0.0, %v1806
    %v1808 = vpop.f32.mrf.mxu0
    %v1809 = vadd.f32 0.0, %v1808
    %1810 = vmatprep.mubr.bf16.mxu0 %v110
    %1811 = vmatmul.mubr.bf16.gmra.mxu0 %v109
    %v1812 = vpop.f32.mrf.mxu0
    %v1813 = vadd.f32 0.0, %v1812
    %v1814 = vpop.f32.mrf.mxu0
    %v1815 = vadd.f32 0.0, %v1814
    %v1816 = vpop.f32.mrf.mxu0
    %v1817 = vadd.f32 0.0, %v1816
    %v1818 = vpop.f32.mrf.mxu0
    %v1819 = vadd.f32 0.0, %v1818
    %1820 = vmatprep.mubr.bf16.mxu0 %v115
    %1821 = vmatmul.mubr.bf16.gmra.mxu0 %v114
    %v1822 = vpop.f32.mrf.mxu0
    %v1823 = vadd.f32 0.0, %v1822
    %v1824 = vpop.f32.mrf.mxu0
    %v1825 = vadd.f32 0.0, %v1824
    %v1826 = vpop.f32.mrf.mxu0
    %v1827 = vadd.f32 0.0, %v1826
    %v1828 = vpop.f32.mrf.mxu0
    %v1829 = vadd.f32 0.0, %v1828
    %1830 = vmatprep.mubr.bf16.mxu0 %v120
    %1831 = vmatmul.mubr.bf16.gmra.mxu0 %v119
    %v1832 = vpop.f32.mrf.mxu0
    %v1833 = vadd.f32 0.0, %v1832
    %v1834 = vpop.f32.mrf.mxu0
    %v1835 = vadd.f32 0.0, %v1834
    %v1836 = vpop.f32.mrf.mxu0
    %v1837 = vadd.f32 0.0, %v1836
    %v1838 = vpop.f32.mrf.mxu0
    %v1839 = vadd.f32 0.0, %v1838
    %1840 = vmatprep.mubr.bf16.mxu0 %v125
    %1841 = vmatmul.mubr.bf16.gmra.mxu0 %v124
    %v1842 = vpop.f32.mrf.mxu0
    %v1843 = vadd.f32 0.0, %v1842
    %v1844 = vpop.f32.mrf.mxu0
    %v1845 = vadd.f32 0.0, %v1844
    %v1846 = vpop.f32.mrf.mxu0
    %v1847 = vadd.f32 0.0, %v1846
    %v1848 = vpop.f32.mrf.mxu0
    %v1849 = vadd.f32 0.0, %v1848
    %1850 = vmatprep.mubr.bf16.mxu0 %v130
    %1851 = vmatmul.mubr.bf16.gmra.mxu0 %v129
    %v1852 = vpop.f32.mrf.mxu0
    %v1853 = vadd.f32 0.0, %v1852
    %v1854 = vpop.f32.mrf.mxu0
    %v1855 = vadd.f32 0.0, %v1854
    %v1856 = vpop.f32.mrf.mxu0
    %v1857 = vadd.f32 0.0, %v1856
    %v1858 = vpop.f32.mrf.mxu0
    %v1859 = vadd.f32 0.0, %v1858
    %1860 = vmatprep.mubr.bf16.mxu0 %v135
    %1861 = vmatmul.mubr.bf16.gmra.mxu0 %v134
    %v1862 = vpop.f32.mrf.mxu0
    %v1863 = vadd.f32 0.0, %v1862
    %v1864 = vpop.f32.mrf.mxu0
    %v1865 = vadd.f32 0.0, %v1864
    %v1866 = vpop.f32.mrf.mxu0
    %v1867 = vadd.f32 0.0, %v1866
    %v1868 = vpop.f32.mrf.mxu0
    %v1869 = vadd.f32 0.0, %v1868
    %1870 = vdwg.mxu0
    %1871 = vmatprep.subr.bf16.mxu0 %v1137
    %1872 = vmatpush1.bf16.msra.mxu0 %v1136
    %1873 = vmatprep.subr.bf16.mxu0 %v1132
    %1874 = vmatpush1.bf16.msra.mxu0 %v1131
    %1875 = vmatprep.subr.bf16.mxu0 %v1127
    %1876 = vmatpush1.bf16.msra.mxu0 %v1126
    %1877 = vmatprep.subr.bf16.mxu0 %v1122
    %1878 = vmatpush1.bf16.msra.mxu0 %v1121
    %1879 = vmatprep.subr.bf16.mxu0 %v1117
    %1880 = vmatpush1.bf16.msra.mxu0 %v1116
    %1881 = vmatprep.subr.bf16.mxu0 %v1112
    %1882 = vmatpush1.bf16.msra.mxu0 %v1111
    %1883 = vmatprep.subr.bf16.mxu0 %v1107
    %1884 = vmatpush1.bf16.msra.mxu0 %v1106
    %1885 = vmatprep.subr.bf16.mxu0 %v1102
    %1886 = vmatpush1.bf16.msra.mxu0 %v1101
    %1887 = vmatprep.subr.bf16.mxu0 %v1177
    %1888 = vmatpush2.bf16.msra.mxu0 %v1176
    %1889 = vmatprep.subr.bf16.mxu0 %v1172
    %1890 = vmatpush2.bf16.msra.mxu0 %v1171
    %1891 = vmatprep.subr.bf16.mxu0 %v1167
    %1892 = vmatpush2.bf16.msra.mxu0 %v1166
    %1893 = vmatprep.subr.bf16.mxu0 %v1162
    %1894 = vmatpush2.bf16.msra.mxu0 %v1161
    %1895 = vmatprep.subr.bf16.mxu0 %v1157
    %1896 = vmatpush2.bf16.msra.mxu0 %v1156
    %1897 = vmatprep.subr.bf16.mxu0 %v1152
    %1898 = vmatpush2.bf16.msra.mxu0 %v1151
    %1899 = vmatprep.subr.bf16.mxu0 %v1147
    %1900 = vmatpush2.bf16.msra.mxu0 %v1146
    %1901 = vmatprep.subr.bf16.mxu0 %v1142
    %1902 = vmatpush2.bf16.msra.mxu0 %v1141
    %1903 = vmatprep.mubr.bf16.mxu0 %v102
    %1904 = vmatmul.mubr.bf16.gmra.mxu0 %v101
    %v1905 = vpop.f32.mrf.mxu0
    %v1906 = vadd.f32 %v1793, %v1905
    %v1907 = vpop.f32.mrf.mxu0
    %v1908 = vadd.f32 %v1795, %v1907
    %v1909 = vpop.f32.mrf.mxu0
    %v1910 = vadd.f32 %v1797, %v1909
    %v1911 = vpop.f32.mrf.mxu0
    %v1912 = vadd.f32 %v1799, %v1911
    %1913 = vmatprep.mubr.bf16.mxu0 %v107
    %1914 = vmatmul.mubr.bf16.gmra.mxu0 %v106
    %v1915 = vpop.f32.mrf.mxu0
    %v1916 = vadd.f32 %v1803, %v1915
    %v1917 = vpop.f32.mrf.mxu0
    %v1918 = vadd.f32 %v1805, %v1917
    %v1919 = vpop.f32.mrf.mxu0
    %v1920 = vadd.f32 %v1807, %v1919
    %v1921 = vpop.f32.mrf.mxu0
    %v1922 = vadd.f32 %v1809, %v1921
    %1923 = vmatprep.mubr.bf16.mxu0 %v112
    %1924 = vmatmul.mubr.bf16.gmra.mxu0 %v111
    %v1925 = vpop.f32.mrf.mxu0
    %v1926 = vadd.f32 %v1813, %v1925
    %v1927 = vpop.f32.mrf.mxu0
    %v1928 = vadd.f32 %v1815, %v1927
    %v1929 = vpop.f32.mrf.mxu0
    %v1930 = vadd.f32 %v1817, %v1929
    %v1931 = vpop.f32.mrf.mxu0
    %v1932 = vadd.f32 %v1819, %v1931
    %1933 = vmatprep.mubr.bf16.mxu0 %v117
    %1934 = vmatmul.mubr.bf16.gmra.mxu0 %v116
    %v1935 = vpop.f32.mrf.mxu0
    %v1936 = vadd.f32 %v1823, %v1935
    %v1937 = vpop.f32.mrf.mxu0
    %v1938 = vadd.f32 %v1825, %v1937
    %v1939 = vpop.f32.mrf.mxu0
    %v1940 = vadd.f32 %v1827, %v1939
    %v1941 = vpop.f32.mrf.mxu0
    %v1942 = vadd.f32 %v1829, %v1941
    %1943 = vmatprep.mubr.bf16.mxu0 %v122
    %1944 = vmatmul.mubr.bf16.gmra.mxu0 %v121
    %v1945 = vpop.f32.mrf.mxu0
    %v1946 = vadd.f32 %v1833, %v1945
    %v1947 = vpop.f32.mrf.mxu0
    %v1948 = vadd.f32 %v1835, %v1947
    %v1949 = vpop.f32.mrf.mxu0
    %v1950 = vadd.f32 %v1837, %v1949
    %v1951 = vpop.f32.mrf.mxu0
    %v1952 = vadd.f32 %v1839, %v1951
    %1953 = vmatprep.mubr.bf16.mxu0 %v127
    %1954 = vmatmul.mubr.bf16.gmra.mxu0 %v126
    %v1955 = vpop.f32.mrf.mxu0
    %v1956 = vadd.f32 %v1843, %v1955
    %v1957 = vpop.f32.mrf.mxu0
    %v1958 = vadd.f32 %v1845, %v1957
    %v1959 = vpop.f32.mrf.mxu0
    %v1960 = vadd.f32 %v1847, %v1959
    %v1961 = vpop.f32.mrf.mxu0
    %v1962 = vadd.f32 %v1849, %v1961
    %1963 = vmatprep.mubr.bf16.mxu0 %v132
    %1964 = vmatmul.mubr.bf16.gmra.mxu0 %v131
    %v1965 = vpop.f32.mrf.mxu0
    %v1966 = vadd.f32 %v1853, %v1965
    %v1967 = vpop.f32.mrf.mxu0
    %v1968 = vadd.f32 %v1855, %v1967
    %v1969 = vpop.f32.mrf.mxu0
    %v1970 = vadd.f32 %v1857, %v1969
    %v1971 = vpop.f32.mrf.mxu0
    %v1972 = vadd.f32 %v1859, %v1971
    %1973 = vmatprep.mubr.bf16.mxu0 %v137
    %1974 = vmatmul.mubr.bf16.gmra.mxu0 %v136
    %v1975 = vpop.f32.mrf.mxu0
    %v1976 = vadd.f32 %v1863, %v1975
    %v1977 = vpop.f32.mrf.mxu0
    %v1978 = vadd.f32 %v1865, %v1977
    %v1979 = vpop.f32.mrf.mxu0
    %v1980 = vadd.f32 %v1867, %v1979
    %v1981 = vpop.f32.mrf.mxu0
    %v1982 = vadd.f32 %v1869, %v1981
    %1983 = vdwg.mxu0
    %1984 = vmatprep.subr.bf16.mxu0 %v1217
    %1985 = vmatpush1.bf16.msra.mxu0 %v1216
    %1986 = vmatprep.subr.bf16.mxu0 %v1212
    %1987 = vmatpush1.bf16.msra.mxu0 %v1211
    %1988 = vmatprep.subr.bf16.mxu0 %v1207
    %1989 = vmatpush1.bf16.msra.mxu0 %v1206
    %1990 = vmatprep.subr.bf16.mxu0 %v1202
    %1991 = vmatpush1.bf16.msra.mxu0 %v1201
    %1992 = vmatprep.subr.bf16.mxu0 %v1197
    %1993 = vmatpush1.bf16.msra.mxu0 %v1196
    %1994 = vmatprep.subr.bf16.mxu0 %v1192
    %1995 = vmatpush1.bf16.msra.mxu0 %v1191
    %1996 = vmatprep.subr.bf16.mxu0 %v1187
    %1997 = vmatpush1.bf16.msra.mxu0 %v1186
    %1998 = vmatprep.subr.bf16.mxu0 %v1182
    %1999 = vmatpush1.bf16.msra.mxu0 %v1181
    %2000 = vmatprep.subr.bf16.mxu0 0
    %2001 = vmatpush2.bf16.msra.mxu0 0
    %2002 = vmatprep.subr.bf16.mxu0 0
    %2003 = vmatpush2.bf16.msra.mxu0 0
    %2004 = vmatprep.subr.bf16.mxu0 0
    %2005 = vmatpush2.bf16.msra.mxu0 0
    %2006 = vmatprep.subr.bf16.mxu0 0
    %2007 = vmatpush2.bf16.msra.mxu0 0
    %2008 = vmatprep.subr.bf16.mxu0 0
    %2009 = vmatpush2.bf16.msra.mxu0 0
    %2010 = vmatprep.subr.bf16.mxu0 0
    %2011 = vmatpush2.bf16.msra.mxu0 0
    %2012 = vmatprep.subr.bf16.mxu0 0
    %2013 = vmatpush2.bf16.msra.mxu0 0
    %2014 = vmatprep.subr.bf16.mxu0 0
    %2015 = vmatpush2.bf16.msra.mxu0 0
    %2016 = vmatprep.mubr.bf16.mxu0 0
    %2017 = vmatmul.mubr.bf16.gmra.mxu0 %v103
    %v2018 = vpop.f32.mrf.mxu0
    %v2019 = vadd.f32 %v1906, %v2018
    %v2020 = vpop.f32.mrf.mxu0
    %v2021 = vadd.f32 %v1908, %v2020
    %v2022 = vpop.f32.mrf.mxu0
    %v2023 = vadd.f32 %v1910, %v2022
    %v2024 = vpop.f32.mrf.mxu0
    %v2025 = vadd.f32 %v1912, %v2024
    %2026 = vmatprep.mubr.bf16.mxu0 0
    %2027 = vmatmul.mubr.bf16.gmra.mxu0 %v108
    %v2028 = vpop.f32.mrf.mxu0
    %v2029 = vadd.f32 %v1916, %v2028
    %v2030 = vpop.f32.mrf.mxu0
    %v2031 = vadd.f32 %v1918, %v2030
    %v2032 = vpop.f32.mrf.mxu0
    %v2033 = vadd.f32 %v1920, %v2032
    %v2034 = vpop.f32.mrf.mxu0
    %v2035 = vadd.f32 %v1922, %v2034
    %2036 = vmatprep.mubr.bf16.mxu0 0
    %2037 = vmatmul.mubr.bf16.gmra.mxu0 %v113
    %v2038 = vpop.f32.mrf.mxu0
    %v2039 = vadd.f32 %v1926, %v2038
    %v2040 = vpop.f32.mrf.mxu0
    %v2041 = vadd.f32 %v1928, %v2040
    %v2042 = vpop.f32.mrf.mxu0
    %v2043 = vadd.f32 %v1930, %v2042
    %v2044 = vpop.f32.mrf.mxu0
    %v2045 = vadd.f32 %v1932, %v2044
    %2046 = vmatprep.mubr.bf16.mxu0 0
    %2047 = vmatmul.mubr.bf16.gmra.mxu0 %v118
    %v2048 = vpop.f32.mrf.mxu0
    %v2049 = vadd.f32 %v1936, %v2048
    %v2050 = vpop.f32.mrf.mxu0
    %v2051 = vadd.f32 %v1938, %v2050
    %v2052 = vpop.f32.mrf.mxu0
    %v2053 = vadd.f32 %v1940, %v2052
    %v2054 = vpop.f32.mrf.mxu0
    %v2055 = vadd.f32 %v1942, %v2054
    %2056 = vmatprep.mubr.bf16.mxu0 0
    %2057 = vmatmul.mubr.bf16.gmra.mxu0 %v123
    %v2058 = vpop.f32.mrf.mxu0
    %v2059 = vadd.f32 %v1946, %v2058
    %v2060 = vpop.f32.mrf.mxu0
    %v2061 = vadd.f32 %v1948, %v2060
    %v2062 = vpop.f32.mrf.mxu0
    %v2063 = vadd.f32 %v1950, %v2062
    %v2064 = vpop.f32.mrf.mxu0
    %v2065 = vadd.f32 %v1952, %v2064
    %2066 = vmatprep.mubr.bf16.mxu0 0
    %2067 = vmatmul.mubr.bf16.gmra.mxu0 %v128
    %v2068 = vpop.f32.mrf.mxu0
    %v2069 = vadd.f32 %v1956, %v2068
    %v2070 = vpop.f32.mrf.mxu0
    %v2071 = vadd.f32 %v1958, %v2070
    %v2072 = vpop.f32.mrf.mxu0
    %v2073 = vadd.f32 %v1960, %v2072
    %v2074 = vpop.f32.mrf.mxu0
    %v2075 = vadd.f32 %v1962, %v2074
    %2076 = vmatprep.mubr.bf16.mxu0 0
    %2077 = vmatmul.mubr.bf16.gmra.mxu0 %v133
    %v2078 = vpop.f32.mrf.mxu0
    %v2079 = vadd.f32 %v1966, %v2078
    %v2080 = vpop.f32.mrf.mxu0
    %v2081 = vadd.f32 %v1968, %v2080
    %v2082 = vpop.f32.mrf.mxu0
    %v2083 = vadd.f32 %v1970, %v2082
    %v2084 = vpop.f32.mrf.mxu0
    %v2085 = vadd.f32 %v1972, %v2084
    %2086 = vmatprep.mubr.bf16.mxu0 0
    %2087 = vmatmul.mubr.bf16.gmra.mxu0 %v138
    %v2088 = vpop.f32.mrf.mxu0
    %v2089 = vadd.f32 %v1976, %v2088
    %v2090 = vpop.f32.mrf.mxu0
    %v2091 = vadd.f32 %v1978, %v2090
    %v2092 = vpop.f32.mrf.mxu0
    %v2093 = vadd.f32 %v1980, %v2092
    %v2094 = vpop.f32.mrf.mxu0
    %v2095 = vadd.f32 %v1982, %v2094
    %2096 = vdwg.mxu0
    %2097 = vmatprep.subr.bf16.mxu0 0
    %2098 = vmatpush1.bf16.msra.mxu0 %v1058
    %2099 = vmatprep.subr.bf16.mxu0 0
    %2100 = vmatpush1.bf16.msra.mxu0 %v1053
    %2101 = vmatprep.subr.bf16.mxu0 0
    %2102 = vmatpush1.bf16.msra.mxu0 %v1048
    %2103 = vmatprep.subr.bf16.mxu0 0
    %2104 = vmatpush1.bf16.msra.mxu0 %v1043
    %2105 = vmatprep.subr.bf16.mxu0 0
    %2106 = vmatpush1.bf16.msra.mxu0 %v1038
    %2107 = vmatprep.subr.bf16.mxu0 0
    %2108 = vmatpush1.bf16.msra.mxu0 %v1033
    %2109 = vmatprep.subr.bf16.mxu0 0
    %2110 = vmatpush1.bf16.msra.mxu0 %v1028
    %2111 = vmatprep.subr.bf16.mxu0 0
    %2112 = vmatpush1.bf16.msra.mxu0 %v1023
    %2113 = vmatprep.subr.bf16.mxu0 0
    %2114 = vmatpush2.bf16.msra.mxu0 %v1098
    %2115 = vmatprep.subr.bf16.mxu0 0
    %2116 = vmatpush2.bf16.msra.mxu0 %v1093
    %2117 = vmatprep.subr.bf16.mxu0 0
    %2118 = vmatpush2.bf16.msra.mxu0 %v1088
    %2119 = vmatprep.subr.bf16.mxu0 0
    %2120 = vmatpush2.bf16.msra.mxu0 %v1083
    %2121 = vmatprep.subr.bf16.mxu0 0
    %2122 = vmatpush2.bf16.msra.mxu0 %v1078
    %2123 = vmatprep.subr.bf16.mxu0 0
    %2124 = vmatpush2.bf16.msra.mxu0 %v1073
    %2125 = vmatprep.subr.bf16.mxu0 0
    %2126 = vmatpush2.bf16.msra.mxu0 %v1068
    %2127 = vmatprep.subr.bf16.mxu0 0
    %2128 = vmatpush2.bf16.msra.mxu0 %v1063
    %2129 = vmatprep.mubr.bf16.mxu0 %v100
    %2130 = vmatmul.mubr.bf16.gmra.mxu0 %v99
    %v2131 = vpop.f32.mrf.mxu0
    %v2132 = vadd.f32 0.0, %v2131
    %v2133 = vpop.f32.mrf.mxu0
    %v2134 = vpop.f32.mrf.mxu0
    %v2135 = vadd.f32 0.0, %v2134
    %v2136 = vpop.f32.mrf.mxu0
    %2137 = vmatprep.mubr.bf16.mxu0 %v105
    %2138 = vmatmul.mubr.bf16.gmra.mxu0 %v104
    %v2139 = vpop.f32.mrf.mxu0
    %v2140 = vadd.f32 0.0, %v2139
    %v2141 = vpop.f32.mrf.mxu0
    %v2142 = vpop.f32.mrf.mxu0
    %v2143 = vadd.f32 0.0, %v2142
    %v2144 = vpop.f32.mrf.mxu0
    %2145 = vmatprep.mubr.bf16.mxu0 %v110
    %2146 = vmatmul.mubr.bf16.gmra.mxu0 %v109
    %v2147 = vpop.f32.mrf.mxu0
    %v2148 = vadd.f32 0.0, %v2147
    %v2149 = vpop.f32.mrf.mxu0
    %v2150 = vpop.f32.mrf.mxu0
    %v2151 = vadd.f32 0.0, %v2150
    %v2152 = vpop.f32.mrf.mxu0
    %2153 = vmatprep.mubr.bf16.mxu0 %v115
    %2154 = vmatmul.mubr.bf16.gmra.mxu0 %v114
    %v2155 = vpop.f32.mrf.mxu0
    %v2156 = vadd.f32 0.0, %v2155
    %v2157 = vpop.f32.mrf.mxu0
    %v2158 = vpop.f32.mrf.mxu0
    %v2159 = vadd.f32 0.0, %v2158
    %v2160 = vpop.f32.mrf.mxu0
    %2161 = vmatprep.mubr.bf16.mxu0 %v120
    %2162 = vmatmul.mubr.bf16.gmra.mxu0 %v119
    %v2163 = vpop.f32.mrf.mxu0
    %v2164 = vadd.f32 0.0, %v2163
    %v2165 = vpop.f32.mrf.mxu0
    %v2166 = vpop.f32.mrf.mxu0
    %v2167 = vadd.f32 0.0, %v2166
    %v2168 = vpop.f32.mrf.mxu0
    %2169 = vmatprep.mubr.bf16.mxu0 %v125
    %2170 = vmatmul.mubr.bf16.gmra.mxu0 %v124
    %v2171 = vpop.f32.mrf.mxu0
    %v2172 = vadd.f32 0.0, %v2171
    %v2173 = vpop.f32.mrf.mxu0
    %v2174 = vpop.f32.mrf.mxu0
    %v2175 = vadd.f32 0.0, %v2174
    %v2176 = vpop.f32.mrf.mxu0
    %2177 = vmatprep.mubr.bf16.mxu0 %v130
    %2178 = vmatmul.mubr.bf16.gmra.mxu0 %v129
    %v2179 = vpop.f32.mrf.mxu0
    %v2180 = vadd.f32 0.0, %v2179
    %v2181 = vpop.f32.mrf.mxu0
    %v2182 = vpop.f32.mrf.mxu0
    %v2183 = vadd.f32 0.0, %v2182
    %v2184 = vpop.f32.mrf.mxu0
    %2185 = vmatprep.mubr.bf16.mxu0 %v135
    %2186 = vmatmul.mubr.bf16.gmra.mxu0 %v134
    %v2187 = vpop.f32.mrf.mxu0
    %v2188 = vadd.f32 0.0, %v2187
    %v2189 = vpop.f32.mrf.mxu0
    %v2190 = vpop.f32.mrf.mxu0
    %v2191 = vadd.f32 0.0, %v2190
    %v2192 = vpop.f32.mrf.mxu0
    %2193 = vdwg.mxu0
    %2194 = vmatprep.subr.bf16.mxu0 0
    %2195 = vmatpush1.bf16.msra.mxu0 %v1138
    %2196 = vmatprep.subr.bf16.mxu0 0
    %2197 = vmatpush1.bf16.msra.mxu0 %v1133
    %2198 = vmatprep.subr.bf16.mxu0 0
    %2199 = vmatpush1.bf16.msra.mxu0 %v1128
    %2200 = vmatprep.subr.bf16.mxu0 0
    %2201 = vmatpush1.bf16.msra.mxu0 %v1123
    %2202 = vmatprep.subr.bf16.mxu0 0
    %2203 = vmatpush1.bf16.msra.mxu0 %v1118
    %2204 = vmatprep.subr.bf16.mxu0 0
    %2205 = vmatpush1.bf16.msra.mxu0 %v1113
    %2206 = vmatprep.subr.bf16.mxu0 0
    %2207 = vmatpush1.bf16.msra.mxu0 %v1108
    %2208 = vmatprep.subr.bf16.mxu0 0
    %2209 = vmatpush1.bf16.msra.mxu0 %v1103
    %2210 = vmatprep.subr.bf16.mxu0 0
    %2211 = vmatpush2.bf16.msra.mxu0 %v1178
    %2212 = vmatprep.subr.bf16.mxu0 0
    %2213 = vmatpush2.bf16.msra.mxu0 %v1173
    %2214 = vmatprep.subr.bf16.mxu0 0
    %2215 = vmatpush2.bf16.msra.mxu0 %v1168
    %2216 = vmatprep.subr.bf16.mxu0 0
    %2217 = vmatpush2.bf16.msra.mxu0 %v1163
    %2218 = vmatprep.subr.bf16.mxu0 0
    %2219 = vmatpush2.bf16.msra.mxu0 %v1158
    %2220 = vmatprep.subr.bf16.mxu0 0
    %2221 = vmatpush2.bf16.msra.mxu0 %v1153
    %2222 = vmatprep.subr.bf16.mxu0 0
    %2223 = vmatpush2.bf16.msra.mxu0 %v1148
    %2224 = vmatprep.subr.bf16.mxu0 0
    %2225 = vmatpush2.bf16.msra.mxu0 %v1143
    %2226 = vmatprep.mubr.bf16.mxu0 %v102
    %2227 = vmatmul.mubr.bf16.gmra.mxu0 %v101
    %v2228 = vpop.f32.mrf.mxu0
    %v2229 = vadd.f32 %v2132, %v2228
    %v2230 = vpop.f32.mrf.mxu0
    %v2231 = vpop.f32.mrf.mxu0
    %v2232 = vadd.f32 %v2135, %v2231
    %v2233 = vpop.f32.mrf.mxu0
    %2234 = vmatprep.mubr.bf16.mxu0 %v107
    %2235 = vmatmul.mubr.bf16.gmra.mxu0 %v106
    %v2236 = vpop.f32.mrf.mxu0
    %v2237 = vadd.f32 %v2140, %v2236
    %v2238 = vpop.f32.mrf.mxu0
    %v2239 = vpop.f32.mrf.mxu0
    %v2240 = vadd.f32 %v2143, %v2239
    %v2241 = vpop.f32.mrf.mxu0
    %2242 = vmatprep.mubr.bf16.mxu0 %v112
    %2243 = vmatmul.mubr.bf16.gmra.mxu0 %v111
    %v2244 = vpop.f32.mrf.mxu0
    %v2245 = vadd.f32 %v2148, %v2244
    %v2246 = vpop.f32.mrf.mxu0
    %v2247 = vpop.f32.mrf.mxu0
    %v2248 = vadd.f32 %v2151, %v2247
    %v2249 = vpop.f32.mrf.mxu0
    %2250 = vmatprep.mubr.bf16.mxu0 %v117
    %2251 = vmatmul.mubr.bf16.gmra.mxu0 %v116
    %v2252 = vpop.f32.mrf.mxu0
    %v2253 = vadd.f32 %v2156, %v2252
    %v2254 = vpop.f32.mrf.mxu0
    %v2255 = vpop.f32.mrf.mxu0
    %v2256 = vadd.f32 %v2159, %v2255
    %v2257 = vpop.f32.mrf.mxu0
    %2258 = vmatprep.mubr.bf16.mxu0 %v122
    %2259 = vmatmul.mubr.bf16.gmra.mxu0 %v121
    %v2260 = vpop.f32.mrf.mxu0
    %v2261 = vadd.f32 %v2164, %v2260
    %v2262 = vpop.f32.mrf.mxu0
    %v2263 = vpop.f32.mrf.mxu0
    %v2264 = vadd.f32 %v2167, %v2263
    %v2265 = vpop.f32.mrf.mxu0
    %2266 = vmatprep.mubr.bf16.mxu0 %v127
    %2267 = vmatmul.mubr.bf16.gmra.mxu0 %v126
    %v2268 = vpop.f32.mrf.mxu0
    %v2269 = vadd.f32 %v2172, %v2268
    %v2270 = vpop.f32.mrf.mxu0
    %v2271 = vpop.f32.mrf.mxu0
    %v2272 = vadd.f32 %v2175, %v2271
    %v2273 = vpop.f32.mrf.mxu0
    %2274 = vmatprep.mubr.bf16.mxu0 %v132
    %2275 = vmatmul.mubr.bf16.gmra.mxu0 %v131
    %v2276 = vpop.f32.mrf.mxu0
    %v2277 = vadd.f32 %v2180, %v2276
    %v2278 = vpop.f32.mrf.mxu0
    %v2279 = vpop.f32.mrf.mxu0
    %v2280 = vadd.f32 %v2183, %v2279
    %v2281 = vpop.f32.mrf.mxu0
    %2282 = vmatprep.mubr.bf16.mxu0 %v137
    %2283 = vmatmul.mubr.bf16.gmra.mxu0 %v136
    %v2284 = vpop.f32.mrf.mxu0
    %v2285 = vadd.f32 %v2188, %v2284
    %v2286 = vpop.f32.mrf.mxu0
    %v2287 = vpop.f32.mrf.mxu0
    %v2288 = vadd.f32 %v2191, %v2287
    %v2289 = vpop.f32.mrf.mxu0
    %2290 = vdwg.mxu0
    %2291 = vmatprep.subr.bf16.mxu0 0
    %2292 = vmatpush1.bf16.msra.mxu0 %v1218
    %2293 = vmatprep.subr.bf16.mxu0 0
    %2294 = vmatpush1.bf16.msra.mxu0 %v1213
    %2295 = vmatprep.subr.bf16.mxu0 0
    %2296 = vmatpush1.bf16.msra.mxu0 %v1208
    %2297 = vmatprep.subr.bf16.mxu0 0
    %2298 = vmatpush1.bf16.msra.mxu0 %v1203
    %2299 = vmatprep.subr.bf16.mxu0 0
    %2300 = vmatpush1.bf16.msra.mxu0 %v1198
    %2301 = vmatprep.subr.bf16.mxu0 0
    %2302 = vmatpush1.bf16.msra.mxu0 %v1193
    %2303 = vmatprep.subr.bf16.mxu0 0
    %2304 = vmatpush1.bf16.msra.mxu0 %v1188
    %2305 = vmatprep.subr.bf16.mxu0 0
    %2306 = vmatpush1.bf16.msra.mxu0 %v1183
    %2307 = vmatprep.subr.bf16.mxu0 0
    %2308 = vmatpush2.bf16.msra.mxu0 0
    %2309 = vmatprep.subr.bf16.mxu0 0
    %2310 = vmatpush2.bf16.msra.mxu0 0
    %2311 = vmatprep.subr.bf16.mxu0 0
    %2312 = vmatpush2.bf16.msra.mxu0 0
    %2313 = vmatprep.subr.bf16.mxu0 0
    %2314 = vmatpush2.bf16.msra.mxu0 0
    %2315 = vmatprep.subr.bf16.mxu0 0
    %2316 = vmatpush2.bf16.msra.mxu0 0
    %2317 = vmatprep.subr.bf16.mxu0 0
    %2318 = vmatpush2.bf16.msra.mxu0 0
    %2319 = vmatprep.subr.bf16.mxu0 0
    %2320 = vmatpush2.bf16.msra.mxu0 0
    %2321 = vmatprep.subr.bf16.mxu0 0
    %2322 = vmatpush2.bf16.msra.mxu0 0
    %2323 = vmatprep.mubr.bf16.mxu0 0
    %2324 = vmatmul.mubr.bf16.gmra.mxu0 %v103
    %v2325 = vpop.f32.mrf.mxu0
    %v2326 = vadd.f32 %v2229, %v2325
    %v2327 = vpop.f32.mrf.mxu0
    %v2328 = vpop.f32.mrf.mxu0
    %v2329 = vadd.f32 %v2232, %v2328
    %v2330 = vpop.f32.mrf.mxu0
    %2331 = vmatprep.mubr.bf16.mxu0 0
    %2332 = vmatmul.mubr.bf16.gmra.mxu0 %v108
    %v2333 = vpop.f32.mrf.mxu0
    %v2334 = vadd.f32 %v2237, %v2333
    %v2335 = vpop.f32.mrf.mxu0
    %v2336 = vpop.f32.mrf.mxu0
    %v2337 = vadd.f32 %v2240, %v2336
    %v2338 = vpop.f32.mrf.mxu0
    %2339 = vmatprep.mubr.bf16.mxu0 0
    %2340 = vmatmul.mubr.bf16.gmra.mxu0 %v113
    %v2341 = vpop.f32.mrf.mxu0
    %v2342 = vadd.f32 %v2245, %v2341
    %v2343 = vpop.f32.mrf.mxu0
    %v2344 = vpop.f32.mrf.mxu0
    %v2345 = vadd.f32 %v2248, %v2344
    %v2346 = vpop.f32.mrf.mxu0
    %2347 = vmatprep.mubr.bf16.mxu0 0
    %2348 = vmatmul.mubr.bf16.gmra.mxu0 %v118
    %v2349 = vpop.f32.mrf.mxu0
    %v2350 = vadd.f32 %v2253, %v2349
    %v2351 = vpop.f32.mrf.mxu0
    %v2352 = vpop.f32.mrf.mxu0
    %v2353 = vadd.f32 %v2256, %v2352
    %v2354 = vpop.f32.mrf.mxu0
    %2355 = vmatprep.mubr.bf16.mxu0 0
    %2356 = vmatmul.mubr.bf16.gmra.mxu0 %v123
    %v2357 = vpop.f32.mrf.mxu0
    %v2358 = vadd.f32 %v2261, %v2357
    %v2359 = vpop.f32.mrf.mxu0
    %v2360 = vpop.f32.mrf.mxu0
    %v2361 = vadd.f32 %v2264, %v2360
    %v2362 = vpop.f32.mrf.mxu0
    %2363 = vmatprep.mubr.bf16.mxu0 0
    %2364 = vmatmul.mubr.bf16.gmra.mxu0 %v128
    %v2365 = vpop.f32.mrf.mxu0
    %v2366 = vadd.f32 %v2269, %v2365
    %v2367 = vpop.f32.mrf.mxu0
    %v2368 = vpop.f32.mrf.mxu0
    %v2369 = vadd.f32 %v2272, %v2368
    %v2370 = vpop.f32.mrf.mxu0
    %2371 = vmatprep.mubr.bf16.mxu0 0
    %2372 = vmatmul.mubr.bf16.gmra.mxu0 %v133
    %v2373 = vpop.f32.mrf.mxu0
    %v2374 = vadd.f32 %v2277, %v2373
    %v2375 = vpop.f32.mrf.mxu0
    %v2376 = vpop.f32.mrf.mxu0
    %v2377 = vadd.f32 %v2280, %v2376
    %v2378 = vpop.f32.mrf.mxu0
    %2379 = vmatprep.mubr.bf16.mxu0 0
    %2380 = vmatmul.mubr.bf16.gmra.mxu0 %v138
    %v2381 = vpop.f32.mrf.mxu0
    %v2382 = vadd.f32 %v2285, %v2381
    %v2383 = vpop.f32.mrf.mxu0
    %v2384 = vpop.f32.mrf.mxu0
    %v2385 = vadd.f32 %v2288, %v2384
    %v2386 = vpop.f32.mrf.mxu0
    %2387 = vdwg.mxu0
    %v2388 = vpack.c.bf16 %v1684, %v1680
    %v2389 = vpack.c.bf16 %v1694, %v1690
    %v2390 = vpack.c.bf16 %v1704, %v1700
    %v2391 = vpack.c.bf16 %v1714, %v1710
    %v2392 = vpack.c.bf16 %v1724, %v1720
    %v2393 = vpack.c.bf16 %v1734, %v1730
    %v2394 = vpack.c.bf16 %v1744, %v1740
    %v2395 = vpack.c.bf16 %v1754, %v1750
    %v2396 = vld [vmem:[%s2] sm:$0xf]
    %v2397 = vld [vmem:[%s2 + $0x4] sm:$0xf]
    %v2398 = vld [vmem:[%s2 + $0x8] sm:$0xf]
    %v2399 = vld [vmem:[%s2 + $0xc] sm:$0xf]
    %v2400 = vld [vmem:[%s2 + $0x10] sm:$0xf]
    %v2401 = vld [vmem:[%s2 + $0x14] sm:$0xf]
    %v2402 = vld [vmem:[%s2 + $0x18] sm:$0xf]
    %v2403 = vld [vmem:[%s2 + $0x1c] sm:$0xf]
    %v2404 = vld [vmem:[%s2 + $0x20] sm:$0xf]
    %v2405 = vld [vmem:[%s2 + $0x24] sm:$0xf]
    %v2406 = vld [vmem:[%s2 + $0x28] sm:$0xf]
    %v2407 = vld [vmem:[%s2 + $0x2c] sm:$0xf]
    %v2408 = vld [vmem:[%s2 + $0x30] sm:$0xf]
    %v2409 = vld [vmem:[%s2 + $0x34] sm:$0xf]
    %v2410 = vld [vmem:[%s2 + $0x38] sm:$0xf]
    %v2411 = vld [vmem:[%s2 + $0x3c] sm:$0xf]
    %v2428 = vunpack.c.l.b16 %v2396
    %v2429 = vunpack.c.l.b16 %v2397
    %v2430 = vunpack.c.l.b16 %v2398
    %v2431 = vunpack.c.l.b16 %v2399
    %v2432 = vunpack.c.l.b16 %v2400
    %v2433 = vunpack.c.l.b16 %v2401
    %v2434 = vunpack.c.l.b16 %v2402
    %v2435 = vunpack.c.l.b16 %v2403
    %v2436 = vunpack.c.l.b16 %v2404
    %v2437 = vunpack.c.l.b16 %v2405
    %v2438 = vunpack.c.l.b16 %v2406
    %v2439 = vunpack.c.l.b16 %v2407
    %v2440 = vunpack.c.l.b16 %v2408
    %v2441 = vunpack.c.l.b16 %v2409
    %v2442 = vunpack.c.l.b16 %v2410
    %v2443 = vunpack.c.l.b16 %v2411
    %v2444 = vpack.c.b16 %v2429, %v2428
    %v2445 = vpack.c.b16 %v2431, %v2430
    %v2446 = vpack.c.b16 %v2433, %v2432
    %v2447 = vpack.c.b16 %v2435, %v2434
    %v2448 = vpack.c.b16 %v2437, %v2436
    %v2449 = vpack.c.b16 %v2439, %v2438
    %v2450 = vpack.c.b16 %v2441, %v2440
    %v2451 = vpack.c.b16 %v2443, %v2442
    %2460 = vmatprep.subr.bf16.mxu0 0
    %2461 = vmatpush1.bf16.msra.mxu0 %v2451
    %2462 = vmatprep.subr.bf16.mxu0 0
    %2463 = vmatpush1.bf16.msra.mxu0 %v2450
    %2464 = vmatprep.subr.bf16.mxu0 0
    %2465 = vmatpush1.bf16.msra.mxu0 %v2449
    %2466 = vmatprep.subr.bf16.mxu0 0
    %2467 = vmatpush1.bf16.msra.mxu0 %v2448
    %2468 = vmatprep.subr.bf16.mxu0 0
    %2469 = vmatpush1.bf16.msra.mxu0 %v2447
    %2470 = vmatprep.subr.bf16.mxu0 0
    %2471 = vmatpush1.bf16.msra.mxu0 %v2446
    %2472 = vmatprep.subr.bf16.mxu0 0
    %2473 = vmatpush1.bf16.msra.mxu0 %v2445
    %2474 = vmatprep.subr.bf16.mxu0 0
    %2475 = vmatpush1.bf16.msra.mxu0 %v2444
    %2476 = vmatprep.subr.bf16.mxu0 0
    %2477 = vmatpush2.bf16.msra.mxu0 0
    %2478 = vmatprep.subr.bf16.mxu0 0
    %2479 = vmatpush2.bf16.msra.mxu0 0
    %2480 = vmatprep.subr.bf16.mxu0 0
    %2481 = vmatpush2.bf16.msra.mxu0 0
    %2482 = vmatprep.subr.bf16.mxu0 0
    %2483 = vmatpush2.bf16.msra.mxu0 0
    %2484 = vmatprep.subr.bf16.mxu0 0
    %2485 = vmatpush2.bf16.msra.mxu0 0
    %2486 = vmatprep.subr.bf16.mxu0 0
    %2487 = vmatpush2.bf16.msra.mxu0 0
    %2488 = vmatprep.subr.bf16.mxu0 0
    %2489 = vmatpush2.bf16.msra.mxu0 0
    %2490 = vmatprep.subr.bf16.mxu0 0
    %2491 = vmatpush2.bf16.msra.mxu0 0
    %2492 = vmatprep.mubr.bf16.mxu0 0
    %2493 = vmatmul.mubr.bf16.gmra.mxu0 %v2388
    %v2494 = vpop.f32.mrf.mxu0
    %v2495 = vadd.f32 0.0, %v2494
    %v2496 = vpop.f32.mrf.mxu0
    %v2497 = vpop.f32.mrf.mxu0
    %v2498 = vadd.f32 0.0, %v2497
    %v2499 = vpop.f32.mrf.mxu0
    %2500 = vmatprep.mubr.bf16.mxu0 0
    %2501 = vmatmul.mubr.bf16.gmra.mxu0 %v2389
    %v2502 = vpop.f32.mrf.mxu0
    %v2503 = vadd.f32 0.0, %v2502
    %v2504 = vpop.f32.mrf.mxu0
    %v2505 = vpop.f32.mrf.mxu0
    %v2506 = vadd.f32 0.0, %v2505
    %v2507 = vpop.f32.mrf.mxu0
    %2508 = vmatprep.mubr.bf16.mxu0 0
    %2509 = vmatmul.mubr.bf16.gmra.mxu0 %v2390
    %v2510 = vpop.f32.mrf.mxu0
    %v2511 = vadd.f32 0.0, %v2510
    %v2512 = vpop.f32.mrf.mxu0
    %v2513 = vpop.f32.mrf.mxu0
    %v2514 = vadd.f32 0.0, %v2513
    %v2515 = vpop.f32.mrf.mxu0
    %2516 = vmatprep.mubr.bf16.mxu0 0
    %2517 = vmatmul.mubr.bf16.gmra.mxu0 %v2391
    %v2518 = vpop.f32.mrf.mxu0
    %v2519 = vadd.f32 0.0, %v2518
    %v2520 = vpop.f32.mrf.mxu0
    %v2521 = vpop.f32.mrf.mxu0
    %v2522 = vadd.f32 0.0, %v2521
    %v2523 = vpop.f32.mrf.mxu0
    %2524 = vmatprep.mubr.bf16.mxu0 0
    %2525 = vmatmul.mubr.bf16.gmra.mxu0 %v2392
    %v2526 = vpop.f32.mrf.mxu0
    %v2527 = vadd.f32 0.0, %v2526
    %v2528 = vpop.f32.mrf.mxu0
    %v2529 = vpop.f32.mrf.mxu0
    %v2530 = vadd.f32 0.0, %v2529
    %v2531 = vpop.f32.mrf.mxu0
    %2532 = vmatprep.mubr.bf16.mxu0 0
    %2533 = vmatmul.mubr.bf16.gmra.mxu0 %v2393
    %v2534 = vpop.f32.mrf.mxu0
    %v2535 = vadd.f32 0.0, %v2534
    %v2536 = vpop.f32.mrf.mxu0
    %v2537 = vpop.f32.mrf.mxu0
    %v2538 = vadd.f32 0.0, %v2537
    %v2539 = vpop.f32.mrf.mxu0
    %2540 = vmatprep.mubr.bf16.mxu0 0
    %2541 = vmatmul.mubr.bf16.gmra.mxu0 %v2394
    %v2542 = vpop.f32.mrf.mxu0
    %v2543 = vadd.f32 0.0, %v2542
    %v2544 = vpop.f32.mrf.mxu0
    %v2545 = vpop.f32.mrf.mxu0
    %v2546 = vadd.f32 0.0, %v2545
    %v2547 = vpop.f32.mrf.mxu0
    %2548 = vmatprep.mubr.bf16.mxu0 0
    %2549 = vmatmul.mubr.bf16.gmra.mxu0 %v2395
    %v2550 = vpop.f32.mrf.mxu0
    %v2551 = vadd.f32 0.0, %v2550
    %v2552 = vpop.f32.mrf.mxu0
    %v2553 = vpop.f32.mrf.mxu0
    %v2554 = vadd.f32 0.0, %v2553
    %v2555 = vpop.f32.mrf.mxu0
    %2556 = vdwg.mxu0
    %vm2557 = vcmask 523264
    %v2558 = vsel %vm2557, %v2495, -inf
    %v2559 = vrot.slane %v2558, 4
    %v2560 = vmax.f32 %v2558, %v2559
    %v2561 = vrot.slane %v2560, 2
    %v2562 = vmax.f32 %v2560, %v2561
    %v2563 = vrot.slane %v2562, 1
    %v2564 = vmax.f32 %v2562, %v2563
    %v2565 = vsel %vm2557, %v2498, -inf
    %v2566 = vrot.slane %v2565, 4
    %v2567 = vmax.f32 %v2565, %v2566
    %v2568 = vrot.slane %v2567, 2
    %v2569 = vmax.f32 %v2567, %v2568
    %v2570 = vrot.slane %v2569, 1
    %v2571 = vmax.f32 %v2569, %v2570
    %v2572 = vsel %vm2557, %v2503, -inf
    %v2573 = vrot.slane %v2572, 4
    %v2574 = vmax.f32 %v2572, %v2573
    %v2575 = vrot.slane %v2574, 2
    %v2576 = vmax.f32 %v2574, %v2575
    %v2577 = vrot.slane %v2576, 1
    %v2578 = vmax.f32 %v2576, %v2577
    %v2579 = vsel %vm2557, %v2506, -inf
    %v2580 = vrot.slane %v2579, 4
    %v2581 = vmax.f32 %v2579, %v2580
    %v2582 = vrot.slane %v2581, 2
    %v2583 = vmax.f32 %v2581, %v2582
    %v2584 = vrot.slane %v2583, 1
    %v2585 = vmax.f32 %v2583, %v2584
    %v2586 = vsel %vm2557, %v2511, -inf
    %v2587 = vrot.slane %v2586, 4
    %v2588 = vmax.f32 %v2586, %v2587
    %v2589 = vrot.slane %v2588, 2
    %v2590 = vmax.f32 %v2588, %v2589
    %v2591 = vrot.slane %v2590, 1
    %v2592 = vmax.f32 %v2590, %v2591
    %v2593 = vsel %vm2557, %v2514, -inf
    %v2594 = vrot.slane %v2593, 4
    %v2595 = vmax.f32 %v2593, %v2594
    %v2596 = vrot.slane %v2595, 2
    %v2597 = vmax.f32 %v2595, %v2596
    %v2598 = vrot.slane %v2597, 1
    %v2599 = vmax.f32 %v2597, %v2598
    %v2600 = vsel %vm2557, %v2519, -inf
    %v2601 = vrot.slane %v2600, 4
    %v2602 = vmax.f32 %v2600, %v2601
    %v2603 = vrot.slane %v2602, 2
    %v2604 = vmax.f32 %v2602, %v2603
    %v2605 = vrot.slane %v2604, 1
    %v2606 = vmax.f32 %v2604, %v2605
    %v2607 = vsel %vm2557, %v2522, -inf
    %v2608 = vrot.slane %v2607, 4
    %v2609 = vmax.f32 %v2607, %v2608
    %v2610 = vrot.slane %v2609, 2
    %v2611 = vmax.f32 %v2609, %v2610
    %v2612 = vrot.slane %v2611, 1
    %v2613 = vmax.f32 %v2611, %v2612
    %v2614 = vsel %vm2557, %v2527, -inf
    %v2615 = vrot.slane %v2614, 4
    %v2616 = vmax.f32 %v2614, %v2615
    %v2617 = vrot.slane %v2616, 2
    %v2618 = vmax.f32 %v2616, %v2617
    %v2619 = vrot.slane %v2618, 1
    %v2620 = vmax.f32 %v2618, %v2619
    %v2621 = vsel %vm2557, %v2530, -inf
    %v2622 = vrot.slane %v2621, 4
    %v2623 = vmax.f32 %v2621, %v2622
    %v2624 = vrot.slane %v2623, 2
    %v2625 = vmax.f32 %v2623, %v2624
    %v2626 = vrot.slane %v2625, 1
    %v2627 = vmax.f32 %v2625, %v2626
    %v2628 = vsel %vm2557, %v2535, -inf
    %v2629 = vrot.slane %v2628, 4
    %v2630 = vmax.f32 %v2628, %v2629
    %v2631 = vrot.slane %v2630, 2
    %v2632 = vmax.f32 %v2630, %v2631
    %v2633 = vrot.slane %v2632, 1
    %v2634 = vmax.f32 %v2632, %v2633
    %v2635 = vsel %vm2557, %v2538, -inf
    %v2636 = vrot.slane %v2635, 4
    %v2637 = vmax.f32 %v2635, %v2636
    %v2638 = vrot.slane %v2637, 2
    %v2639 = vmax.f32 %v2637, %v2638
    %v2640 = vrot.slane %v2639, 1
    %v2641 = vmax.f32 %v2639, %v2640
    %v2642 = vsel %vm2557, %v2543, -inf
    %v2643 = vrot.slane %v2642, 4
    %v2644 = vmax.f32 %v2642, %v2643
    %v2645 = vrot.slane %v2644, 2
    %v2646 = vmax.f32 %v2644, %v2645
    %v2647 = vrot.slane %v2646, 1
    %v2648 = vmax.f32 %v2646, %v2647
    %v2649 = vsel %vm2557, %v2546, -inf
    %v2650 = vrot.slane %v2649, 4
    %v2651 = vmax.f32 %v2649, %v2650
    %v2652 = vrot.slane %v2651, 2
    %v2653 = vmax.f32 %v2651, %v2652
    %v2654 = vrot.slane %v2653, 1
    %v2655 = vmax.f32 %v2653, %v2654
    %v2656 = vsel %vm2557, %v2551, -inf
    %v2657 = vrot.slane %v2656, 4
    %v2658 = vmax.f32 %v2656, %v2657
    %v2659 = vrot.slane %v2658, 2
    %v2660 = vmax.f32 %v2658, %v2659
    %v2661 = vrot.slane %v2660, 1
    %v2662 = vmax.f32 %v2660, %v2661
    %v2663 = vsel %vm2557, %v2554, -inf
    %v2664 = vrot.slane %v2663, 4
    %v2665 = vmax.f32 %v2663, %v2664
    %v2666 = vrot.slane %v2665, 2
    %v2667 = vmax.f32 %v2665, %v2666
    %v2668 = vrot.slane %v2667, 1
    %v2669 = vmax.f32 %v2667, %v2668
    %v2670 = vsub.f32 %v2495, %v2564
    %v2671 = vsub.f32 %v2498, %v2571
    %v2672 = vsub.f32 %v2503, %v2578
    %v2673 = vsub.f32 %v2506, %v2585
    %v2674 = vsub.f32 %v2511, %v2592
    %v2675 = vsub.f32 %v2514, %v2599
    %v2676 = vsub.f32 %v2519, %v2606
    %v2677 = vsub.f32 %v2522, %v2613
    %v2678 = vsub.f32 %v2527, %v2620
    %v2679 = vsub.f32 %v2530, %v2627
    %v2680 = vsub.f32 %v2535, %v2634
    %v2681 = vsub.f32 %v2538, %v2641
    %v2682 = vsub.f32 %v2543, %v2648
    %v2683 = vsub.f32 %v2546, %v2655
    %v2684 = vsub.f32 %v2551, %v2662
    %v2685 = vsub.f32 %v2554, %v2669
    %v2686 = vmul.f32 %v2670, 1.442695
    %v2687 = vpow.pop %v2686
    %v2688 = vmul.f32 %v2671, 1.442695
    %v2689 = vpow.pop %v2688
    %v2690 = vmul.f32 %v2672, 1.442695
    %v2691 = vpow.pop %v2690
    %v2692 = vmul.f32 %v2673, 1.442695
    %v2693 = vpow.pop %v2692
    %v2694 = vmul.f32 %v2674, 1.442695
    %v2695 = vpow.pop %v2694
    %v2696 = vmul.f32 %v2675, 1.442695
    %v2697 = vpow.pop %v2696
    %v2698 = vmul.f32 %v2676, 1.442695
    %v2699 = vpow.pop %v2698
    %v2700 = vmul.f32 %v2677, 1.442695
    %v2701 = vpow.pop %v2700
    %v2702 = vmul.f32 %v2678, 1.442695
    %v2703 = vpow.pop %v2702
    %v2704 = vmul.f32 %v2679, 1.442695
    %v2705 = vpow.pop %v2704
    %v2706 = vmul.f32 %v2680, 1.442695
    %v2707 = vpow.pop %v2706
    %v2708 = vmul.f32 %v2681, 1.442695
    %v2709 = vpow.pop %v2708
    %v2710 = vmul.f32 %v2682, 1.442695
    %v2711 = vpow.pop %v2710
    %v2712 = vmul.f32 %v2683, 1.442695
    %v2713 = vpow.pop %v2712
    %v2714 = vmul.f32 %v2684, 1.442695
    %v2715 = vpow.pop %v2714
    %v2716 = vmul.f32 %v2685, 1.442695
    %v2717 = vpow.pop %v2716
    %v2718 = vsel %vm2557, %v2687, 0.0
    %v2719 = vrot.slane %v2718, 4
    %v2720 = vadd.f32 %v2718, %v2719
    %v2721 = vrot.slane %v2720, 2
    %v2722 = vadd.f32 %v2720, %v2721
    %v2723 = vrot.slane %v2722, 1
    %v2724 = vadd.f32 %v2722, %v2723
    %v2725 = vsel %vm2557, %v2689, 0.0
    %v2726 = vrot.slane %v2725, 4
    %v2727 = vadd.f32 %v2725, %v2726
    %v2728 = vrot.slane %v2727, 2
    %v2729 = vadd.f32 %v2727, %v2728
    %v2730 = vrot.slane %v2729, 1
    %v2731 = vadd.f32 %v2729, %v2730
    %v2732 = vsel %vm2557, %v2691, 0.0
    %v2733 = vrot.slane %v2732, 4
    %v2734 = vadd.f32 %v2732, %v2733
    %v2735 = vrot.slane %v2734, 2
    %v2736 = vadd.f32 %v2734, %v2735
    %v2737 = vrot.slane %v2736, 1
    %v2738 = vadd.f32 %v2736, %v2737
    %v2739 = vsel %vm2557, %v2693, 0.0
    %v2740 = vrot.slane %v2739, 4
    %v2741 = vadd.f32 %v2739, %v2740
    %v2742 = vrot.slane %v2741, 2
    %v2743 = vadd.f32 %v2741, %v2742
    %v2744 = vrot.slane %v2743, 1
    %v2745 = vadd.f32 %v2743, %v2744
    %v2746 = vsel %vm2557, %v2695, 0.0
    %v2747 = vrot.slane %v2746, 4
    %v2748 = vadd.f32 %v2746, %v2747
    %v2749 = vrot.slane %v2748, 2
    %v2750 = vadd.f32 %v2748, %v2749
    %v2751 = vrot.slane %v2750, 1
    %v2752 = vadd.f32 %v2750, %v2751
    %v2753 = vsel %vm2557, %v2697, 0.0
    %v2754 = vrot.slane %v2753, 4
    %v2755 = vadd.f32 %v2753, %v2754
    %v2756 = vrot.slane %v2755, 2
    %v2757 = vadd.f32 %v2755, %v2756
    %v2758 = vrot.slane %v2757, 1
    %v2759 = vadd.f32 %v2757, %v2758
    %v2760 = vsel %vm2557, %v2699, 0.0
    %v2761 = vrot.slane %v2760, 4
    %v2762 = vadd.f32 %v2760, %v2761
    %v2763 = vrot.slane %v2762, 2
    %v2764 = vadd.f32 %v2762, %v2763
    %v2765 = vrot.slane %v2764, 1
    %v2766 = vadd.f32 %v2764, %v2765
    %v2767 = vsel %vm2557, %v2701, 0.0
    %v2768 = vrot.slane %v2767, 4
    %v2769 = vadd.f32 %v2767, %v2768
    %v2770 = vrot.slane %v2769, 2
    %v2771 = vadd.f32 %v2769, %v2770
    %v2772 = vrot.slane %v2771, 1
    %v2773 = vadd.f32 %v2771, %v2772
    %v2774 = vsel %vm2557, %v2703, 0.0
    %v2775 = vrot.slane %v2774, 4
    %v2776 = vadd.f32 %v2774, %v2775
    %v2777 = vrot.slane %v2776, 2
    %v2778 = vadd.f32 %v2776, %v2777
    %v2779 = vrot.slane %v2778, 1
    %v2780 = vadd.f32 %v2778, %v2779
    %v2781 = vsel %vm2557, %v2705, 0.0
    %v2782 = vrot.slane %v2781, 4
    %v2783 = vadd.f32 %v2781, %v2782
    %v2784 = vrot.slane %v2783, 2
    %v2785 = vadd.f32 %v2783, %v2784
    %v2786 = vrot.slane %v2785, 1
    %v2787 = vadd.f32 %v2785, %v2786
    %v2788 = vsel %vm2557, %v2707, 0.0
    %v2789 = vrot.slane %v2788, 4
    %v2790 = vadd.f32 %v2788, %v2789
    %v2791 = vrot.slane %v2790, 2
    %v2792 = vadd.f32 %v2790, %v2791
    %v2793 = vrot.slane %v2792, 1
    %v2794 = vadd.f32 %v2792, %v2793
    %v2795 = vsel %vm2557, %v2709, 0.0
    %v2796 = vrot.slane %v2795, 4
    %v2797 = vadd.f32 %v2795, %v2796
    %v2798 = vrot.slane %v2797, 2
    %v2799 = vadd.f32 %v2797, %v2798
    %v2800 = vrot.slane %v2799, 1
    %v2801 = vadd.f32 %v2799, %v2800
    %v2802 = vsel %vm2557, %v2711, 0.0
    %v2803 = vrot.slane %v2802, 4
    %v2804 = vadd.f32 %v2802, %v2803
    %v2805 = vrot.slane %v2804, 2
    %v2806 = vadd.f32 %v2804, %v2805
    %v2807 = vrot.slane %v2806, 1
    %v2808 = vadd.f32 %v2806, %v2807
    %v2809 = vsel %vm2557, %v2713, 0.0
    %v2810 = vrot.slane %v2809, 4
    %v2811 = vadd.f32 %v2809, %v2810
    %v2812 = vrot.slane %v2811, 2
    %v2813 = vadd.f32 %v2811, %v2812
    %v2814 = vrot.slane %v2813, 1
    %v2815 = vadd.f32 %v2813, %v2814
    %v2816 = vsel %vm2557, %v2715, 0.0
    %v2817 = vrot.slane %v2816, 4
    %v2818 = vadd.f32 %v2816, %v2817
    %v2819 = vrot.slane %v2818, 2
    %v2820 = vadd.f32 %v2818, %v2819
    %v2821 = vrot.slane %v2820, 1
    %v2822 = vadd.f32 %v2820, %v2821
    %v2823 = vsel %vm2557, %v2717, 0.0
    %v2824 = vrot.slane %v2823, 4
    %v2825 = vadd.f32 %v2823, %v2824
    %v2826 = vrot.slane %v2825, 2
    %v2827 = vadd.f32 %v2825, %v2826
    %v2828 = vrot.slane %v2827, 1
    %v2829 = vadd.f32 %v2827, %v2828
    %v2830 = vrcp.pop %v2724
    %v2831 = vrcp.pop %v2731
    %v2832 = vrcp.pop %v2738
    %v2833 = vrcp.pop %v2745
    %v2834 = vrcp.pop %v2752
    %v2835 = vrcp.pop %v2759
    %v2836 = vrcp.pop %v2766
    %v2837 = vrcp.pop %v2773
    %v2838 = vrcp.pop %v2780
    %v2839 = vrcp.pop %v2787
    %v2840 = vrcp.pop %v2794
    %v2841 = vrcp.pop %v2801
    %v2842 = vrcp.pop %v2808
    %v2843 = vrcp.pop %v2815
    %v2844 = vrcp.pop %v2822
    %v2845 = vrcp.pop %v2829
    %v2846 = vmul.f32 %v2687, %v2830
    %v2847 = vmul.f32 %v2689, %v2831
    %v2848 = vmul.f32 %v2691, %v2832
    %v2849 = vmul.f32 %v2693, %v2833
    %v2850 = vmul.f32 %v2695, %v2834
    %v2851 = vmul.f32 %v2697, %v2835
    %v2852 = vmul.f32 %v2699, %v2836
    %v2853 = vmul.f32 %v2701, %v2837
    %v2854 = vmul.f32 %v2703, %v2838
    %v2855 = vmul.f32 %v2705, %v2839
    %v2856 = vmul.f32 %v2707, %v2840
    %v2857 = vmul.f32 %v2709, %v2841
    %v2858 = vmul.f32 %v2711, %v2842
    %v2859 = vmul.f32 %v2713, %v2843
    %v2860 = vmul.f32 %v2715, %v2844
    %v2861 = vmul.f32 %v2717, %v2845
    %2862 = vxpose.xlu0.b32.start [1/16] %v2846, 128
    %2863 = vxpose.xlu0.b32.cont [2/16] 0.0, 128
    %2864 = vxpose.xlu0.b32.cont [3/16] 0.0, 128
    %2865 = vxpose.xlu0.b32.cont [4/16] 0.0, 128
    %2866 = vxpose.xlu0.b32.cont [5/16] 0.0, 128
    %2867 = vxpose.xlu0.b32.cont [6/16] 0.0, 128
    %2868 = vxpose.xlu0.b32.cont [7/16] 0.0, 128
    %2869 = vxpose.xlu0.b32.cont [8/16] 0.0, 128
    %2870 = vxpose.xlu0.b32.cont [9/16] 0.0, 128
    %2871 = vxpose.xlu0.b32.cont [10/16] 0.0, 128
    %2872 = vxpose.xlu0.b32.cont [11/16] 0.0, 128
    %2873 = vxpose.xlu0.b32.cont [12/16] 0.0, 128
    %2874 = vxpose.xlu0.b32.cont [13/16] 0.0, 128
    %2875 = vxpose.xlu0.b32.cont [14/16] 0.0, 128
    %2876 = vxpose.xlu0.b32.cont [15/16] 0.0, 128
    %2877 = vxpose.xlu0.b32.end [16/16] 0.0, 128
    %v2878 = vpop.trf.xlu0
    %v2879 = vpop.trf.xlu0
    %v2880 = vpop.trf.xlu0
    %v2881 = vpop.trf.xlu0
    %v2882 = vpop.trf.xlu0
    %v2883 = vpop.trf.xlu0
    %v2884 = vpop.trf.xlu0
    %v2885 = vpop.trf.xlu0
    %v2886 = vpop.trf.xlu0
    %v2887 = vpop.trf.xlu0
    %v2888 = vpop.trf.xlu0
    %v2889 = vpop.trf.xlu0
    %v2890 = vpop.trf.xlu0
    %v2891 = vpop.trf.xlu0
    %v2892 = vpop.trf.xlu0
    %v2893 = vpop.trf.xlu0
    %2894 = vxpose.xlu0.b32.start [1/16] %v2847, 128
    %2895 = vxpose.xlu0.b32.cont [2/16] 0.0, 128
    %2896 = vxpose.xlu0.b32.cont [3/16] 0.0, 128
    %2897 = vxpose.xlu0.b32.cont [4/16] 0.0, 128
    %2898 = vxpose.xlu0.b32.cont [5/16] 0.0, 128
    %2899 = vxpose.xlu0.b32.cont [6/16] 0.0, 128
    %2900 = vxpose.xlu0.b32.cont [7/16] 0.0, 128
    %2901 = vxpose.xlu0.b32.cont [8/16] 0.0, 128
    %2902 = vxpose.xlu0.b32.cont [9/16] 0.0, 128
    %2903 = vxpose.xlu0.b32.cont [10/16] 0.0, 128
    %2904 = vxpose.xlu0.b32.cont [11/16] 0.0, 128
    %2905 = vxpose.xlu0.b32.cont [12/16] 0.0, 128
    %2906 = vxpose.xlu0.b32.cont [13/16] 0.0, 128
    %2907 = vxpose.xlu0.b32.cont [14/16] 0.0, 128
    %2908 = vxpose.xlu0.b32.cont [15/16] 0.0, 128
    %2909 = vxpose.xlu0.b32.end [16/16] 0.0, 128
    %v2910 = vpop.trf.xlu0
    %v2911 = vpop.trf.xlu0
    %v2912 = vpop.trf.xlu0
    %v2913 = vpop.trf.xlu0
    %v2914 = vpop.trf.xlu0
    %v2915 = vpop.trf.xlu0
    %v2916 = vpop.trf.xlu0
    %v2917 = vpop.trf.xlu0
    %v2918 = vpop.trf.xlu0
    %v2919 = vpop.trf.xlu0
    %v2920 = vpop.trf.xlu0
    %v2921 = vpop.trf.xlu0
    %v2922 = vpop.trf.xlu0
    %v2923 = vpop.trf.xlu0
    %v2924 = vpop.trf.xlu0
    %v2925 = vpop.trf.xlu0
    %2926 = vxpose.xlu0.b32.start [1/16] %v2848, 128
    %2927 = vxpose.xlu0.b32.cont [2/16] 0.0, 128
    %2928 = vxpose.xlu0.b32.cont [3/16] 0.0, 128
    %2929 = vxpose.xlu0.b32.cont [4/16] 0.0, 128
    %2930 = vxpose.xlu0.b32.cont [5/16] 0.0, 128
    %2931 = vxpose.xlu0.b32.cont [6/16] 0.0, 128
    %2932 = vxpose.xlu0.b32.cont [7/16] 0.0, 128
    %2933 = vxpose.xlu0.b32.cont [8/16] 0.0, 128
    %2934 = vxpose.xlu0.b32.cont [9/16] 0.0, 128
    %2935 = vxpose.xlu0.b32.cont [10/16] 0.0, 128
    %2936 = vxpose.xlu0.b32.cont [11/16] 0.0, 128
    %2937 = vxpose.xlu0.b32.cont [12/16] 0.0, 128
    %2938 = vxpose.xlu0.b32.cont [13/16] 0.0, 128
    %2939 = vxpose.xlu0.b32.cont [14/16] 0.0, 128
    %2940 = vxpose.xlu0.b32.cont [15/16] 0.0, 128
    %2941 = vxpose.xlu0.b32.end [16/16] 0.0, 128
    %v2942 = vpop.trf.xlu0
    %v2943 = vpop.trf.xlu0
    %v2944 = vpop.trf.xlu0
    %v2945 = vpop.trf.xlu0
    %v2946 = vpop.trf.xlu0
    %v2947 = vpop.trf.xlu0
    %v2948 = vpop.trf.xlu0
    %v2949 = vpop.trf.xlu0
    %v2950 = vpop.trf.xlu0
    %v2951 = vpop.trf.xlu0
    %v2952 = vpop.trf.xlu0
    %v2953 = vpop.trf.xlu0
    %v2954 = vpop.trf.xlu0
    %v2955 = vpop.trf.xlu0
    %v2956 = vpop.trf.xlu0
    %v2957 = vpop.trf.xlu0
    %2958 = vxpose.xlu0.b32.start [1/16] %v2849, 128
    %2959 = vxpose.xlu0.b32.cont [2/16] 0.0, 128
    %2960 = vxpose.xlu0.b32.cont [3/16] 0.0, 128
    %2961 = vxpose.xlu0.b32.cont [4/16] 0.0, 128
    %2962 = vxpose.xlu0.b32.cont [5/16] 0.0, 128
    %2963 = vxpose.xlu0.b32.cont [6/16] 0.0, 128
    %2964 = vxpose.xlu0.b32.cont [7/16] 0.0, 128
    %2965 = vxpose.xlu0.b32.cont [8/16] 0.0, 128
    %2966 = vxpose.xlu0.b32.cont [9/16] 0.0, 128
    %2967 = vxpose.xlu0.b32.cont [10/16] 0.0, 128
    %2968 = vxpose.xlu0.b32.cont [11/16] 0.0, 128
    %2969 = vxpose.xlu0.b32.cont [12/16] 0.0, 128
    %2970 = vxpose.xlu0.b32.cont [13/16] 0.0, 128
    %2971 = vxpose.xlu0.b32.cont [14/16] 0.0, 128
    %2972 = vxpose.xlu0.b32.cont [15/16] 0.0, 128
    %2973 = vxpose.xlu0.b32.end [16/16] 0.0, 128
    %v2974 = vpop.trf.xlu0
    %v2975 = vpop.trf.xlu0
    %v2976 = vpop.trf.xlu0
    %v2977 = vpop.trf.xlu0
    %v2978 = vpop.trf.xlu0
    %v2979 = vpop.trf.xlu0
    %v2980 = vpop.trf.xlu0
    %v2981 = vpop.trf.xlu0
    %v2982 = vpop.trf.xlu0
    %v2983 = vpop.trf.xlu0
    %v2984 = vpop.trf.xlu0
    %v2985 = vpop.trf.xlu0
    %v2986 = vpop.trf.xlu0
    %v2987 = vpop.trf.xlu0
    %v2988 = vpop.trf.xlu0
    %v2989 = vpop.trf.xlu0
    %2990 = vxpose.xlu0.b32.start [1/16] %v2850, 128
    %2991 = vxpose.xlu0.b32.cont [2/16] 0.0, 128
    %2992 = vxpose.xlu0.b32.cont [3/16] 0.0, 128
    %2993 = vxpose.xlu0.b32.cont [4/16] 0.0, 128
    %2994 = vxpose.xlu0.b32.cont [5/16] 0.0, 128
    %2995 = vxpose.xlu0.b32.cont [6/16] 0.0, 128
    %2996 = vxpose.xlu0.b32.cont [7/16] 0.0, 128
    %2997 = vxpose.xlu0.b32.cont [8/16] 0.0, 128
    %2998 = vxpose.xlu0.b32.cont [9/16] 0.0, 128
    %2999 = vxpose.xlu0.b32.cont [10/16] 0.0, 128
    %3000 = vxpose.xlu0.b32.cont [11/16] 0.0, 128
    %3001 = vxpose.xlu0.b32.cont [12/16] 0.0, 128
    %3002 = vxpose.xlu0.b32.cont [13/16] 0.0, 128
    %3003 = vxpose.xlu0.b32.cont [14/16] 0.0, 128
    %3004 = vxpose.xlu0.b32.cont [15/16] 0.0, 128
    %3005 = vxpose.xlu0.b32.end [16/16] 0.0, 128
    %v3006 = vpop.trf.xlu0
    %v3007 = vpop.trf.xlu0
    %v3008 = vpop.trf.xlu0
    %v3009 = vpop.trf.xlu0
    %v3010 = vpop.trf.xlu0
    %v3011 = vpop.trf.xlu0
    %v3012 = vpop.trf.xlu0
    %v3013 = vpop.trf.xlu0
    %v3014 = vpop.trf.xlu0
    %v3015 = vpop.trf.xlu0
    %v3016 = vpop.trf.xlu0
    %v3017 = vpop.trf.xlu0
    %v3018 = vpop.trf.xlu0
    %v3019 = vpop.trf.xlu0
    %v3020 = vpop.trf.xlu0
    %v3021 = vpop.trf.xlu0
    %3022 = vxpose.xlu0.b32.start [1/16] %v2851, 128
    %3023 = vxpose.xlu0.b32.cont [2/16] 0.0, 128
    %3024 = vxpose.xlu0.b32.cont [3/16] 0.0, 128
    %3025 = vxpose.xlu0.b32.cont [4/16] 0.0, 128
    %3026 = vxpose.xlu0.b32.cont [5/16] 0.0, 128
    %3027 = vxpose.xlu0.b32.cont [6/16] 0.0, 128
    %3028 = vxpose.xlu0.b32.cont [7/16] 0.0, 128
    %3029 = vxpose.xlu0.b32.cont [8/16] 0.0, 128
    %3030 = vxpose.xlu0.b32.cont [9/16] 0.0, 128
    %3031 = vxpose.xlu0.b32.cont [10/16] 0.0, 128
    %3032 = vxpose.xlu0.b32.cont [11/16] 0.0, 128
    %3033 = vxpose.xlu0.b32.cont [12/16] 0.0, 128
    %3034 = vxpose.xlu0.b32.cont [13/16] 0.0, 128
    %3035 = vxpose.xlu0.b32.cont [14/16] 0.0, 128
    %3036 = vxpose.xlu0.b32.cont [15/16] 0.0, 128
    %3037 = vxpose.xlu0.b32.end [16/16] 0.0, 128
    %v3038 = vpop.trf.xlu0
    %v3039 = vpop.trf.xlu0
    %v3040 = vpop.trf.xlu0
    %v3041 = vpop.trf.xlu0
    %v3042 = vpop.trf.xlu0
    %v3043 = vpop.trf.xlu0
    %v3044 = vpop.trf.xlu0
    %v3045 = vpop.trf.xlu0
    %v3046 = vpop.trf.xlu0
    %v3047 = vpop.trf.xlu0
    %v3048 = vpop.trf.xlu0
    %v3049 = vpop.trf.xlu0
    %v3050 = vpop.trf.xlu0
    %v3051 = vpop.trf.xlu0
    %v3052 = vpop.trf.xlu0
    %v3053 = vpop.trf.xlu0
    %3054 = vxpose.xlu0.b32.start [1/16] %v2852, 128
    %3055 = vxpose.xlu0.b32.cont [2/16] 0.0, 128
    %3056 = vxpose.xlu0.b32.cont [3/16] 0.0, 128
    %3057 = vxpose.xlu0.b32.cont [4/16] 0.0, 128
    %3058 = vxpose.xlu0.b32.cont [5/16] 0.0, 128
    %3059 = vxpose.xlu0.b32.cont [6/16] 0.0, 128
    %3060 = vxpose.xlu0.b32.cont [7/16] 0.0, 128
    %3061 = vxpose.xlu0.b32.cont [8/16] 0.0, 128
    %3062 = vxpose.xlu0.b32.cont [9/16] 0.0, 128
    %3063 = vxpose.xlu0.b32.cont [10/16] 0.0, 128
    %3064 = vxpose.xlu0.b32.cont [11/16] 0.0, 128
    %3065 = vxpose.xlu0.b32.cont [12/16] 0.0, 128
    %3066 = vxpose.xlu0.b32.cont [13/16] 0.0, 128
    %3067 = vxpose.xlu0.b32.cont [14/16] 0.0, 128
    %3068 = vxpose.xlu0.b32.cont [15/16] 0.0, 128
    %3069 = vxpose.xlu0.b32.end [16/16] 0.0, 128
    %v3070 = vpop.trf.xlu0
    %v3071 = vpop.trf.xlu0
    %v3072 = vpop.trf.xlu0
    %v3073 = vpop.trf.xlu0
    %v3074 = vpop.trf.xlu0
    %v3075 = vpop.trf.xlu0
    %v3076 = vpop.trf.xlu0
    %v3077 = vpop.trf.xlu0
    %v3078 = vpop.trf.xlu0
    %v3079 = vpop.trf.xlu0
    %v3080 = vpop.trf.xlu0
    %v3081 = vpop.trf.xlu0
    %v3082 = vpop.trf.xlu0
    %v3083 = vpop.trf.xlu0
    %v3084 = vpop.trf.xlu0
    %v3085 = vpop.trf.xlu0
    %3086 = vxpose.xlu0.b32.start [1/16] %v2853, 128
    %3087 = vxpose.xlu0.b32.cont [2/16] 0.0, 128
    %3088 = vxpose.xlu0.b32.cont [3/16] 0.0, 128
    %3089 = vxpose.xlu0.b32.cont [4/16] 0.0, 128
    %3090 = vxpose.xlu0.b32.cont [5/16] 0.0, 128
    %3091 = vxpose.xlu0.b32.cont [6/16] 0.0, 128
    %3092 = vxpose.xlu0.b32.cont [7/16] 0.0, 128
    %3093 = vxpose.xlu0.b32.cont [8/16] 0.0, 128
    %3094 = vxpose.xlu0.b32.cont [9/16] 0.0, 128
    %3095 = vxpose.xlu0.b32.cont [10/16] 0.0, 128
    %3096 = vxpose.xlu0.b32.cont [11/16] 0.0, 128
    %3097 = vxpose.xlu0.b32.cont [12/16] 0.0, 128
    %3098 = vxpose.xlu0.b32.cont [13/16] 0.0, 128
    %3099 = vxpose.xlu0.b32.cont [14/16] 0.0, 128
    %3100 = vxpose.xlu0.b32.cont [15/16] 0.0, 128
    %3101 = vxpose.xlu0.b32.end [16/16] 0.0, 128
    %v3102 = vpop.trf.xlu0
    %v3103 = vpop.trf.xlu0
    %v3104 = vpop.trf.xlu0
    %v3105 = vpop.trf.xlu0
    %v3106 = vpop.trf.xlu0
    %v3107 = vpop.trf.xlu0
    %v3108 = vpop.trf.xlu0
    %v3109 = vpop.trf.xlu0
    %v3110 = vpop.trf.xlu0
    %v3111 = vpop.trf.xlu0
    %v3112 = vpop.trf.xlu0
    %v3113 = vpop.trf.xlu0
    %v3114 = vpop.trf.xlu0
    %v3115 = vpop.trf.xlu0
    %v3116 = vpop.trf.xlu0
    %v3117 = vpop.trf.xlu0
    %3118 = vxpose.xlu0.b32.start [1/16] %v2854, 128
    %3119 = vxpose.xlu0.b32.cont [2/16] 0.0, 128
    %3120 = vxpose.xlu0.b32.cont [3/16] 0.0, 128
    %3121 = vxpose.xlu0.b32.cont [4/16] 0.0, 128
    %3122 = vxpose.xlu0.b32.cont [5/16] 0.0, 128
    %3123 = vxpose.xlu0.b32.cont [6/16] 0.0, 128
    %3124 = vxpose.xlu0.b32.cont [7/16] 0.0, 128
    %3125 = vxpose.xlu0.b32.cont [8/16] 0.0, 128
    %3126 = vxpose.xlu0.b32.cont [9/16] 0.0, 128
    %3127 = vxpose.xlu0.b32.cont [10/16] 0.0, 128
    %3128 = vxpose.xlu0.b32.cont [11/16] 0.0, 128
    %3129 = vxpose.xlu0.b32.cont [12/16] 0.0, 128
    %3130 = vxpose.xlu0.b32.cont [13/16] 0.0, 128
    %3131 = vxpose.xlu0.b32.cont [14/16] 0.0, 128
    %3132 = vxpose.xlu0.b32.cont [15/16] 0.0, 128
    %3133 = vxpose.xlu0.b32.end [16/16] 0.0, 128
    %v3134 = vpop.trf.xlu0
    %v3135 = vpop.trf.xlu0
    %v3136 = vpop.trf.xlu0
    %v3137 = vpop.trf.xlu0
    %v3138 = vpop.trf.xlu0
    %v3139 = vpop.trf.xlu0
    %v3140 = vpop.trf.xlu0
    %v3141 = vpop.trf.xlu0
    %v3142 = vpop.trf.xlu0
    %v3143 = vpop.trf.xlu0
    %v3144 = vpop.trf.xlu0
    %v3145 = vpop.trf.xlu0
    %v3146 = vpop.trf.xlu0
    %v3147 = vpop.trf.xlu0
    %v3148 = vpop.trf.xlu0
    %v3149 = vpop.trf.xlu0
    %3150 = vxpose.xlu0.b32.start [1/16] %v2855, 128
    %3151 = vxpose.xlu0.b32.cont [2/16] 0.0, 128
    %3152 = vxpose.xlu0.b32.cont [3/16] 0.0, 128
    %3153 = vxpose.xlu0.b32.cont [4/16] 0.0, 128
    %3154 = vxpose.xlu0.b32.cont [5/16] 0.0, 128
    %3155 = vxpose.xlu0.b32.cont [6/16] 0.0, 128
    %3156 = vxpose.xlu0.b32.cont [7/16] 0.0, 128
    %3157 = vxpose.xlu0.b32.cont [8/16] 0.0, 128
    %3158 = vxpose.xlu0.b32.cont [9/16] 0.0, 128
    %3159 = vxpose.xlu0.b32.cont [10/16] 0.0, 128
    %3160 = vxpose.xlu0.b32.cont [11/16] 0.0, 128
    %3161 = vxpose.xlu0.b32.cont [12/16] 0.0, 128
    %3162 = vxpose.xlu0.b32.cont [13/16] 0.0, 128
    %3163 = vxpose.xlu0.b32.cont [14/16] 0.0, 128
    %3164 = vxpose.xlu0.b32.cont [15/16] 0.0, 128
    %3165 = vxpose.xlu0.b32.end [16/16] 0.0, 128
    %v3166 = vpop.trf.xlu0
    %v3167 = vpop.trf.xlu0
    %v3168 = vpop.trf.xlu0
    %v3169 = vpop.trf.xlu0
    %v3170 = vpop.trf.xlu0
    %v3171 = vpop.trf.xlu0
    %v3172 = vpop.trf.xlu0
    %v3173 = vpop.trf.xlu0
    %v3174 = vpop.trf.xlu0
    %v3175 = vpop.trf.xlu0
    %v3176 = vpop.trf.xlu0
    %v3177 = vpop.trf.xlu0
    %v3178 = vpop.trf.xlu0
    %v3179 = vpop.trf.xlu0
    %v3180 = vpop.trf.xlu0
    %v3181 = vpop.trf.xlu0
    %3182 = vxpose.xlu0.b32.start [1/16] %v2856, 128
    %3183 = vxpose.xlu0.b32.cont [2/16] 0.0, 128
    %3184 = vxpose.xlu0.b32.cont [3/16] 0.0, 128
    %3185 = vxpose.xlu0.b32.cont [4/16] 0.0, 128
    %3186 = vxpose.xlu0.b32.cont [5/16] 0.0, 128
    %3187 = vxpose.xlu0.b32.cont [6/16] 0.0, 128
    %3188 = vxpose.xlu0.b32.cont [7/16] 0.0, 128
    %3189 = vxpose.xlu0.b32.cont [8/16] 0.0, 128
    %3190 = vxpose.xlu0.b32.cont [9/16] 0.0, 128
    %3191 = vxpose.xlu0.b32.cont [10/16] 0.0, 128
    %3192 = vxpose.xlu0.b32.cont [11/16] 0.0, 128
    %3193 = vxpose.xlu0.b32.cont [12/16] 0.0, 128
    %3194 = vxpose.xlu0.b32.cont [13/16] 0.0, 128
    %3195 = vxpose.xlu0.b32.cont [14/16] 0.0, 128
    %3196 = vxpose.xlu0.b32.cont [15/16] 0.0, 128
    %3197 = vxpose.xlu0.b32.end [16/16] 0.0, 128
    %v3198 = vpop.trf.xlu0
    %v3199 = vpop.trf.xlu0
    %v3200 = vpop.trf.xlu0
    %v3201 = vpop.trf.xlu0
    %v3202 = vpop.trf.xlu0
    %v3203 = vpop.trf.xlu0
    %v3204 = vpop.trf.xlu0
    %v3205 = vpop.trf.xlu0
    %v3206 = vpop.trf.xlu0
    %v3207 = vpop.trf.xlu0
    %v3208 = vpop.trf.xlu0
    %v3209 = vpop.trf.xlu0
    %v3210 = vpop.trf.xlu0
    %v3211 = vpop.trf.xlu0
    %v3212 = vpop.trf.xlu0
    %v3213 = vpop.trf.xlu0
    %3214 = vxpose.xlu0.b32.start [1/16] %v2857, 128
    %3215 = vxpose.xlu0.b32.cont [2/16] 0.0, 128
    %3216 = vxpose.xlu0.b32.cont [3/16] 0.0, 128
    %3217 = vxpose.xlu0.b32.cont [4/16] 0.0, 128
    %3218 = vxpose.xlu0.b32.cont [5/16] 0.0, 128
    %3219 = vxpose.xlu0.b32.cont [6/16] 0.0, 128
    %3220 = vxpose.xlu0.b32.cont [7/16] 0.0, 128
    %3221 = vxpose.xlu0.b32.cont [8/16] 0.0, 128
    %3222 = vxpose.xlu0.b32.cont [9/16] 0.0, 128
    %3223 = vxpose.xlu0.b32.cont [10/16] 0.0, 128
    %3224 = vxpose.xlu0.b32.cont [11/16] 0.0, 128
    %3225 = vxpose.xlu0.b32.cont [12/16] 0.0, 128
    %3226 = vxpose.xlu0.b32.cont [13/16] 0.0, 128
    %3227 = vxpose.xlu0.b32.cont [14/16] 0.0, 128
    %3228 = vxpose.xlu0.b32.cont [15/16] 0.0, 128
    %3229 = vxpose.xlu0.b32.end [16/16] 0.0, 128
    %v3230 = vpop.trf.xlu0
    %v3231 = vpop.trf.xlu0
    %v3232 = vpop.trf.xlu0
    %v3233 = vpop.trf.xlu0
    %v3234 = vpop.trf.xlu0
    %v3235 = vpop.trf.xlu0
    %v3236 = vpop.trf.xlu0
    %v3237 = vpop.trf.xlu0
    %v3238 = vpop.trf.xlu0
    %v3239 = vpop.trf.xlu0
    %v3240 = vpop.trf.xlu0
    %v3241 = vpop.trf.xlu0
    %v3242 = vpop.trf.xlu0
    %v3243 = vpop.trf.xlu0
    %v3244 = vpop.trf.xlu0
    %v3245 = vpop.trf.xlu0
    %3246 = vxpose.xlu0.b32.start [1/16] %v2858, 128
    %3247 = vxpose.xlu0.b32.cont [2/16] 0.0, 128
    %3248 = vxpose.xlu0.b32.cont [3/16] 0.0, 128
    %3249 = vxpose.xlu0.b32.cont [4/16] 0.0, 128
    %3250 = vxpose.xlu0.b32.cont [5/16] 0.0, 128
    %3251 = vxpose.xlu0.b32.cont [6/16] 0.0, 128
    %3252 = vxpose.xlu0.b32.cont [7/16] 0.0, 128
    %3253 = vxpose.xlu0.b32.cont [8/16] 0.0, 128
    %3254 = vxpose.xlu0.b32.cont [9/16] 0.0, 128
    %3255 = vxpose.xlu0.b32.cont [10/16] 0.0, 128
    %3256 = vxpose.xlu0.b32.cont [11/16] 0.0, 128
    %3257 = vxpose.xlu0.b32.cont [12/16] 0.0, 128
    %3258 = vxpose.xlu0.b32.cont [13/16] 0.0, 128
    %3259 = vxpose.xlu0.b32.cont [14/16] 0.0, 128
    %3260 = vxpose.xlu0.b32.cont [15/16] 0.0, 128
    %3261 = vxpose.xlu0.b32.end [16/16] 0.0, 128
    %v3262 = vpop.trf.xlu0
    %v3263 = vpop.trf.xlu0
    %v3264 = vpop.trf.xlu0
    %v3265 = vpop.trf.xlu0
    %v3266 = vpop.trf.xlu0
    %v3267 = vpop.trf.xlu0
    %v3268 = vpop.trf.xlu0
    %v3269 = vpop.trf.xlu0
    %v3270 = vpop.trf.xlu0
    %v3271 = vpop.trf.xlu0
    %v3272 = vpop.trf.xlu0
    %v3273 = vpop.trf.xlu0
    %v3274 = vpop.trf.xlu0
    %v3275 = vpop.trf.xlu0
    %v3276 = vpop.trf.xlu0
    %v3277 = vpop.trf.xlu0
    %3278 = vxpose.xlu0.b32.start [1/16] %v2859, 128
    %3279 = vxpose.xlu0.b32.cont [2/16] 0.0, 128
    %3280 = vxpose.xlu0.b32.cont [3/16] 0.0, 128
    %3281 = vxpose.xlu0.b32.cont [4/16] 0.0, 128
    %3282 = vxpose.xlu0.b32.cont [5/16] 0.0, 128
    %3283 = vxpose.xlu0.b32.cont [6/16] 0.0, 128
    %3284 = vxpose.xlu0.b32.cont [7/16] 0.0, 128
    %3285 = vxpose.xlu0.b32.cont [8/16] 0.0, 128
    %3286 = vxpose.xlu0.b32.cont [9/16] 0.0, 128
    %3287 = vxpose.xlu0.b32.cont [10/16] 0.0, 128
    %3288 = vxpose.xlu0.b32.cont [11/16] 0.0, 128
    %3289 = vxpose.xlu0.b32.cont [12/16] 0.0, 128
    %3290 = vxpose.xlu0.b32.cont [13/16] 0.0, 128
    %3291 = vxpose.xlu0.b32.cont [14/16] 0.0, 128
    %3292 = vxpose.xlu0.b32.cont [15/16] 0.0, 128
    %3293 = vxpose.xlu0.b32.end [16/16] 0.0, 128
    %v3294 = vpop.trf.xlu0
    %v3295 = vpop.trf.xlu0
    %v3296 = vpop.trf.xlu0
    %v3297 = vpop.trf.xlu0
    %v3298 = vpop.trf.xlu0
    %v3299 = vpop.trf.xlu0
    %v3300 = vpop.trf.xlu0
    %v3301 = vpop.trf.xlu0
    %v3302 = vpop.trf.xlu0
    %v3303 = vpop.trf.xlu0
    %v3304 = vpop.trf.xlu0
    %v3305 = vpop.trf.xlu0
    %v3306 = vpop.trf.xlu0
    %v3307 = vpop.trf.xlu0
    %v3308 = vpop.trf.xlu0
    %v3309 = vpop.trf.xlu0
    %3310 = vxpose.xlu0.b32.start [1/16] %v2860, 128
    %3311 = vxpose.xlu0.b32.cont [2/16] 0.0, 128
    %3312 = vxpose.xlu0.b32.cont [3/16] 0.0, 128
    %3313 = vxpose.xlu0.b32.cont [4/16] 0.0, 128
    %3314 = vxpose.xlu0.b32.cont [5/16] 0.0, 128
    %3315 = vxpose.xlu0.b32.cont [6/16] 0.0, 128
    %3316 = vxpose.xlu0.b32.cont [7/16] 0.0, 128
    %3317 = vxpose.xlu0.b32.cont [8/16] 0.0, 128
    %3318 = vxpose.xlu0.b32.cont [9/16] 0.0, 128
    %3319 = vxpose.xlu0.b32.cont [10/16] 0.0, 128
    %3320 = vxpose.xlu0.b32.cont [11/16] 0.0, 128
    %3321 = vxpose.xlu0.b32.cont [12/16] 0.0, 128
    %3322 = vxpose.xlu0.b32.cont [13/16] 0.0, 128
    %3323 = vxpose.xlu0.b32.cont [14/16] 0.0, 128
    %3324 = vxpose.xlu0.b32.cont [15/16] 0.0, 128
    %3325 = vxpose.xlu0.b32.end [16/16] 0.0, 128
    %v3326 = vpop.trf.xlu0
    %v3327 = vpop.trf.xlu0
    %v3328 = vpop.trf.xlu0
    %v3329 = vpop.trf.xlu0
    %v3330 = vpop.trf.xlu0
    %v3331 = vpop.trf.xlu0
    %v3332 = vpop.trf.xlu0
    %v3333 = vpop.trf.xlu0
    %v3334 = vpop.trf.xlu0
    %v3335 = vpop.trf.xlu0
    %v3336 = vpop.trf.xlu0
    %v3337 = vpop.trf.xlu0
    %v3338 = vpop.trf.xlu0
    %v3339 = vpop.trf.xlu0
    %v3340 = vpop.trf.xlu0
    %v3341 = vpop.trf.xlu0
    %3342 = vxpose.xlu0.b32.start [1/16] %v2861, 128
    %3343 = vxpose.xlu0.b32.cont [2/16] 0.0, 128
    %3344 = vxpose.xlu0.b32.cont [3/16] 0.0, 128
    %3345 = vxpose.xlu0.b32.cont [4/16] 0.0, 128
    %3346 = vxpose.xlu0.b32.cont [5/16] 0.0, 128
    %3347 = vxpose.xlu0.b32.cont [6/16] 0.0, 128
    %3348 = vxpose.xlu0.b32.cont [7/16] 0.0, 128
    %3349 = vxpose.xlu0.b32.cont [8/16] 0.0, 128
    %3350 = vxpose.xlu0.b32.cont [9/16] 0.0, 128
    %3351 = vxpose.xlu0.b32.cont [10/16] 0.0, 128
    %3352 = vxpose.xlu0.b32.cont [11/16] 0.0, 128
    %3353 = vxpose.xlu0.b32.cont [12/16] 0.0, 128
    %3354 = vxpose.xlu0.b32.cont [13/16] 0.0, 128
    %3355 = vxpose.xlu0.b32.cont [14/16] 0.0, 128
    %3356 = vxpose.xlu0.b32.cont [15/16] 0.0, 128
    %3357 = vxpose.xlu0.b32.end [16/16] 0.0, 128
    %v3358 = vpop.trf.xlu0
    %v3359 = vpop.trf.xlu0
    %v3360 = vpop.trf.xlu0
    %v3361 = vpop.trf.xlu0
    %v3362 = vpop.trf.xlu0
    %v3363 = vpop.trf.xlu0
    %v3364 = vpop.trf.xlu0
    %v3365 = vpop.trf.xlu0
    %v3366 = vpop.trf.xlu0
    %v3367 = vpop.trf.xlu0
    %v3368 = vpop.trf.xlu0
    %v3369 = vpop.trf.xlu0
    %v3370 = vpop.trf.xlu0
    %v3371 = vpop.trf.xlu0
    %v3372 = vpop.trf.xlu0
    %v3373 = vpop.trf.xlu0
    %v3374 = vpack.c.bf16 %v2879, %v2878
    %v3375 = vpack.c.bf16 %v2881, %v2880
    %v3376 = vpack.c.bf16 %v2883, %v2882
    %v3377 = vpack.c.bf16 %v2885, %v2884
    %v3378 = vpack.c.bf16 %v2911, %v2910
    %v3379 = vpack.c.bf16 %v2913, %v2912
    %v3380 = vpack.c.bf16 %v2915, %v2914
    %v3381 = vpack.c.bf16 %v2917, %v2916
    %v3382 = vpack.c.bf16 %v2943, %v2942
    %v3383 = vpack.c.bf16 %v2945, %v2944
    %v3384 = vpack.c.bf16 %v2947, %v2946
    %v3385 = vpack.c.bf16 %v2949, %v2948
    %v3386 = vpack.c.bf16 %v2975, %v2974
    %v3387 = vpack.c.bf16 %v2977, %v2976
    %v3388 = vpack.c.bf16 %v2979, %v2978
    %v3389 = vpack.c.bf16 %v2981, %v2980
    %v3390 = vpack.c.bf16 %v3007, %v3006
    %v3391 = vpack.c.bf16 %v3009, %v3008
    %v3392 = vpack.c.bf16 %v3011, %v3010
    %v3393 = vpack.c.bf16 %v3013, %v3012
    %v3394 = vpack.c.bf16 %v3039, %v3038
    %v3395 = vpack.c.bf16 %v3041, %v3040
    %v3396 = vpack.c.bf16 %v3043, %v3042
    %v3397 = vpack.c.bf16 %v3045, %v3044
    %v3398 = vpack.c.bf16 %v3071, %v3070
    %v3399 = vpack.c.bf16 %v3073, %v3072
    %v3400 = vpack.c.bf16 %v3075, %v3074
    %v3401 = vpack.c.bf16 %v3077, %v3076
    %v3402 = vpack.c.bf16 %v3103, %v3102
    %v3403 = vpack.c.bf16 %v3105, %v3104
    %v3404 = vpack.c.bf16 %v3107, %v3106
    %v3405 = vpack.c.bf16 %v3109, %v3108
    %v3406 = vpack.c.bf16 %v3135, %v3134
    %v3407 = vpack.c.bf16 %v3137, %v3136
    %v3408 = vpack.c.bf16 %v3139, %v3138
    %v3409 = vpack.c.bf16 %v3141, %v3140
    %v3410 = vpack.c.bf16 %v3167, %v3166
    %v3411 = vpack.c.bf16 %v3169, %v3168
    %v3412 = vpack.c.bf16 %v3171, %v3170
    %v3413 = vpack.c.bf16 %v3173, %v3172
    %v3414 = vpack.c.bf16 %v3199, %v3198
    %v3415 = vpack.c.bf16 %v3201, %v3200
    %v3416 = vpack.c.bf16 %v3203, %v3202
    %v3417 = vpack.c.bf16 %v3205, %v3204
    %v3418 = vpack.c.bf16 %v3231, %v3230
    %v3419 = vpack.c.bf16 %v3233, %v3232
    %v3420 = vpack.c.bf16 %v3235, %v3234
    %v3421 = vpack.c.bf16 %v3237, %v3236
    %v3422 = vpack.c.bf16 %v3263, %v3262
    %v3423 = vpack.c.bf16 %v3265, %v3264
    %v3424 = vpack.c.bf16 %v3267, %v3266
    %v3425 = vpack.c.bf16 %v3269, %v3268
    %v3426 = vpack.c.bf16 %v3295, %v3294
    %v3427 = vpack.c.bf16 %v3297, %v3296
    %v3428 = vpack.c.bf16 %v3299, %v3298
    %v3429 = vpack.c.bf16 %v3301, %v3300
    %v3430 = vpack.c.bf16 %v3327, %v3326
    %v3431 = vpack.c.bf16 %v3329, %v3328
    %v3432 = vpack.c.bf16 %v3331, %v3330
    %v3433 = vpack.c.bf16 %v3333, %v3332
    %v3434 = vpack.c.bf16 %v3359, %v3358
    %v3435 = vpack.c.bf16 %v3361, %v3360
    %v3436 = vpack.c.bf16 %v3363, %v3362
    %v3437 = vpack.c.bf16 %v3365, %v3364
    %v3438 = vpack.c.bf16 %v1682, %v1682
    %v3439 = vpack.c.bf16 %v1686, %v1686
    %v3440 = vpack.c.bf16 %v1692, %v1692
    %v3441 = vpack.c.bf16 %v1696, %v1696
    %v3442 = vpack.c.bf16 %v1702, %v1702
    %v3443 = vpack.c.bf16 %v1706, %v1706
    %v3444 = vpack.c.bf16 %v1712, %v1712
    %v3445 = vpack.c.bf16 %v1716, %v1716
    %v3446 = vpack.c.bf16 %v1722, %v1722
    %v3447 = vpack.c.bf16 %v1726, %v1726
    %v3448 = vpack.c.bf16 %v1732, %v1732
    %v3449 = vpack.c.bf16 %v1736, %v1736
    %v3450 = vpack.c.bf16 %v1742, %v1742
    %v3451 = vpack.c.bf16 %v1746, %v1746
    %v3452 = vpack.c.bf16 %v1752, %v1752
    %v3453 = vpack.c.bf16 %v1756, %v1756
    %v3454 = vpack.c.bf16 %v2019, %v2019
    %v3455 = vpack.c.bf16 %v2023, %v2023
    %v3456 = vpack.c.bf16 %v2029, %v2029
    %v3457 = vpack.c.bf16 %v2033, %v2033
    %v3458 = vpack.c.bf16 %v2039, %v2039
    %v3459 = vpack.c.bf16 %v2043, %v2043
    %v3460 = vpack.c.bf16 %v2049, %v2049
    %v3461 = vpack.c.bf16 %v2053, %v2053
    %v3462 = vpack.c.bf16 %v2059, %v2059
    %v3463 = vpack.c.bf16 %v2063, %v2063
    %v3464 = vpack.c.bf16 %v2069, %v2069
    %v3465 = vpack.c.bf16 %v2073, %v2073
    %v3466 = vpack.c.bf16 %v2079, %v2079
    %v3467 = vpack.c.bf16 %v2083, %v2083
    %v3468 = vpack.c.bf16 %v2089, %v2089
    %v3469 = vpack.c.bf16 %v2093, %v2093
    %vm3470 = vcmask 64512
    %v3472 = vsel %vm3470, %v3375, 0
    %vm3474 = vcmask 1043456
    %v3476 = vsel %vm3474, %v3454, 0
    %3478 = vmatprep.subr.bf16.mxu0 0
    %3479 = vmatpush1.bf16.msra.mxu0 0
    %3480 = vmatprep.subr.bf16.mxu0 0
    %3481 = vmatpush1.bf16.msra.mxu0 0
    %3482 = vmatprep.subr.bf16.mxu0 0
    %3483 = vmatpush1.bf16.msra.mxu0 0
    %3484 = vmatprep.subr.bf16.mxu0 0
    %3485 = vmatpush1.bf16.msra.mxu0 0
    %3486 = vmatprep.subr.bf16.mxu0 0
    %3487 = vmatpush1.bf16.msra.mxu0 0
    %3488 = vmatprep.subr.bf16.mxu0 0
    %3489 = vmatpush1.bf16.msra.mxu0 0
    %3490 = vmatprep.subr.bf16.mxu0 0
    %3491 = vmatpush1.bf16.msra.mxu0 0
    %3492 = vmatprep.subr.bf16.mxu0 0
    %3493 = vmatpush1.bf16.msra.mxu0 %v3476
    %3494 = vmatprep.subr.bf16.mxu0 0
    %3495 = vmatpush2.bf16.msra.mxu0 0
    %3496 = vmatprep.subr.bf16.mxu0 0
    %3497 = vmatpush2.bf16.msra.mxu0 0
    %3498 = vmatprep.subr.bf16.mxu0 0
    %3499 = vmatpush2.bf16.msra.mxu0 0
    %3500 = vmatprep.subr.bf16.mxu0 0
    %3501 = vmatpush2.bf16.msra.mxu0 0
    %3502 = vmatprep.subr.bf16.mxu0 0
    %3503 = vmatpush2.bf16.msra.mxu0 0
    %3504 = vmatprep.subr.bf16.mxu0 0
    %3505 = vmatpush2.bf16.msra.mxu0 0
    %3506 = vmatprep.subr.bf16.mxu0 0
    %3507 = vmatpush2.bf16.msra.mxu0 0
    %3508 = vmatprep.subr.bf16.mxu0 0
    %3509 = vmatpush2.bf16.msra.mxu0 0
    %3510 = vmatprep.mubr.bf16.mxu0 0
    %3511 = vmatmul.mubr.bf16.gmra.mxu0 %v3472
    %v3512 = vpop.f32.mrf.mxu0
    %v3513 = vadd.f32 0.0, %v3512
    %v3514 = vpop.f32.mrf.mxu0
    %v3515 = vpop.f32.mrf.mxu0
    %v3516 = vadd.f32 0.0, %v3515
    %v3517 = vpop.f32.mrf.mxu0
    %3518 = vdwg.mxu0
    %v3520 = vsel %vm3470, %v3379, 0
    %v3523 = vsel %vm3474, %v3455, 0
    %3525 = vmatprep.subr.bf16.mxu0 0
    %3526 = vmatpush1.bf16.msra.mxu0 0
    %3527 = vmatprep.subr.bf16.mxu0 0
    %3528 = vmatpush1.bf16.msra.mxu0 0
    %3529 = vmatprep.subr.bf16.mxu0 0
    %3530 = vmatpush1.bf16.msra.mxu0 0
    %3531 = vmatprep.subr.bf16.mxu0 0
    %3532 = vmatpush1.bf16.msra.mxu0 0
    %3533 = vmatprep.subr.bf16.mxu0 0
    %3534 = vmatpush1.bf16.msra.mxu0 0
    %3535 = vmatprep.subr.bf16.mxu0 0
    %3536 = vmatpush1.bf16.msra.mxu0 0
    %3537 = vmatprep.subr.bf16.mxu0 0
    %3538 = vmatpush1.bf16.msra.mxu0 0
    %3539 = vmatprep.subr.bf16.mxu0 0
    %3540 = vmatpush1.bf16.msra.mxu0 %v3523
    %3541 = vmatprep.subr.bf16.mxu0 0
    %3542 = vmatpush2.bf16.msra.mxu0 0
    %3543 = vmatprep.subr.bf16.mxu0 0
    %3544 = vmatpush2.bf16.msra.mxu0 0
    %3545 = vmatprep.subr.bf16.mxu0 0
    %3546 = vmatpush2.bf16.msra.mxu0 0
    %3547 = vmatprep.subr.bf16.mxu0 0
    %3548 = vmatpush2.bf16.msra.mxu0 0
    %3549 = vmatprep.subr.bf16.mxu0 0
    %3550 = vmatpush2.bf16.msra.mxu0 0
    %3551 = vmatprep.subr.bf16.mxu0 0
    %3552 = vmatpush2.bf16.msra.mxu0 0
    %3553 = vmatprep.subr.bf16.mxu0 0
    %3554 = vmatpush2.bf16.msra.mxu0 0
    %3555 = vmatprep.subr.bf16.mxu0 0
    %3556 = vmatpush2.bf16.msra.mxu0 0
    %3557 = vmatprep.mubr.bf16.mxu0 0
    %3558 = vmatmul.mubr.bf16.gmra.mxu0 %v3520
    %v3559 = vpop.f32.mrf.mxu0
    %v3560 = vadd.f32 0.0, %v3559
    %v3561 = vpop.f32.mrf.mxu0
    %v3562 = vpop.f32.mrf.mxu0
    %v3563 = vadd.f32 0.0, %v3562
    %v3564 = vpop.f32.mrf.mxu0
    %3565 = vdwg.mxu0
    %v3567 = vsel %vm3470, %v3383, 0
    %v3570 = vsel %vm3474, %v3456, 0
    %3572 = vmatprep.subr.bf16.mxu0 0
    %3573 = vmatpush1.bf16.msra.mxu0 0
    %3574 = vmatprep.subr.bf16.mxu0 0
    %3575 = vmatpush1.bf16.msra.mxu0 0
    %3576 = vmatprep.subr.bf16.mxu0 0
    %3577 = vmatpush1.bf16.msra.mxu0 0
    %3578 = vmatprep.subr.bf16.mxu0 0
    %3579 = vmatpush1.bf16.msra.mxu0 0
    %3580 = vmatprep.subr.bf16.mxu0 0
    %3581 = vmatpush1.bf16.msra.mxu0 0
    %3582 = vmatprep.subr.bf16.mxu0 0
    %3583 = vmatpush1.bf16.msra.mxu0 0
    %3584 = vmatprep.subr.bf16.mxu0 0
    %3585 = vmatpush1.bf16.msra.mxu0 0
    %3586 = vmatprep.subr.bf16.mxu0 0
    %3587 = vmatpush1.bf16.msra.mxu0 %v3570
    %3588 = vmatprep.subr.bf16.mxu0 0
    %3589 = vmatpush2.bf16.msra.mxu0 0
    %3590 = vmatprep.subr.bf16.mxu0 0
    %3591 = vmatpush2.bf16.msra.mxu0 0
    %3592 = vmatprep.subr.bf16.mxu0 0
    %3593 = vmatpush2.bf16.msra.mxu0 0
    %3594 = vmatprep.subr.bf16.mxu0 0
    %3595 = vmatpush2.bf16.msra.mxu0 0
    %3596 = vmatprep.subr.bf16.mxu0 0
    %3597 = vmatpush2.bf16.msra.mxu0 0
    %3598 = vmatprep.subr.bf16.mxu0 0
    %3599 = vmatpush2.bf16.msra.mxu0 0
    %3600 = vmatprep.subr.bf16.mxu0 0
    %3601 = vmatpush2.bf16.msra.mxu0 0
    %3602 = vmatprep.subr.bf16.mxu0 0
    %3603 = vmatpush2.bf16.msra.mxu0 0
    %3604 = vmatprep.mubr.bf16.mxu0 0
    %3605 = vmatmul.mubr.bf16.gmra.mxu0 %v3567
    %v3606 = vpop.f32.mrf.mxu0
    %v3607 = vadd.f32 0.0, %v3606
    %v3608 = vpop.f32.mrf.mxu0
    %v3609 = vpop.f32.mrf.mxu0
    %v3610 = vadd.f32 0.0, %v3609
    %v3611 = vpop.f32.mrf.mxu0
    %3612 = vdwg.mxu0
    %v3614 = vsel %vm3470, %v3387, 0
    %v3617 = vsel %vm3474, %v3457, 0
    %3619 = vmatprep.subr.bf16.mxu0 0
    %3620 = vmatpush1.bf16.msra.mxu0 0
    %3621 = vmatprep.subr.bf16.mxu0 0
    %3622 = vmatpush1.bf16.msra.mxu0 0
    %3623 = vmatprep.subr.bf16.mxu0 0
    %3624 = vmatpush1.bf16.msra.mxu0 0
    %3625 = vmatprep.subr.bf16.mxu0 0
    %3626 = vmatpush1.bf16.msra.mxu0 0
    %3627 = vmatprep.subr.bf16.mxu0 0
    %3628 = vmatpush1.bf16.msra.mxu0 0
    %3629 = vmatprep.subr.bf16.mxu0 0
    %3630 = vmatpush1.bf16.msra.mxu0 0
    %3631 = vmatprep.subr.bf16.mxu0 0
    %3632 = vmatpush1.bf16.msra.mxu0 0
    %3633 = vmatprep.subr.bf16.mxu0 0
    %3634 = vmatpush1.bf16.msra.mxu0 %v3617
    %3635 = vmatprep.subr.bf16.mxu0 0
    %3636 = vmatpush2.bf16.msra.mxu0 0
    %3637 = vmatprep.subr.bf16.mxu0 0
    %3638 = vmatpush2.bf16.msra.mxu0 0
    %3639 = vmatprep.subr.bf16.mxu0 0
    %3640 = vmatpush2.bf16.msra.mxu0 0
    %3641 = vmatprep.subr.bf16.mxu0 0
    %3642 = vmatpush2.bf16.msra.mxu0 0
    %3643 = vmatprep.subr.bf16.mxu0 0
    %3644 = vmatpush2.bf16.msra.mxu0 0
    %3645 = vmatprep.subr.bf16.mxu0 0
    %3646 = vmatpush2.bf16.msra.mxu0 0
    %3647 = vmatprep.subr.bf16.mxu0 0
    %3648 = vmatpush2.bf16.msra.mxu0 0
    %3649 = vmatprep.subr.bf16.mxu0 0
    %3650 = vmatpush2.bf16.msra.mxu0 0
    %3651 = vmatprep.mubr.bf16.mxu0 0
    %3652 = vmatmul.mubr.bf16.gmra.mxu0 %v3614
    %v3653 = vpop.f32.mrf.mxu0
    %v3654 = vadd.f32 0.0, %v3653
    %v3655 = vpop.f32.mrf.mxu0
    %v3656 = vpop.f32.mrf.mxu0
    %v3657 = vadd.f32 0.0, %v3656
    %v3658 = vpop.f32.mrf.mxu0
    %3659 = vdwg.mxu0
    %v3661 = vsel %vm3470, %v3391, 0
    %v3664 = vsel %vm3474, %v3458, 0
    %3666 = vmatprep.subr.bf16.mxu0 0
    %3667 = vmatpush1.bf16.msra.mxu0 0
    %3668 = vmatprep.subr.bf16.mxu0 0
    %3669 = vmatpush1.bf16.msra.mxu0 0
    %3670 = vmatprep.subr.bf16.mxu0 0
    %3671 = vmatpush1.bf16.msra.mxu0 0
    %3672 = vmatprep.subr.bf16.mxu0 0
    %3673 = vmatpush1.bf16.msra.mxu0 0
    %3674 = vmatprep.subr.bf16.mxu0 0
    %3675 = vmatpush1.bf16.msra.mxu0 0
    %3676 = vmatprep.subr.bf16.mxu0 0
    %3677 = vmatpush1.bf16.msra.mxu0 0
    %3678 = vmatprep.subr.bf16.mxu0 0
    %3679 = vmatpush1.bf16.msra.mxu0 0
    %3680 = vmatprep.subr.bf16.mxu0 0
    %3681 = vmatpush1.bf16.msra.mxu0 %v3664
    %3682 = vmatprep.subr.bf16.mxu0 0
    %3683 = vmatpush2.bf16.msra.mxu0 0
    %3684 = vmatprep.subr.bf16.mxu0 0
    %3685 = vmatpush2.bf16.msra.mxu0 0
    %3686 = vmatprep.subr.bf16.mxu0 0
    %3687 = vmatpush2.bf16.msra.mxu0 0
    %3688 = vmatprep.subr.bf16.mxu0 0
    %3689 = vmatpush2.bf16.msra.mxu0 0
    %3690 = vmatprep.subr.bf16.mxu0 0
    %3691 = vmatpush2.bf16.msra.mxu0 0
    %3692 = vmatprep.subr.bf16.mxu0 0
    %3693 = vmatpush2.bf16.msra.mxu0 0
    %3694 = vmatprep.subr.bf16.mxu0 0
    %3695 = vmatpush2.bf16.msra.mxu0 0
    %3696 = vmatprep.subr.bf16.mxu0 0
    %3697 = vmatpush2.bf16.msra.mxu0 0
    %3698 = vmatprep.mubr.bf16.mxu0 0
    %3699 = vmatmul.mubr.bf16.gmra.mxu0 %v3661
    %v3700 = vpop.f32.mrf.mxu0
    %v3701 = vadd.f32 0.0, %v3700
    %v3702 = vpop.f32.mrf.mxu0
    %v3703 = vpop.f32.mrf.mxu0
    %v3704 = vadd.f32 0.0, %v3703
    %v3705 = vpop.f32.mrf.mxu0
    %3706 = vdwg.mxu0
    %v3708 = vsel %vm3470, %v3395, 0
    %v3711 = vsel %vm3474, %v3459, 0
    %3713 = vmatprep.subr.bf16.mxu0 0
    %3714 = vmatpush1.bf16.msra.mxu0 0
    %3715 = vmatprep.subr.bf16.mxu0 0
    %3716 = vmatpush1.bf16.msra.mxu0 0
    %3717 = vmatprep.subr.bf16.mxu0 0
    %3718 = vmatpush1.bf16.msra.mxu0 0
    %3719 = vmatprep.subr.bf16.mxu0 0
    %3720 = vmatpush1.bf16.msra.mxu0 0
    %3721 = vmatprep.subr.bf16.mxu0 0
    %3722 = vmatpush1.bf16.msra.mxu0 0
    %3723 = vmatprep.subr.bf16.mxu0 0
    %3724 = vmatpush1.bf16.msra.mxu0 0
    %3725 = vmatprep.subr.bf16.mxu0 0
    %3726 = vmatpush1.bf16.msra.mxu0 0
    %3727 = vmatprep.subr.bf16.mxu0 0
    %3728 = vmatpush1.bf16.msra.mxu0 %v3711
    %3729 = vmatprep.subr.bf16.mxu0 0
    %3730 = vmatpush2.bf16.msra.mxu0 0
    %3731 = vmatprep.subr.bf16.mxu0 0
    %3732 = vmatpush2.bf16.msra.mxu0 0
    %3733 = vmatprep.subr.bf16.mxu0 0
    %3734 = vmatpush2.bf16.msra.mxu0 0
    %3735 = vmatprep.subr.bf16.mxu0 0
    %3736 = vmatpush2.bf16.msra.mxu0 0
    %3737 = vmatprep.subr.bf16.mxu0 0
    %3738 = vmatpush2.bf16.msra.mxu0 0
    %3739 = vmatprep.subr.bf16.mxu0 0
    %3740 = vmatpush2.bf16.msra.mxu0 0
    %3741 = vmatprep.subr.bf16.mxu0 0
    %3742 = vmatpush2.bf16.msra.mxu0 0
    %3743 = vmatprep.subr.bf16.mxu0 0
    %3744 = vmatpush2.bf16.msra.mxu0 0
    %3745 = vmatprep.mubr.bf16.mxu0 0
    %3746 = vmatmul.mubr.bf16.gmra.mxu0 %v3708
    %v3747 = vpop.f32.mrf.mxu0
    %v3748 = vadd.f32 0.0, %v3747
    %v3749 = vpop.f32.mrf.mxu0
    %v3750 = vpop.f32.mrf.mxu0
    %v3751 = vadd.f32 0.0, %v3750
    %v3752 = vpop.f32.mrf.mxu0
    %3753 = vdwg.mxu0
    %v3755 = vsel %vm3470, %v3399, 0
    %v3758 = vsel %vm3474, %v3460, 0
    %3760 = vmatprep.subr.bf16.mxu0 0
    %3761 = vmatpush1.bf16.msra.mxu0 0
    %3762 = vmatprep.subr.bf16.mxu0 0
    %3763 = vmatpush1.bf16.msra.mxu0 0
    %3764 = vmatprep.subr.bf16.mxu0 0
    %3765 = vmatpush1.bf16.msra.mxu0 0
    %3766 = vmatprep.subr.bf16.mxu0 0
    %3767 = vmatpush1.bf16.msra.mxu0 0
    %3768 = vmatprep.subr.bf16.mxu0 0
    %3769 = vmatpush1.bf16.msra.mxu0 0
    %3770 = vmatprep.subr.bf16.mxu0 0
    %3771 = vmatpush1.bf16.msra.mxu0 0
    %3772 = vmatprep.subr.bf16.mxu0 0
    %3773 = vmatpush1.bf16.msra.mxu0 0
    %3774 = vmatprep.subr.bf16.mxu0 0
    %3775 = vmatpush1.bf16.msra.mxu0 %v3758
    %3776 = vmatprep.subr.bf16.mxu0 0
    %3777 = vmatpush2.bf16.msra.mxu0 0
    %3778 = vmatprep.subr.bf16.mxu0 0
    %3779 = vmatpush2.bf16.msra.mxu0 0
    %3780 = vmatprep.subr.bf16.mxu0 0
    %3781 = vmatpush2.bf16.msra.mxu0 0
    %3782 = vmatprep.subr.bf16.mxu0 0
    %3783 = vmatpush2.bf16.msra.mxu0 0
    %3784 = vmatprep.subr.bf16.mxu0 0
    %3785 = vmatpush2.bf16.msra.mxu0 0
    %3786 = vmatprep.subr.bf16.mxu0 0
    %3787 = vmatpush2.bf16.msra.mxu0 0
    %3788 = vmatprep.subr.bf16.mxu0 0
    %3789 = vmatpush2.bf16.msra.mxu0 0
    %3790 = vmatprep.subr.bf16.mxu0 0
    %3791 = vmatpush2.bf16.msra.mxu0 0
    %3792 = vmatprep.mubr.bf16.mxu0 0
    %3793 = vmatmul.mubr.bf16.gmra.mxu0 %v3755
    %v3794 = vpop.f32.mrf.mxu0
    %v3795 = vadd.f32 0.0, %v3794
    %v3796 = vpop.f32.mrf.mxu0
    %v3797 = vpop.f32.mrf.mxu0
    %v3798 = vadd.f32 0.0, %v3797
    %v3799 = vpop.f32.mrf.mxu0
    %3800 = vdwg.mxu0
    %v3802 = vsel %vm3470, %v3403, 0
    %v3805 = vsel %vm3474, %v3461, 0
    %3807 = vmatprep.subr.bf16.mxu0 0
    %3808 = vmatpush1.bf16.msra.mxu0 0
    %3809 = vmatprep.subr.bf16.mxu0 0
    %3810 = vmatpush1.bf16.msra.mxu0 0
    %3811 = vmatprep.subr.bf16.mxu0 0
    %3812 = vmatpush1.bf16.msra.mxu0 0
    %3813 = vmatprep.subr.bf16.mxu0 0
    %3814 = vmatpush1.bf16.msra.mxu0 0
    %3815 = vmatprep.subr.bf16.mxu0 0
    %3816 = vmatpush1.bf16.msra.mxu0 0
    %3817 = vmatprep.subr.bf16.mxu0 0
    %3818 = vmatpush1.bf16.msra.mxu0 0
    %3819 = vmatprep.subr.bf16.mxu0 0
    %3820 = vmatpush1.bf16.msra.mxu0 0
    %3821 = vmatprep.subr.bf16.mxu0 0
    %3822 = vmatpush1.bf16.msra.mxu0 %v3805
    %3823 = vmatprep.subr.bf16.mxu0 0
    %3824 = vmatpush2.bf16.msra.mxu0 0
    %3825 = vmatprep.subr.bf16.mxu0 0
    %3826 = vmatpush2.bf16.msra.mxu0 0
    %3827 = vmatprep.subr.bf16.mxu0 0
    %3828 = vmatpush2.bf16.msra.mxu0 0
    %3829 = vmatprep.subr.bf16.mxu0 0
    %3830 = vmatpush2.bf16.msra.mxu0 0
    %3831 = vmatprep.subr.bf16.mxu0 0
    %3832 = vmatpush2.bf16.msra.mxu0 0
    %3833 = vmatprep.subr.bf16.mxu0 0
    %3834 = vmatpush2.bf16.msra.mxu0 0
    %3835 = vmatprep.subr.bf16.mxu0 0
    %3836 = vmatpush2.bf16.msra.mxu0 0
    %3837 = vmatprep.subr.bf16.mxu0 0
    %3838 = vmatpush2.bf16.msra.mxu0 0
    %3839 = vmatprep.mubr.bf16.mxu0 0
    %3840 = vmatmul.mubr.bf16.gmra.mxu0 %v3802
    %v3841 = vpop.f32.mrf.mxu0
    %v3842 = vadd.f32 0.0, %v3841
    %v3843 = vpop.f32.mrf.mxu0
    %v3844 = vpop.f32.mrf.mxu0
    %v3845 = vadd.f32 0.0, %v3844
    %v3846 = vpop.f32.mrf.mxu0
    %3847 = vdwg.mxu0
    %v3849 = vsel %vm3470, %v3407, 0
    %v3852 = vsel %vm3474, %v3462, 0
    %3854 = vmatprep.subr.bf16.mxu0 0
    %3855 = vmatpush1.bf16.msra.mxu0 0
    %3856 = vmatprep.subr.bf16.mxu0 0
    %3857 = vmatpush1.bf16.msra.mxu0 0
    %3858 = vmatprep.subr.bf16.mxu0 0
    %3859 = vmatpush1.bf16.msra.mxu0 0
    %3860 = vmatprep.subr.bf16.mxu0 0
    %3861 = vmatpush1.bf16.msra.mxu0 0
    %3862 = vmatprep.subr.bf16.mxu0 0
    %3863 = vmatpush1.bf16.msra.mxu0 0
    %3864 = vmatprep.subr.bf16.mxu0 0
    %3865 = vmatpush1.bf16.msra.mxu0 0
    %3866 = vmatprep.subr.bf16.mxu0 0
    %3867 = vmatpush1.bf16.msra.mxu0 0
    %3868 = vmatprep.subr.bf16.mxu0 0
    %3869 = vmatpush1.bf16.msra.mxu0 %v3852
    %3870 = vmatprep.subr.bf16.mxu0 0
    %3871 = vmatpush2.bf16.msra.mxu0 0
    %3872 = vmatprep.subr.bf16.mxu0 0
    %3873 = vmatpush2.bf16.msra.mxu0 0
    %3874 = vmatprep.subr.bf16.mxu0 0
    %3875 = vmatpush2.bf16.msra.mxu0 0
    %3876 = vmatprep.subr.bf16.mxu0 0
    %3877 = vmatpush2.bf16.msra.mxu0 0
    %3878 = vmatprep.subr.bf16.mxu0 0
    %3879 = vmatpush2.bf16.msra.mxu0 0
    %3880 = vmatprep.subr.bf16.mxu0 0
    %3881 = vmatpush2.bf16.msra.mxu0 0
    %3882 = vmatprep.subr.bf16.mxu0 0
    %3883 = vmatpush2.bf16.msra.mxu0 0
    %3884 = vmatprep.subr.bf16.mxu0 0
    %3885 = vmatpush2.bf16.msra.mxu0 0
    %3886 = vmatprep.mubr.bf16.mxu0 0
    %3887 = vmatmul.mubr.bf16.gmra.mxu0 %v3849
    %v3888 = vpop.f32.mrf.mxu0
    %v3889 = vadd.f32 0.0, %v3888
    %v3890 = vpop.f32.mrf.mxu0
    %v3891 = vpop.f32.mrf.mxu0
    %v3892 = vadd.f32 0.0, %v3891
    %v3893 = vpop.f32.mrf.mxu0
    %3894 = vdwg.mxu0
    %v3896 = vsel %vm3470, %v3411, 0
    %v3899 = vsel %vm3474, %v3463, 0
    %3901 = vmatprep.subr.bf16.mxu0 0
    %3902 = vmatpush1.bf16.msra.mxu0 0
    %3903 = vmatprep.subr.bf16.mxu0 0
    %3904 = vmatpush1.bf16.msra.mxu0 0
    %3905 = vmatprep.subr.bf16.mxu0 0
    %3906 = vmatpush1.bf16.msra.mxu0 0
    %3907 = vmatprep.subr.bf16.mxu0 0
    %3908 = vmatpush1.bf16.msra.mxu0 0
    %3909 = vmatprep.subr.bf16.mxu0 0
    %3910 = vmatpush1.bf16.msra.mxu0 0
    %3911 = vmatprep.subr.bf16.mxu0 0
    %3912 = vmatpush1.bf16.msra.mxu0 0
    %3913 = vmatprep.subr.bf16.mxu0 0
    %3914 = vmatpush1.bf16.msra.mxu0 0
    %3915 = vmatprep.subr.bf16.mxu0 0
    %3916 = vmatpush1.bf16.msra.mxu0 %v3899
    %3917 = vmatprep.subr.bf16.mxu0 0
    %3918 = vmatpush2.bf16.msra.mxu0 0
    %3919 = vmatprep.subr.bf16.mxu0 0
    %3920 = vmatpush2.bf16.msra.mxu0 0
    %3921 = vmatprep.subr.bf16.mxu0 0
    %3922 = vmatpush2.bf16.msra.mxu0 0
    %3923 = vmatprep.subr.bf16.mxu0 0
    %3924 = vmatpush2.bf16.msra.mxu0 0
    %3925 = vmatprep.subr.bf16.mxu0 0
    %3926 = vmatpush2.bf16.msra.mxu0 0
    %3927 = vmatprep.subr.bf16.mxu0 0
    %3928 = vmatpush2.bf16.msra.mxu0 0
    %3929 = vmatprep.subr.bf16.mxu0 0
    %3930 = vmatpush2.bf16.msra.mxu0 0
    %3931 = vmatprep.subr.bf16.mxu0 0
    %3932 = vmatpush2.bf16.msra.mxu0 0
    %3933 = vmatprep.mubr.bf16.mxu0 0
    %3934 = vmatmul.mubr.bf16.gmra.mxu0 %v3896
    %v3935 = vpop.f32.mrf.mxu0
    %v3936 = vadd.f32 0.0, %v3935
    %v3937 = vpop.f32.mrf.mxu0
    %v3938 = vpop.f32.mrf.mxu0
    %v3939 = vadd.f32 0.0, %v3938
    %v3940 = vpop.f32.mrf.mxu0
    %3941 = vdwg.mxu0
    %v3943 = vsel %vm3470, %v3415, 0
    %v3946 = vsel %vm3474, %v3464, 0
    %3948 = vmatprep.subr.bf16.mxu0 0
    %3949 = vmatpush1.bf16.msra.mxu0 0
    %3950 = vmatprep.subr.bf16.mxu0 0
    %3951 = vmatpush1.bf16.msra.mxu0 0
    %3952 = vmatprep.subr.bf16.mxu0 0
    %3953 = vmatpush1.bf16.msra.mxu0 0
    %3954 = vmatprep.subr.bf16.mxu0 0
    %3955 = vmatpush1.bf16.msra.mxu0 0
    %3956 = vmatprep.subr.bf16.mxu0 0
    %3957 = vmatpush1.bf16.msra.mxu0 0
    %3958 = vmatprep.subr.bf16.mxu0 0
    %3959 = vmatpush1.bf16.msra.mxu0 0
    %3960 = vmatprep.subr.bf16.mxu0 0
    %3961 = vmatpush1.bf16.msra.mxu0 0
    %3962 = vmatprep.subr.bf16.mxu0 0
    %3963 = vmatpush1.bf16.msra.mxu0 %v3946
    %3964 = vmatprep.subr.bf16.mxu0 0
    %3965 = vmatpush2.bf16.msra.mxu0 0
    %3966 = vmatprep.subr.bf16.mxu0 0
    %3967 = vmatpush2.bf16.msra.mxu0 0
    %3968 = vmatprep.subr.bf16.mxu0 0
    %3969 = vmatpush2.bf16.msra.mxu0 0
    %3970 = vmatprep.subr.bf16.mxu0 0
    %3971 = vmatpush2.bf16.msra.mxu0 0
    %3972 = vmatprep.subr.bf16.mxu0 0
    %3973 = vmatpush2.bf16.msra.mxu0 0
    %3974 = vmatprep.subr.bf16.mxu0 0
    %3975 = vmatpush2.bf16.msra.mxu0 0
    %3976 = vmatprep.subr.bf16.mxu0 0
    %3977 = vmatpush2.bf16.msra.mxu0 0
    %3978 = vmatprep.subr.bf16.mxu0 0
    %3979 = vmatpush2.bf16.msra.mxu0 0
    %3980 = vmatprep.mubr.bf16.mxu0 0
    %3981 = vmatmul.mubr.bf16.gmra.mxu0 %v3943
    %v3982 = vpop.f32.mrf.mxu0
    %v3983 = vadd.f32 0.0, %v3982
    %v3984 = vpop.f32.mrf.mxu0
    %v3985 = vpop.f32.mrf.mxu0
    %v3986 = vadd.f32 0.0, %v3985
    %v3987 = vpop.f32.mrf.mxu0
    %3988 = vdwg.mxu0
    %v3990 = vsel %vm3470, %v3419, 0
    %v3993 = vsel %vm3474, %v3465, 0
    %3995 = vmatprep.subr.bf16.mxu0 0
    %3996 = vmatpush1.bf16.msra.mxu0 0
    %3997 = vmatprep.subr.bf16.mxu0 0
    %3998 = vmatpush1.bf16.msra.mxu0 0
    %3999 = vmatprep.subr.bf16.mxu0 0
    %4000 = vmatpush1.bf16.msra.mxu0 0
    %4001 = vmatprep.subr.bf16.mxu0 0
    %4002 = vmatpush1.bf16.msra.mxu0 0
    %4003 = vmatprep.subr.bf16.mxu0 0
    %4004 = vmatpush1.bf16.msra.mxu0 0
    %4005 = vmatprep.subr.bf16.mxu0 0
    %4006 = vmatpush1.bf16.msra.mxu0 0
    %4007 = vmatprep.subr.bf16.mxu0 0
    %4008 = vmatpush1.bf16.msra.mxu0 0
    %4009 = vmatprep.subr.bf16.mxu0 0
    %4010 = vmatpush1.bf16.msra.mxu0 %v3993
    %4011 = vmatprep.subr.bf16.mxu0 0
    %4012 = vmatpush2.bf16.msra.mxu0 0
    %4013 = vmatprep.subr.bf16.mxu0 0
    %4014 = vmatpush2.bf16.msra.mxu0 0
    %4015 = vmatprep.subr.bf16.mxu0 0
    %4016 = vmatpush2.bf16.msra.mxu0 0
    %4017 = vmatprep.subr.bf16.mxu0 0
    %4018 = vmatpush2.bf16.msra.mxu0 0
    %4019 = vmatprep.subr.bf16.mxu0 0
    %4020 = vmatpush2.bf16.msra.mxu0 0
    %4021 = vmatprep.subr.bf16.mxu0 0
    %4022 = vmatpush2.bf16.msra.mxu0 0
    %4023 = vmatprep.subr.bf16.mxu0 0
    %4024 = vmatpush2.bf16.msra.mxu0 0
    %4025 = vmatprep.subr.bf16.mxu0 0
    %4026 = vmatpush2.bf16.msra.mxu0 0
    %4027 = vmatprep.mubr.bf16.mxu0 0
    %4028 = vmatmul.mubr.bf16.gmra.mxu0 %v3990
    %v4029 = vpop.f32.mrf.mxu0
    %v4030 = vadd.f32 0.0, %v4029
    %v4031 = vpop.f32.mrf.mxu0
    %v4032 = vpop.f32.mrf.mxu0
    %v4033 = vadd.f32 0.0, %v4032
    %v4034 = vpop.f32.mrf.mxu0
    %4035 = vdwg.mxu0
    %v4037 = vsel %vm3470, %v3423, 0
    %v4040 = vsel %vm3474, %v3466, 0
    %4042 = vmatprep.subr.bf16.mxu0 0
    %4043 = vmatpush1.bf16.msra.mxu0 0
    %4044 = vmatprep.subr.bf16.mxu0 0
    %4045 = vmatpush1.bf16.msra.mxu0 0
    %4046 = vmatprep.subr.bf16.mxu0 0
    %4047 = vmatpush1.bf16.msra.mxu0 0
    %4048 = vmatprep.subr.bf16.mxu0 0
    %4049 = vmatpush1.bf16.msra.mxu0 0
    %4050 = vmatprep.subr.bf16.mxu0 0
    %4051 = vmatpush1.bf16.msra.mxu0 0
    %4052 = vmatprep.subr.bf16.mxu0 0
    %4053 = vmatpush1.bf16.msra.mxu0 0
    %4054 = vmatprep.subr.bf16.mxu0 0
    %4055 = vmatpush1.bf16.msra.mxu0 0
    %4056 = vmatprep.subr.bf16.mxu0 0
    %4057 = vmatpush1.bf16.msra.mxu0 %v4040
    %4058 = vmatprep.subr.bf16.mxu0 0
    %4059 = vmatpush2.bf16.msra.mxu0 0
    %4060 = vmatprep.subr.bf16.mxu0 0
    %4061 = vmatpush2.bf16.msra.mxu0 0
    %4062 = vmatprep.subr.bf16.mxu0 0
    %4063 = vmatpush2.bf16.msra.mxu0 0
    %4064 = vmatprep.subr.bf16.mxu0 0
    %4065 = vmatpush2.bf16.msra.mxu0 0
    %4066 = vmatprep.subr.bf16.mxu0 0
    %4067 = vmatpush2.bf16.msra.mxu0 0
    %4068 = vmatprep.subr.bf16.mxu0 0
    %4069 = vmatpush2.bf16.msra.mxu0 0
    %4070 = vmatprep.subr.bf16.mxu0 0
    %4071 = vmatpush2.bf16.msra.mxu0 0
    %4072 = vmatprep.subr.bf16.mxu0 0
    %4073 = vmatpush2.bf16.msra.mxu0 0
    %4074 = vmatprep.mubr.bf16.mxu0 0
    %4075 = vmatmul.mubr.bf16.gmra.mxu0 %v4037
    %v4076 = vpop.f32.mrf.mxu0
    %v4077 = vadd.f32 0.0, %v4076
    %v4078 = vpop.f32.mrf.mxu0
    %v4079 = vpop.f32.mrf.mxu0
    %v4080 = vadd.f32 0.0, %v4079
    %v4081 = vpop.f32.mrf.mxu0
    %4082 = vdwg.mxu0
    %v4084 = vsel %vm3470, %v3427, 0
    %v4087 = vsel %vm3474, %v3467, 0
    %4089 = vmatprep.subr.bf16.mxu0 0
    %4090 = vmatpush1.bf16.msra.mxu0 0
    %4091 = vmatprep.subr.bf16.mxu0 0
    %4092 = vmatpush1.bf16.msra.mxu0 0
    %4093 = vmatprep.subr.bf16.mxu0 0
    %4094 = vmatpush1.bf16.msra.mxu0 0
    %4095 = vmatprep.subr.bf16.mxu0 0
    %4096 = vmatpush1.bf16.msra.mxu0 0
    %4097 = vmatprep.subr.bf16.mxu0 0
    %4098 = vmatpush1.bf16.msra.mxu0 0
    %4099 = vmatprep.subr.bf16.mxu0 0
    %4100 = vmatpush1.bf16.msra.mxu0 0
    %4101 = vmatprep.subr.bf16.mxu0 0
    %4102 = vmatpush1.bf16.msra.mxu0 0
    %4103 = vmatprep.subr.bf16.mxu0 0
    %4104 = vmatpush1.bf16.msra.mxu0 %v4087
    %4105 = vmatprep.subr.bf16.mxu0 0
    %4106 = vmatpush2.bf16.msra.mxu0 0
    %4107 = vmatprep.subr.bf16.mxu0 0
    %4108 = vmatpush2.bf16.msra.mxu0 0
    %4109 = vmatprep.subr.bf16.mxu0 0
    %4110 = vmatpush2.bf16.msra.mxu0 0
    %4111 = vmatprep.subr.bf16.mxu0 0
    %4112 = vmatpush2.bf16.msra.mxu0 0
    %4113 = vmatprep.subr.bf16.mxu0 0
    %4114 = vmatpush2.bf16.msra.mxu0 0
    %4115 = vmatprep.subr.bf16.mxu0 0
    %4116 = vmatpush2.bf16.msra.mxu0 0
    %4117 = vmatprep.subr.bf16.mxu0 0
    %4118 = vmatpush2.bf16.msra.mxu0 0
    %4119 = vmatprep.subr.bf16.mxu0 0
    %4120 = vmatpush2.bf16.msra.mxu0 0
    %4121 = vmatprep.mubr.bf16.mxu0 0
    %4122 = vmatmul.mubr.bf16.gmra.mxu0 %v4084
    %v4123 = vpop.f32.mrf.mxu0
    %v4124 = vadd.f32 0.0, %v4123
    %v4125 = vpop.f32.mrf.mxu0
    %v4126 = vpop.f32.mrf.mxu0
    %v4127 = vadd.f32 0.0, %v4126
    %v4128 = vpop.f32.mrf.mxu0
    %4129 = vdwg.mxu0
    %v4131 = vsel %vm3470, %v3431, 0
    %v4134 = vsel %vm3474, %v3468, 0
    %4136 = vmatprep.subr.bf16.mxu0 0
    %4137 = vmatpush1.bf16.msra.mxu0 0
    %4138 = vmatprep.subr.bf16.mxu0 0
    %4139 = vmatpush1.bf16.msra.mxu0 0
    %4140 = vmatprep.subr.bf16.mxu0 0
    %4141 = vmatpush1.bf16.msra.mxu0 0
    %4142 = vmatprep.subr.bf16.mxu0 0
    %4143 = vmatpush1.bf16.msra.mxu0 0
    %4144 = vmatprep.subr.bf16.mxu0 0
    %4145 = vmatpush1.bf16.msra.mxu0 0
    %4146 = vmatprep.subr.bf16.mxu0 0
    %4147 = vmatpush1.bf16.msra.mxu0 0
    %4148 = vmatprep.subr.bf16.mxu0 0
    %4149 = vmatpush1.bf16.msra.mxu0 0
    %4150 = vmatprep.subr.bf16.mxu0 0
    %4151 = vmatpush1.bf16.msra.mxu0 %v4134
    %4152 = vmatprep.subr.bf16.mxu0 0
    %4153 = vmatpush2.bf16.msra.mxu0 0
    %4154 = vmatprep.subr.bf16.mxu0 0
    %4155 = vmatpush2.bf16.msra.mxu0 0
    %4156 = vmatprep.subr.bf16.mxu0 0
    %4157 = vmatpush2.bf16.msra.mxu0 0
    %4158 = vmatprep.subr.bf16.mxu0 0
    %4159 = vmatpush2.bf16.msra.mxu0 0
    %4160 = vmatprep.subr.bf16.mxu0 0
    %4161 = vmatpush2.bf16.msra.mxu0 0
    %4162 = vmatprep.subr.bf16.mxu0 0
    %4163 = vmatpush2.bf16.msra.mxu0 0
    %4164 = vmatprep.subr.bf16.mxu0 0
    %4165 = vmatpush2.bf16.msra.mxu0 0
    %4166 = vmatprep.subr.bf16.mxu0 0
    %4167 = vmatpush2.bf16.msra.mxu0 0
    %4168 = vmatprep.mubr.bf16.mxu0 0
    %4169 = vmatmul.mubr.bf16.gmra.mxu0 %v4131
    %v4170 = vpop.f32.mrf.mxu0
    %v4171 = vadd.f32 0.0, %v4170
    %v4172 = vpop.f32.mrf.mxu0
    %v4173 = vpop.f32.mrf.mxu0
    %v4174 = vadd.f32 0.0, %v4173
    %v4175 = vpop.f32.mrf.mxu0
    %4176 = vdwg.mxu0
    %v4178 = vsel %vm3470, %v3435, 0
    %v4181 = vsel %vm3474, %v3469, 0
    %4183 = vmatprep.subr.bf16.mxu0 0
    %4184 = vmatpush1.bf16.msra.mxu0 0
    %4185 = vmatprep.subr.bf16.mxu0 0
    %4186 = vmatpush1.bf16.msra.mxu0 0
    %4187 = vmatprep.subr.bf16.mxu0 0
    %4188 = vmatpush1.bf16.msra.mxu0 0
    %4189 = vmatprep.subr.bf16.mxu0 0
    %4190 = vmatpush1.bf16.msra.mxu0 0
    %4191 = vmatprep.subr.bf16.mxu0 0
    %4192 = vmatpush1.bf16.msra.mxu0 0
    %4193 = vmatprep.subr.bf16.mxu0 0
    %4194 = vmatpush1.bf16.msra.mxu0 0
    %4195 = vmatprep.subr.bf16.mxu0 0
    %4196 = vmatpush1.bf16.msra.mxu0 0
    %4197 = vmatprep.subr.bf16.mxu0 0
    %4198 = vmatpush1.bf16.msra.mxu0 %v4181
    %4199 = vmatprep.subr.bf16.mxu0 0
    %4200 = vmatpush2.bf16.msra.mxu0 0
    %4201 = vmatprep.subr.bf16.mxu0 0
    %4202 = vmatpush2.bf16.msra.mxu0 0
    %4203 = vmatprep.subr.bf16.mxu0 0
    %4204 = vmatpush2.bf16.msra.mxu0 0
    %4205 = vmatprep.subr.bf16.mxu0 0
    %4206 = vmatpush2.bf16.msra.mxu0 0
    %4207 = vmatprep.subr.bf16.mxu0 0
    %4208 = vmatpush2.bf16.msra.mxu0 0
    %4209 = vmatprep.subr.bf16.mxu0 0
    %4210 = vmatpush2.bf16.msra.mxu0 0
    %4211 = vmatprep.subr.bf16.mxu0 0
    %4212 = vmatpush2.bf16.msra.mxu0 0
    %4213 = vmatprep.subr.bf16.mxu0 0
    %4214 = vmatpush2.bf16.msra.mxu0 0
    %4215 = vmatprep.mubr.bf16.mxu0 0
    %4216 = vmatmul.mubr.bf16.gmra.mxu0 %v4178
    %v4217 = vpop.f32.mrf.mxu0
    %v4218 = vadd.f32 0.0, %v4217
    %v4219 = vpop.f32.mrf.mxu0
    %v4220 = vpop.f32.mrf.mxu0
    %v4221 = vadd.f32 0.0, %v4220
    %v4222 = vpop.f32.mrf.mxu0
    %4223 = vdwg.mxu0
    %v4225 = vsel %vm3470, %v3374, 0
    %v4228 = vsel %vm3474, %v3438, 0
    %4230 = vmatprep.subr.bf16.mxu0 0
    %4231 = vmatpush1.bf16.msra.mxu0 0
    %4232 = vmatprep.subr.bf16.mxu0 0
    %4233 = vmatpush1.bf16.msra.mxu0 0
    %4234 = vmatprep.subr.bf16.mxu0 0
    %4235 = vmatpush1.bf16.msra.mxu0 0
    %4236 = vmatprep.subr.bf16.mxu0 0
    %4237 = vmatpush1.bf16.msra.mxu0 0
    %4238 = vmatprep.subr.bf16.mxu0 0
    %4239 = vmatpush1.bf16.msra.mxu0 0
    %4240 = vmatprep.subr.bf16.mxu0 0
    %4241 = vmatpush1.bf16.msra.mxu0 0
    %4242 = vmatprep.subr.bf16.mxu0 0
    %4243 = vmatpush1.bf16.msra.mxu0 0
    %4244 = vmatprep.subr.bf16.mxu0 0
    %4245 = vmatpush1.bf16.msra.mxu0 %v4228
    %4246 = vmatprep.subr.bf16.mxu0 0
    %4247 = vmatpush2.bf16.msra.mxu0 0
    %4248 = vmatprep.subr.bf16.mxu0 0
    %4249 = vmatpush2.bf16.msra.mxu0 0
    %4250 = vmatprep.subr.bf16.mxu0 0
    %4251 = vmatpush2.bf16.msra.mxu0 0
    %4252 = vmatprep.subr.bf16.mxu0 0
    %4253 = vmatpush2.bf16.msra.mxu0 0
    %4254 = vmatprep.subr.bf16.mxu0 0
    %4255 = vmatpush2.bf16.msra.mxu0 0
    %4256 = vmatprep.subr.bf16.mxu0 0
    %4257 = vmatpush2.bf16.msra.mxu0 0
    %4258 = vmatprep.subr.bf16.mxu0 0
    %4259 = vmatpush2.bf16.msra.mxu0 0
    %4260 = vmatprep.subr.bf16.mxu0 0
    %4261 = vmatpush2.bf16.msra.mxu0 0
    %4262 = vmatprep.mubr.bf16.mxu0 0
    %4263 = vmatmul.mubr.bf16.gmra.mxu0 %v4225
    %v4264 = vpop.f32.mrf.mxu0
    %v4265 = vadd.f32 %v3513, %v4264
    %v4266 = vpop.f32.mrf.mxu0
    %v4267 = vpop.f32.mrf.mxu0
    %v4268 = vadd.f32 %v3516, %v4267
    %v4269 = vpop.f32.mrf.mxu0
    %4270 = vdwg.mxu0
    %v4272 = vsel %vm3470, %v3378, 0
    %v4275 = vsel %vm3474, %v3439, 0
    %4277 = vmatprep.subr.bf16.mxu0 0
    %4278 = vmatpush1.bf16.msra.mxu0 0
    %4279 = vmatprep.subr.bf16.mxu0 0
    %4280 = vmatpush1.bf16.msra.mxu0 0
    %4281 = vmatprep.subr.bf16.mxu0 0
    %4282 = vmatpush1.bf16.msra.mxu0 0
    %4283 = vmatprep.subr.bf16.mxu0 0
    %4284 = vmatpush1.bf16.msra.mxu0 0
    %4285 = vmatprep.subr.bf16.mxu0 0
    %4286 = vmatpush1.bf16.msra.mxu0 0
    %4287 = vmatprep.subr.bf16.mxu0 0
    %4288 = vmatpush1.bf16.msra.mxu0 0
    %4289 = vmatprep.subr.bf16.mxu0 0
    %4290 = vmatpush1.bf16.msra.mxu0 0
    %4291 = vmatprep.subr.bf16.mxu0 0
    %4292 = vmatpush1.bf16.msra.mxu0 %v4275
    %4293 = vmatprep.subr.bf16.mxu0 0
    %4294 = vmatpush2.bf16.msra.mxu0 0
    %4295 = vmatprep.subr.bf16.mxu0 0
    %4296 = vmatpush2.bf16.msra.mxu0 0
    %4297 = vmatprep.subr.bf16.mxu0 0
    %4298 = vmatpush2.bf16.msra.mxu0 0
    %4299 = vmatprep.subr.bf16.mxu0 0
    %4300 = vmatpush2.bf16.msra.mxu0 0
    %4301 = vmatprep.subr.bf16.mxu0 0
    %4302 = vmatpush2.bf16.msra.mxu0 0
    %4303 = vmatprep.subr.bf16.mxu0 0
    %4304 = vmatpush2.bf16.msra.mxu0 0
    %4305 = vmatprep.subr.bf16.mxu0 0
    %4306 = vmatpush2.bf16.msra.mxu0 0
    %4307 = vmatprep.subr.bf16.mxu0 0
    %4308 = vmatpush2.bf16.msra.mxu0 0
    %4309 = vmatprep.mubr.bf16.mxu0 0
    %4310 = vmatmul.mubr.bf16.gmra.mxu0 %v4272
    %v4311 = vpop.f32.mrf.mxu0
    %v4312 = vadd.f32 %v3560, %v4311
    %v4313 = vpop.f32.mrf.mxu0
    %v4314 = vpop.f32.mrf.mxu0
    %v4315 = vadd.f32 %v3563, %v4314
    %v4316 = vpop.f32.mrf.mxu0
    %4317 = vdwg.mxu0
    %v4319 = vsel %vm3470, %v3382, 0
    %v4322 = vsel %vm3474, %v3440, 0
    %4324 = vmatprep.subr.bf16.mxu0 0
    %4325 = vmatpush1.bf16.msra.mxu0 0
    %4326 = vmatprep.subr.bf16.mxu0 0
    %4327 = vmatpush1.bf16.msra.mxu0 0
    %4328 = vmatprep.subr.bf16.mxu0 0
    %4329 = vmatpush1.bf16.msra.mxu0 0
    %4330 = vmatprep.subr.bf16.mxu0 0
    %4331 = vmatpush1.bf16.msra.mxu0 0
    %4332 = vmatprep.subr.bf16.mxu0 0
    %4333 = vmatpush1.bf16.msra.mxu0 0
    %4334 = vmatprep.subr.bf16.mxu0 0
    %4335 = vmatpush1.bf16.msra.mxu0 0
    %4336 = vmatprep.subr.bf16.mxu0 0
    %4337 = vmatpush1.bf16.msra.mxu0 0
    %4338 = vmatprep.subr.bf16.mxu0 0
    %4339 = vmatpush1.bf16.msra.mxu0 %v4322
    %4340 = vmatprep.subr.bf16.mxu0 0
    %4341 = vmatpush2.bf16.msra.mxu0 0
    %4342 = vmatprep.subr.bf16.mxu0 0
    %4343 = vmatpush2.bf16.msra.mxu0 0
    %4344 = vmatprep.subr.bf16.mxu0 0
    %4345 = vmatpush2.bf16.msra.mxu0 0
    %4346 = vmatprep.subr.bf16.mxu0 0
    %4347 = vmatpush2.bf16.msra.mxu0 0
    %4348 = vmatprep.subr.bf16.mxu0 0
    %4349 = vmatpush2.bf16.msra.mxu0 0
    %4350 = vmatprep.subr.bf16.mxu0 0
    %4351 = vmatpush2.bf16.msra.mxu0 0
    %4352 = vmatprep.subr.bf16.mxu0 0
    %4353 = vmatpush2.bf16.msra.mxu0 0
    %4354 = vmatprep.subr.bf16.mxu0 0
    %4355 = vmatpush2.bf16.msra.mxu0 0
    %4356 = vmatprep.mubr.bf16.mxu0 0
    %4357 = vmatmul.mubr.bf16.gmra.mxu0 %v4319
    %v4358 = vpop.f32.mrf.mxu0
    %v4359 = vadd.f32 %v3607, %v4358
    %v4360 = vpop.f32.mrf.mxu0
    %v4361 = vpop.f32.mrf.mxu0
    %v4362 = vadd.f32 %v3610, %v4361
    %v4363 = vpop.f32.mrf.mxu0
    %4364 = vdwg.mxu0
    %v4366 = vsel %vm3470, %v3386, 0
    %v4369 = vsel %vm3474, %v3441, 0
    %4371 = vmatprep.subr.bf16.mxu0 0
    %4372 = vmatpush1.bf16.msra.mxu0 0
    %4373 = vmatprep.subr.bf16.mxu0 0
    %4374 = vmatpush1.bf16.msra.mxu0 0
    %4375 = vmatprep.subr.bf16.mxu0 0
    %4376 = vmatpush1.bf16.msra.mxu0 0
    %4377 = vmatprep.subr.bf16.mxu0 0
    %4378 = vmatpush1.bf16.msra.mxu0 0
    %4379 = vmatprep.subr.bf16.mxu0 0
    %4380 = vmatpush1.bf16.msra.mxu0 0
    %4381 = vmatprep.subr.bf16.mxu0 0
    %4382 = vmatpush1.bf16.msra.mxu0 0
    %4383 = vmatprep.subr.bf16.mxu0 0
    %4384 = vmatpush1.bf16.msra.mxu0 0
    %4385 = vmatprep.subr.bf16.mxu0 0
    %4386 = vmatpush1.bf16.msra.mxu0 %v4369
    %4387 = vmatprep.subr.bf16.mxu0 0
    %4388 = vmatpush2.bf16.msra.mxu0 0
    %4389 = vmatprep.subr.bf16.mxu0 0
    %4390 = vmatpush2.bf16.msra.mxu0 0
    %4391 = vmatprep.subr.bf16.mxu0 0
    %4392 = vmatpush2.bf16.msra.mxu0 0
    %4393 = vmatprep.subr.bf16.mxu0 0
    %4394 = vmatpush2.bf16.msra.mxu0 0
    %4395 = vmatprep.subr.bf16.mxu0 0
    %4396 = vmatpush2.bf16.msra.mxu0 0
    %4397 = vmatprep.subr.bf16.mxu0 0
    %4398 = vmatpush2.bf16.msra.mxu0 0
    %4399 = vmatprep.subr.bf16.mxu0 0
    %4400 = vmatpush2.bf16.msra.mxu0 0
    %4401 = vmatprep.subr.bf16.mxu0 0
    %4402 = vmatpush2.bf16.msra.mxu0 0
    %4403 = vmatprep.mubr.bf16.mxu0 0
    %4404 = vmatmul.mubr.bf16.gmra.mxu0 %v4366
    %v4405 = vpop.f32.mrf.mxu0
    %v4406 = vadd.f32 %v3654, %v4405
    %v4407 = vpop.f32.mrf.mxu0
    %v4408 = vpop.f32.mrf.mxu0
    %v4409 = vadd.f32 %v3657, %v4408
    %v4410 = vpop.f32.mrf.mxu0
    %4411 = vdwg.mxu0
    %v4413 = vsel %vm3470, %v3390, 0
    %v4416 = vsel %vm3474, %v3442, 0
    %4418 = vmatprep.subr.bf16.mxu0 0
    %4419 = vmatpush1.bf16.msra.mxu0 0
    %4420 = vmatprep.subr.bf16.mxu0 0
    %4421 = vmatpush1.bf16.msra.mxu0 0
    %4422 = vmatprep.subr.bf16.mxu0 0
    %4423 = vmatpush1.bf16.msra.mxu0 0
    %4424 = vmatprep.subr.bf16.mxu0 0
    %4425 = vmatpush1.bf16.msra.mxu0 0
    %4426 = vmatprep.subr.bf16.mxu0 0
    %4427 = vmatpush1.bf16.msra.mxu0 0
    %4428 = vmatprep.subr.bf16.mxu0 0
    %4429 = vmatpush1.bf16.msra.mxu0 0
    %4430 = vmatprep.subr.bf16.mxu0 0
    %4431 = vmatpush1.bf16.msra.mxu0 0
    %4432 = vmatprep.subr.bf16.mxu0 0
    %4433 = vmatpush1.bf16.msra.mxu0 %v4416
    %4434 = vmatprep.subr.bf16.mxu0 0
    %4435 = vmatpush2.bf16.msra.mxu0 0
    %4436 = vmatprep.subr.bf16.mxu0 0
    %4437 = vmatpush2.bf16.msra.mxu0 0
    %4438 = vmatprep.subr.bf16.mxu0 0
    %4439 = vmatpush2.bf16.msra.mxu0 0
    %4440 = vmatprep.subr.bf16.mxu0 0
    %4441 = vmatpush2.bf16.msra.mxu0 0
    %4442 = vmatprep.subr.bf16.mxu0 0
    %4443 = vmatpush2.bf16.msra.mxu0 0
    %4444 = vmatprep.subr.bf16.mxu0 0
    %4445 = vmatpush2.bf16.msra.mxu0 0
    %4446 = vmatprep.subr.bf16.mxu0 0
    %4447 = vmatpush2.bf16.msra.mxu0 0
    %4448 = vmatprep.subr.bf16.mxu0 0
    %4449 = vmatpush2.bf16.msra.mxu0 0
    %4450 = vmatprep.mubr.bf16.mxu0 0
    %4451 = vmatmul.mubr.bf16.gmra.mxu0 %v4413
    %v4452 = vpop.f32.mrf.mxu0
    %v4453 = vadd.f32 %v3701, %v4452
    %v4454 = vpop.f32.mrf.mxu0
    %v4455 = vpop.f32.mrf.mxu0
    %v4456 = vadd.f32 %v3704, %v4455
    %v4457 = vpop.f32.mrf.mxu0
    %4458 = vdwg.mxu0
    %v4460 = vsel %vm3470, %v3394, 0
    %v4463 = vsel %vm3474, %v3443, 0
    %4465 = vmatprep.subr.bf16.mxu0 0
    %4466 = vmatpush1.bf16.msra.mxu0 0
    %4467 = vmatprep.subr.bf16.mxu0 0
    %4468 = vmatpush1.bf16.msra.mxu0 0
    %4469 = vmatprep.subr.bf16.mxu0 0
    %4470 = vmatpush1.bf16.msra.mxu0 0
    %4471 = vmatprep.subr.bf16.mxu0 0
    %4472 = vmatpush1.bf16.msra.mxu0 0
    %4473 = vmatprep.subr.bf16.mxu0 0
    %4474 = vmatpush1.bf16.msra.mxu0 0
    %4475 = vmatprep.subr.bf16.mxu0 0
    %4476 = vmatpush1.bf16.msra.mxu0 0
    %4477 = vmatprep.subr.bf16.mxu0 0
    %4478 = vmatpush1.bf16.msra.mxu0 0
    %4479 = vmatprep.subr.bf16.mxu0 0
    %4480 = vmatpush1.bf16.msra.mxu0 %v4463
    %4481 = vmatprep.subr.bf16.mxu0 0
    %4482 = vmatpush2.bf16.msra.mxu0 0
    %4483 = vmatprep.subr.bf16.mxu0 0
    %4484 = vmatpush2.bf16.msra.mxu0 0
    %4485 = vmatprep.subr.bf16.mxu0 0
    %4486 = vmatpush2.bf16.msra.mxu0 0
    %4487 = vmatprep.subr.bf16.mxu0 0
    %4488 = vmatpush2.bf16.msra.mxu0 0
    %4489 = vmatprep.subr.bf16.mxu0 0
    %4490 = vmatpush2.bf16.msra.mxu0 0
    %4491 = vmatprep.subr.bf16.mxu0 0
    %4492 = vmatpush2.bf16.msra.mxu0 0
    %4493 = vmatprep.subr.bf16.mxu0 0
    %4494 = vmatpush2.bf16.msra.mxu0 0
    %4495 = vmatprep.subr.bf16.mxu0 0
    %4496 = vmatpush2.bf16.msra.mxu0 0
    %4497 = vmatprep.mubr.bf16.mxu0 0
    %4498 = vmatmul.mubr.bf16.gmra.mxu0 %v4460
    %v4499 = vpop.f32.mrf.mxu0
    %v4500 = vadd.f32 %v3748, %v4499
    %v4501 = vpop.f32.mrf.mxu0
    %v4502 = vpop.f32.mrf.mxu0
    %v4503 = vadd.f32 %v3751, %v4502
    %v4504 = vpop.f32.mrf.mxu0
    %4505 = vdwg.mxu0
    %v4507 = vsel %vm3470, %v3398, 0
    %v4510 = vsel %vm3474, %v3444, 0
    %4512 = vmatprep.subr.bf16.mxu0 0
    %4513 = vmatpush1.bf16.msra.mxu0 0
    %4514 = vmatprep.subr.bf16.mxu0 0
    %4515 = vmatpush1.bf16.msra.mxu0 0
    %4516 = vmatprep.subr.bf16.mxu0 0
    %4517 = vmatpush1.bf16.msra.mxu0 0
    %4518 = vmatprep.subr.bf16.mxu0 0
    %4519 = vmatpush1.bf16.msra.mxu0 0
    %4520 = vmatprep.subr.bf16.mxu0 0
    %4521 = vmatpush1.bf16.msra.mxu0 0
    %4522 = vmatprep.subr.bf16.mxu0 0
    %4523 = vmatpush1.bf16.msra.mxu0 0
    %4524 = vmatprep.subr.bf16.mxu0 0
    %4525 = vmatpush1.bf16.msra.mxu0 0
    %4526 = vmatprep.subr.bf16.mxu0 0
    %4527 = vmatpush1.bf16.msra.mxu0 %v4510
    %4528 = vmatprep.subr.bf16.mxu0 0
    %4529 = vmatpush2.bf16.msra.mxu0 0
    %4530 = vmatprep.subr.bf16.mxu0 0
    %4531 = vmatpush2.bf16.msra.mxu0 0
    %4532 = vmatprep.subr.bf16.mxu0 0
    %4533 = vmatpush2.bf16.msra.mxu0 0
    %4534 = vmatprep.subr.bf16.mxu0 0
    %4535 = vmatpush2.bf16.msra.mxu0 0
    %4536 = vmatprep.subr.bf16.mxu0 0
    %4537 = vmatpush2.bf16.msra.mxu0 0
    %4538 = vmatprep.subr.bf16.mxu0 0
    %4539 = vmatpush2.bf16.msra.mxu0 0
    %4540 = vmatprep.subr.bf16.mxu0 0
    %4541 = vmatpush2.bf16.msra.mxu0 0
    %4542 = vmatprep.subr.bf16.mxu0 0
    %4543 = vmatpush2.bf16.msra.mxu0 0
    %4544 = vmatprep.mubr.bf16.mxu0 0
    %4545 = vmatmul.mubr.bf16.gmra.mxu0 %v4507
    %v4546 = vpop.f32.mrf.mxu0
    %v4547 = vadd.f32 %v3795, %v4546
    %v4548 = vpop.f32.mrf.mxu0
    %v4549 = vpop.f32.mrf.mxu0
    %v4550 = vadd.f32 %v3798, %v4549
    %v4551 = vpop.f32.mrf.mxu0
    %4552 = vdwg.mxu0
    %v4554 = vsel %vm3470, %v3402, 0
    %v4557 = vsel %vm3474, %v3445, 0
    %4559 = vmatprep.subr.bf16.mxu0 0
    %4560 = vmatpush1.bf16.msra.mxu0 0
    %4561 = vmatprep.subr.bf16.mxu0 0
    %4562 = vmatpush1.bf16.msra.mxu0 0
    %4563 = vmatprep.subr.bf16.mxu0 0
    %4564 = vmatpush1.bf16.msra.mxu0 0
    %4565 = vmatprep.subr.bf16.mxu0 0
    %4566 = vmatpush1.bf16.msra.mxu0 0
    %4567 = vmatprep.subr.bf16.mxu0 0
    %4568 = vmatpush1.bf16.msra.mxu0 0
    %4569 = vmatprep.subr.bf16.mxu0 0
    %4570 = vmatpush1.bf16.msra.mxu0 0
    %4571 = vmatprep.subr.bf16.mxu0 0
    %4572 = vmatpush1.bf16.msra.mxu0 0
    %4573 = vmatprep.subr.bf16.mxu0 0
    %4574 = vmatpush1.bf16.msra.mxu0 %v4557
    %4575 = vmatprep.subr.bf16.mxu0 0
    %4576 = vmatpush2.bf16.msra.mxu0 0
    %4577 = vmatprep.subr.bf16.mxu0 0
    %4578 = vmatpush2.bf16.msra.mxu0 0
    %4579 = vmatprep.subr.bf16.mxu0 0
    %4580 = vmatpush2.bf16.msra.mxu0 0
    %4581 = vmatprep.subr.bf16.mxu0 0
    %4582 = vmatpush2.bf16.msra.mxu0 0
    %4583 = vmatprep.subr.bf16.mxu0 0
    %4584 = vmatpush2.bf16.msra.mxu0 0
    %4585 = vmatprep.subr.bf16.mxu0 0
    %4586 = vmatpush2.bf16.msra.mxu0 0
    %4587 = vmatprep.subr.bf16.mxu0 0
    %4588 = vmatpush2.bf16.msra.mxu0 0
    %4589 = vmatprep.subr.bf16.mxu0 0
    %4590 = vmatpush2.bf16.msra.mxu0 0
    %4591 = vmatprep.mubr.bf16.mxu0 0
    %4592 = vmatmul.mubr.bf16.gmra.mxu0 %v4554
    %v4593 = vpop.f32.mrf.mxu0
    %v4594 = vadd.f32 %v3842, %v4593
    %v4595 = vpop.f32.mrf.mxu0
    %v4596 = vpop.f32.mrf.mxu0
    %v4597 = vadd.f32 %v3845, %v4596
    %v4598 = vpop.f32.mrf.mxu0
    %4599 = vdwg.mxu0
    %v4601 = vsel %vm3470, %v3406, 0
    %v4604 = vsel %vm3474, %v3446, 0
    %4606 = vmatprep.subr.bf16.mxu0 0
    %4607 = vmatpush1.bf16.msra.mxu0 0
    %4608 = vmatprep.subr.bf16.mxu0 0
    %4609 = vmatpush1.bf16.msra.mxu0 0
    %4610 = vmatprep.subr.bf16.mxu0 0
    %4611 = vmatpush1.bf16.msra.mxu0 0
    %4612 = vmatprep.subr.bf16.mxu0 0
    %4613 = vmatpush1.bf16.msra.mxu0 0
    %4614 = vmatprep.subr.bf16.mxu0 0
    %4615 = vmatpush1.bf16.msra.mxu0 0
    %4616 = vmatprep.subr.bf16.mxu0 0
    %4617 = vmatpush1.bf16.msra.mxu0 0
    %4618 = vmatprep.subr.bf16.mxu0 0
    %4619 = vmatpush1.bf16.msra.mxu0 0
    %4620 = vmatprep.subr.bf16.mxu0 0
    %4621 = vmatpush1.bf16.msra.mxu0 %v4604
    %4622 = vmatprep.subr.bf16.mxu0 0
    %4623 = vmatpush2.bf16.msra.mxu0 0
    %4624 = vmatprep.subr.bf16.mxu0 0
    %4625 = vmatpush2.bf16.msra.mxu0 0
    %4626 = vmatprep.subr.bf16.mxu0 0
    %4627 = vmatpush2.bf16.msra.mxu0 0
    %4628 = vmatprep.subr.bf16.mxu0 0
    %4629 = vmatpush2.bf16.msra.mxu0 0
    %4630 = vmatprep.subr.bf16.mxu0 0
    %4631 = vmatpush2.bf16.msra.mxu0 0
    %4632 = vmatprep.subr.bf16.mxu0 0
    %4633 = vmatpush2.bf16.msra.mxu0 0
    %4634 = vmatprep.subr.bf16.mxu0 0
    %4635 = vmatpush2.bf16.msra.mxu0 0
    %4636 = vmatprep.subr.bf16.mxu0 0
    %4637 = vmatpush2.bf16.msra.mxu0 0
    %4638 = vmatprep.mubr.bf16.mxu0 0
    %4639 = vmatmul.mubr.bf16.gmra.mxu0 %v4601
    %v4640 = vpop.f32.mrf.mxu0
    %v4641 = vadd.f32 %v3889, %v4640
    %v4642 = vpop.f32.mrf.mxu0
    %v4643 = vpop.f32.mrf.mxu0
    %v4644 = vadd.f32 %v3892, %v4643
    %v4645 = vpop.f32.mrf.mxu0
    %4646 = vdwg.mxu0
    %v4648 = vsel %vm3470, %v3410, 0
    %v4651 = vsel %vm3474, %v3447, 0
    %4653 = vmatprep.subr.bf16.mxu0 0
    %4654 = vmatpush1.bf16.msra.mxu0 0
    %4655 = vmatprep.subr.bf16.mxu0 0
    %4656 = vmatpush1.bf16.msra.mxu0 0
    %4657 = vmatprep.subr.bf16.mxu0 0
    %4658 = vmatpush1.bf16.msra.mxu0 0
    %4659 = vmatprep.subr.bf16.mxu0 0
    %4660 = vmatpush1.bf16.msra.mxu0 0
    %4661 = vmatprep.subr.bf16.mxu0 0
    %4662 = vmatpush1.bf16.msra.mxu0 0
    %4663 = vmatprep.subr.bf16.mxu0 0
    %4664 = vmatpush1.bf16.msra.mxu0 0
    %4665 = vmatprep.subr.bf16.mxu0 0
    %4666 = vmatpush1.bf16.msra.mxu0 0
    %4667 = vmatprep.subr.bf16.mxu0 0
    %4668 = vmatpush1.bf16.msra.mxu0 %v4651
    %4669 = vmatprep.subr.bf16.mxu0 0
    %4670 = vmatpush2.bf16.msra.mxu0 0
    %4671 = vmatprep.subr.bf16.mxu0 0
    %4672 = vmatpush2.bf16.msra.mxu0 0
    %4673 = vmatprep.subr.bf16.mxu0 0
    %4674 = vmatpush2.bf16.msra.mxu0 0
    %4675 = vmatprep.subr.bf16.mxu0 0
    %4676 = vmatpush2.bf16.msra.mxu0 0
    %4677 = vmatprep.subr.bf16.mxu0 0
    %4678 = vmatpush2.bf16.msra.mxu0 0
    %4679 = vmatprep.subr.bf16.mxu0 0
    %4680 = vmatpush2.bf16.msra.mxu0 0
    %4681 = vmatprep.subr.bf16.mxu0 0
    %4682 = vmatpush2.bf16.msra.mxu0 0
    %4683 = vmatprep.subr.bf16.mxu0 0
    %4684 = vmatpush2.bf16.msra.mxu0 0
    %4685 = vmatprep.mubr.bf16.mxu0 0
    %4686 = vmatmul.mubr.bf16.gmra.mxu0 %v4648
    %v4687 = vpop.f32.mrf.mxu0
    %v4688 = vadd.f32 %v3936, %v4687
    %v4689 = vpop.f32.mrf.mxu0
    %v4690 = vpop.f32.mrf.mxu0
    %v4691 = vadd.f32 %v3939, %v4690
    %v4692 = vpop.f32.mrf.mxu0
    %4693 = vdwg.mxu0
    %v4695 = vsel %vm3470, %v3414, 0
    %v4698 = vsel %vm3474, %v3448, 0
    %4700 = vmatprep.subr.bf16.mxu0 0
    %4701 = vmatpush1.bf16.msra.mxu0 0
    %4702 = vmatprep.subr.bf16.mxu0 0
    %4703 = vmatpush1.bf16.msra.mxu0 0
    %4704 = vmatprep.subr.bf16.mxu0 0
    %4705 = vmatpush1.bf16.msra.mxu0 0
    %4706 = vmatprep.subr.bf16.mxu0 0
    %4707 = vmatpush1.bf16.msra.mxu0 0
    %4708 = vmatprep.subr.bf16.mxu0 0
    %4709 = vmatpush1.bf16.msra.mxu0 0
    %4710 = vmatprep.subr.bf16.mxu0 0
    %4711 = vmatpush1.bf16.msra.mxu0 0
    %4712 = vmatprep.subr.bf16.mxu0 0
    %4713 = vmatpush1.bf16.msra.mxu0 0
    %4714 = vmatprep.subr.bf16.mxu0 0
    %4715 = vmatpush1.bf16.msra.mxu0 %v4698
    %4716 = vmatprep.subr.bf16.mxu0 0
    %4717 = vmatpush2.bf16.msra.mxu0 0
    %4718 = vmatprep.subr.bf16.mxu0 0
    %4719 = vmatpush2.bf16.msra.mxu0 0
    %4720 = vmatprep.subr.bf16.mxu0 0
    %4721 = vmatpush2.bf16.msra.mxu0 0
    %4722 = vmatprep.subr.bf16.mxu0 0
    %4723 = vmatpush2.bf16.msra.mxu0 0
    %4724 = vmatprep.subr.bf16.mxu0 0
    %4725 = vmatpush2.bf16.msra.mxu0 0
    %4726 = vmatprep.subr.bf16.mxu0 0
    %4727 = vmatpush2.bf16.msra.mxu0 0
    %4728 = vmatprep.subr.bf16.mxu0 0
    %4729 = vmatpush2.bf16.msra.mxu0 0
    %4730 = vmatprep.subr.bf16.mxu0 0
    %4731 = vmatpush2.bf16.msra.mxu0 0
    %4732 = vmatprep.mubr.bf16.mxu0 0
    %4733 = vmatmul.mubr.bf16.gmra.mxu0 %v4695
    %v4734 = vpop.f32.mrf.mxu0
    %v4735 = vadd.f32 %v3983, %v4734
    %v4736 = vpop.f32.mrf.mxu0
    %v4737 = vpop.f32.mrf.mxu0
    %v4738 = vadd.f32 %v3986, %v4737
    %v4739 = vpop.f32.mrf.mxu0
    %4740 = vdwg.mxu0
    %v4742 = vsel %vm3470, %v3418, 0
    %v4745 = vsel %vm3474, %v3449, 0
    %4747 = vmatprep.subr.bf16.mxu0 0
    %4748 = vmatpush1.bf16.msra.mxu0 0
    %4749 = vmatprep.subr.bf16.mxu0 0
    %4750 = vmatpush1.bf16.msra.mxu0 0
    %4751 = vmatprep.subr.bf16.mxu0 0
    %4752 = vmatpush1.bf16.msra.mxu0 0
    %4753 = vmatprep.subr.bf16.mxu0 0
    %4754 = vmatpush1.bf16.msra.mxu0 0
    %4755 = vmatprep.subr.bf16.mxu0 0
    %4756 = vmatpush1.bf16.msra.mxu0 0
    %4757 = vmatprep.subr.bf16.mxu0 0
    %4758 = vmatpush1.bf16.msra.mxu0 0
    %4759 = vmatprep.subr.bf16.mxu0 0
    %4760 = vmatpush1.bf16.msra.mxu0 0
    %4761 = vmatprep.subr.bf16.mxu0 0
    %4762 = vmatpush1.bf16.msra.mxu0 %v4745
    %4763 = vmatprep.subr.bf16.mxu0 0
    %4764 = vmatpush2.bf16.msra.mxu0 0
    %4765 = vmatprep.subr.bf16.mxu0 0
    %4766 = vmatpush2.bf16.msra.mxu0 0
    %4767 = vmatprep.subr.bf16.mxu0 0
    %4768 = vmatpush2.bf16.msra.mxu0 0
    %4769 = vmatprep.subr.bf16.mxu0 0
    %4770 = vmatpush2.bf16.msra.mxu0 0
    %4771 = vmatprep.subr.bf16.mxu0 0
    %4772 = vmatpush2.bf16.msra.mxu0 0
    %4773 = vmatprep.subr.bf16.mxu0 0
    %4774 = vmatpush2.bf16.msra.mxu0 0
    %4775 = vmatprep.subr.bf16.mxu0 0
    %4776 = vmatpush2.bf16.msra.mxu0 0
    %4777 = vmatprep.subr.bf16.mxu0 0
    %4778 = vmatpush2.bf16.msra.mxu0 0
    %4779 = vmatprep.mubr.bf16.mxu0 0
    %4780 = vmatmul.mubr.bf16.gmra.mxu0 %v4742
    %v4781 = vpop.f32.mrf.mxu0
    %v4782 = vadd.f32 %v4030, %v4781
    %v4783 = vpop.f32.mrf.mxu0
    %v4784 = vpop.f32.mrf.mxu0
    %v4785 = vadd.f32 %v4033, %v4784
    %v4786 = vpop.f32.mrf.mxu0
    %4787 = vdwg.mxu0
    %v4789 = vsel %vm3470, %v3422, 0
    %v4792 = vsel %vm3474, %v3450, 0
    %4794 = vmatprep.subr.bf16.mxu0 0
    %4795 = vmatpush1.bf16.msra.mxu0 0
    %4796 = vmatprep.subr.bf16.mxu0 0
    %4797 = vmatpush1.bf16.msra.mxu0 0
    %4798 = vmatprep.subr.bf16.mxu0 0
    %4799 = vmatpush1.bf16.msra.mxu0 0
    %4800 = vmatprep.subr.bf16.mxu0 0
    %4801 = vmatpush1.bf16.msra.mxu0 0
    %4802 = vmatprep.subr.bf16.mxu0 0
    %4803 = vmatpush1.bf16.msra.mxu0 0
    %4804 = vmatprep.subr.bf16.mxu0 0
    %4805 = vmatpush1.bf16.msra.mxu0 0
    %4806 = vmatprep.subr.bf16.mxu0 0
    %4807 = vmatpush1.bf16.msra.mxu0 0
    %4808 = vmatprep.subr.bf16.mxu0 0
    %4809 = vmatpush1.bf16.msra.mxu0 %v4792
    %4810 = vmatprep.subr.bf16.mxu0 0
    %4811 = vmatpush2.bf16.msra.mxu0 0
    %4812 = vmatprep.subr.bf16.mxu0 0
    %4813 = vmatpush2.bf16.msra.mxu0 0
    %4814 = vmatprep.subr.bf16.mxu0 0
    %4815 = vmatpush2.bf16.msra.mxu0 0
    %4816 = vmatprep.subr.bf16.mxu0 0
    %4817 = vmatpush2.bf16.msra.mxu0 0
    %4818 = vmatprep.subr.bf16.mxu0 0
    %4819 = vmatpush2.bf16.msra.mxu0 0
    %4820 = vmatprep.subr.bf16.mxu0 0
    %4821 = vmatpush2.bf16.msra.mxu0 0
    %4822 = vmatprep.subr.bf16.mxu0 0
    %4823 = vmatpush2.bf16.msra.mxu0 0
    %4824 = vmatprep.subr.bf16.mxu0 0
    %4825 = vmatpush2.bf16.msra.mxu0 0
    %4826 = vmatprep.mubr.bf16.mxu0 0
    %4827 = vmatmul.mubr.bf16.gmra.mxu0 %v4789
    %v4828 = vpop.f32.mrf.mxu0
    %v4829 = vadd.f32 %v4077, %v4828
    %v4830 = vpop.f32.mrf.mxu0
    %v4831 = vpop.f32.mrf.mxu0
    %v4832 = vadd.f32 %v4080, %v4831
    %v4833 = vpop.f32.mrf.mxu0
    %4834 = vdwg.mxu0
    %v4836 = vsel %vm3470, %v3426, 0
    %v4839 = vsel %vm3474, %v3451, 0
    %4841 = vmatprep.subr.bf16.mxu0 0
    %4842 = vmatpush1.bf16.msra.mxu0 0
    %4843 = vmatprep.subr.bf16.mxu0 0
    %4844 = vmatpush1.bf16.msra.mxu0 0
    %4845 = vmatprep.subr.bf16.mxu0 0
    %4846 = vmatpush1.bf16.msra.mxu0 0
    %4847 = vmatprep.subr.bf16.mxu0 0
    %4848 = vmatpush1.bf16.msra.mxu0 0
    %4849 = vmatprep.subr.bf16.mxu0 0
    %4850 = vmatpush1.bf16.msra.mxu0 0
    %4851 = vmatprep.subr.bf16.mxu0 0
    %4852 = vmatpush1.bf16.msra.mxu0 0
    %4853 = vmatprep.subr.bf16.mxu0 0
    %4854 = vmatpush1.bf16.msra.mxu0 0
    %4855 = vmatprep.subr.bf16.mxu0 0
    %4856 = vmatpush1.bf16.msra.mxu0 %v4839
    %4857 = vmatprep.subr.bf16.mxu0 0
    %4858 = vmatpush2.bf16.msra.mxu0 0
    %4859 = vmatprep.subr.bf16.mxu0 0
    %4860 = vmatpush2.bf16.msra.mxu0 0
    %4861 = vmatprep.subr.bf16.mxu0 0
    %4862 = vmatpush2.bf16.msra.mxu0 0
    %4863 = vmatprep.subr.bf16.mxu0 0
    %4864 = vmatpush2.bf16.msra.mxu0 0
    %4865 = vmatprep.subr.bf16.mxu0 0
    %4866 = vmatpush2.bf16.msra.mxu0 0
    %4867 = vmatprep.subr.bf16.mxu0 0
    %4868 = vmatpush2.bf16.msra.mxu0 0
    %4869 = vmatprep.subr.bf16.mxu0 0
    %4870 = vmatpush2.bf16.msra.mxu0 0
    %4871 = vmatprep.subr.bf16.mxu0 0
    %4872 = vmatpush2.bf16.msra.mxu0 0
    %4873 = vmatprep.mubr.bf16.mxu0 0
    %4874 = vmatmul.mubr.bf16.gmra.mxu0 %v4836
    %v4875 = vpop.f32.mrf.mxu0
    %v4876 = vadd.f32 %v4124, %v4875
    %v4877 = vpop.f32.mrf.mxu0
    %v4878 = vpop.f32.mrf.mxu0
    %v4879 = vadd.f32 %v4127, %v4878
    %v4880 = vpop.f32.mrf.mxu0
    %4881 = vdwg.mxu0
    %v4883 = vsel %vm3470, %v3430, 0
    %v4886 = vsel %vm3474, %v3452, 0
    %4888 = vmatprep.subr.bf16.mxu0 0
    %4889 = vmatpush1.bf16.msra.mxu0 0
    %4890 = vmatprep.subr.bf16.mxu0 0
    %4891 = vmatpush1.bf16.msra.mxu0 0
    %4892 = vmatprep.subr.bf16.mxu0 0
    %4893 = vmatpush1.bf16.msra.mxu0 0
    %4894 = vmatprep.subr.bf16.mxu0 0
    %4895 = vmatpush1.bf16.msra.mxu0 0
    %4896 = vmatprep.subr.bf16.mxu0 0
    %4897 = vmatpush1.bf16.msra.mxu0 0
    %4898 = vmatprep.subr.bf16.mxu0 0
    %4899 = vmatpush1.bf16.msra.mxu0 0
    %4900 = vmatprep.subr.bf16.mxu0 0
    %4901 = vmatpush1.bf16.msra.mxu0 0
    %4902 = vmatprep.subr.bf16.mxu0 0
    %4903 = vmatpush1.bf16.msra.mxu0 %v4886
    %4904 = vmatprep.subr.bf16.mxu0 0
    %4905 = vmatpush2.bf16.msra.mxu0 0
    %4906 = vmatprep.subr.bf16.mxu0 0
    %4907 = vmatpush2.bf16.msra.mxu0 0
    %4908 = vmatprep.subr.bf16.mxu0 0
    %4909 = vmatpush2.bf16.msra.mxu0 0
    %4910 = vmatprep.subr.bf16.mxu0 0
    %4911 = vmatpush2.bf16.msra.mxu0 0
    %4912 = vmatprep.subr.bf16.mxu0 0
    %4913 = vmatpush2.bf16.msra.mxu0 0
    %4914 = vmatprep.subr.bf16.mxu0 0
    %4915 = vmatpush2.bf16.msra.mxu0 0
    %4916 = vmatprep.subr.bf16.mxu0 0
    %4917 = vmatpush2.bf16.msra.mxu0 0
    %4918 = vmatprep.subr.bf16.mxu0 0
    %4919 = vmatpush2.bf16.msra.mxu0 0
    %4920 = vmatprep.mubr.bf16.mxu0 0
    %4921 = vmatmul.mubr.bf16.gmra.mxu0 %v4883
    %v4922 = vpop.f32.mrf.mxu0
    %v4923 = vadd.f32 %v4171, %v4922
    %v4924 = vpop.f32.mrf.mxu0
    %v4925 = vpop.f32.mrf.mxu0
    %v4926 = vadd.f32 %v4174, %v4925
    %v4927 = vpop.f32.mrf.mxu0
    %4928 = vdwg.mxu0
    %v4930 = vsel %vm3470, %v3434, 0
    %v4933 = vsel %vm3474, %v3453, 0
    %4935 = vmatprep.subr.bf16.mxu0 0
    %4936 = vmatpush1.bf16.msra.mxu0 0
    %4937 = vmatprep.subr.bf16.mxu0 0
    %4938 = vmatpush1.bf16.msra.mxu0 0
    %4939 = vmatprep.subr.bf16.mxu0 0
    %4940 = vmatpush1.bf16.msra.mxu0 0
    %4941 = vmatprep.subr.bf16.mxu0 0
    %4942 = vmatpush1.bf16.msra.mxu0 0
    %4943 = vmatprep.subr.bf16.mxu0 0
    %4944 = vmatpush1.bf16.msra.mxu0 0
    %4945 = vmatprep.subr.bf16.mxu0 0
    %4946 = vmatpush1.bf16.msra.mxu0 0
    %4947 = vmatprep.subr.bf16.mxu0 0
    %4948 = vmatpush1.bf16.msra.mxu0 0
    %4949 = vmatprep.subr.bf16.mxu0 0
    %4950 = vmatpush1.bf16.msra.mxu0 %v4933
    %4951 = vmatprep.subr.bf16.mxu0 0
    %4952 = vmatpush2.bf16.msra.mxu0 0
    %4953 = vmatprep.subr.bf16.mxu0 0
    %4954 = vmatpush2.bf16.msra.mxu0 0
    %4955 = vmatprep.subr.bf16.mxu0 0
    %4956 = vmatpush2.bf16.msra.mxu0 0
    %4957 = vmatprep.subr.bf16.mxu0 0
    %4958 = vmatpush2.bf16.msra.mxu0 0
    %4959 = vmatprep.subr.bf16.mxu0 0
    %4960 = vmatpush2.bf16.msra.mxu0 0
    %4961 = vmatprep.subr.bf16.mxu0 0
    %4962 = vmatpush2.bf16.msra.mxu0 0
    %4963 = vmatprep.subr.bf16.mxu0 0
    %4964 = vmatpush2.bf16.msra.mxu0 0
    %4965 = vmatprep.subr.bf16.mxu0 0
    %4966 = vmatpush2.bf16.msra.mxu0 0
    %4967 = vmatprep.mubr.bf16.mxu0 0
    %4968 = vmatmul.mubr.bf16.gmra.mxu0 %v4930
    %v4969 = vpop.f32.mrf.mxu0
    %v4970 = vadd.f32 %v4218, %v4969
    %v4971 = vpop.f32.mrf.mxu0
    %v4972 = vpop.f32.mrf.mxu0
    %v4973 = vadd.f32 %v4221, %v4972
    %v4974 = vpop.f32.mrf.mxu0
    %4975 = vdwg.mxu0
    %v4976 = vpack.c.bf16 %v2021, %v2021
    %v4977 = vpack.c.bf16 %v2025, %v2025
    %v4978 = vpack.c.bf16 %v2031, %v2031
    %v4979 = vpack.c.bf16 %v2035, %v2035
    %v4980 = vpack.c.bf16 %v2041, %v2041
    %v4981 = vpack.c.bf16 %v2045, %v2045
    %v4982 = vpack.c.bf16 %v2051, %v2051
    %v4983 = vpack.c.bf16 %v2055, %v2055
    %v4984 = vpack.c.bf16 %v2061, %v2061
    %v4985 = vpack.c.bf16 %v2065, %v2065
    %v4986 = vpack.c.bf16 %v2071, %v2071
    %v4987 = vpack.c.bf16 %v2075, %v2075
    %v4988 = vpack.c.bf16 %v2081, %v2081
    %v4989 = vpack.c.bf16 %v2085, %v2085
    %v4990 = vpack.c.bf16 %v2091, %v2091
    %v4991 = vpack.c.bf16 %v2095, %v2095
    %v4993 = vsel %vm3470, %v3376, 0
    %v4996 = vsel %vm3474, %v4976, 0
    %4998 = vmatprep.subr.bf16.mxu0 0
    %4999 = vmatpush1.bf16.msra.mxu0 0
    %5000 = vmatprep.subr.bf16.mxu0 0
    %5001 = vmatpush1.bf16.msra.mxu0 0
    %5002 = vmatprep.subr.bf16.mxu0 0
    %5003 = vmatpush1.bf16.msra.mxu0 0
    %5004 = vmatprep.subr.bf16.mxu0 0
    %5005 = vmatpush1.bf16.msra.mxu0 0
    %5006 = vmatprep.subr.bf16.mxu0 0
    %5007 = vmatpush1.bf16.msra.mxu0 0
    %5008 = vmatprep.subr.bf16.mxu0 0
    %5009 = vmatpush1.bf16.msra.mxu0 0
    %5010 = vmatprep.subr.bf16.mxu0 0
    %5011 = vmatpush1.bf16.msra.mxu0 0
    %5012 = vmatprep.subr.bf16.mxu0 0
    %5013 = vmatpush1.bf16.msra.mxu0 %v4996
    %5014 = vmatprep.subr.bf16.mxu0 0
    %5015 = vmatpush2.bf16.msra.mxu0 0
    %5016 = vmatprep.subr.bf16.mxu0 0
    %5017 = vmatpush2.bf16.msra.mxu0 0
    %5018 = vmatprep.subr.bf16.mxu0 0
    %5019 = vmatpush2.bf16.msra.mxu0 0
    %5020 = vmatprep.subr.bf16.mxu0 0
    %5021 = vmatpush2.bf16.msra.mxu0 0
    %5022 = vmatprep.subr.bf16.mxu0 0
    %5023 = vmatpush2.bf16.msra.mxu0 0
    %5024 = vmatprep.subr.bf16.mxu0 0
    %5025 = vmatpush2.bf16.msra.mxu0 0
    %5026 = vmatprep.subr.bf16.mxu0 0
    %5027 = vmatpush2.bf16.msra.mxu0 0
    %5028 = vmatprep.subr.bf16.mxu0 0
    %5029 = vmatpush2.bf16.msra.mxu0 0
    %5030 = vmatprep.mubr.bf16.mxu0 0
    %5031 = vmatmul.mubr.bf16.gmra.mxu0 %v4993
    %v5032 = vpop.f32.mrf.mxu0
    %v5033 = vadd.f32 0.0, %v5032
    %v5034 = vpop.f32.mrf.mxu0
    %v5035 = vpop.f32.mrf.mxu0
    %v5036 = vadd.f32 0.0, %v5035
    %v5037 = vpop.f32.mrf.mxu0
    %5038 = vdwg.mxu0
    %v5040 = vsel %vm3470, %v3380, 0
    %v5043 = vsel %vm3474, %v4977, 0
    %5045 = vmatprep.subr.bf16.mxu0 0
    %5046 = vmatpush1.bf16.msra.mxu0 0
    %5047 = vmatprep.subr.bf16.mxu0 0
    %5048 = vmatpush1.bf16.msra.mxu0 0
    %5049 = vmatprep.subr.bf16.mxu0 0
    %5050 = vmatpush1.bf16.msra.mxu0 0
    %5051 = vmatprep.subr.bf16.mxu0 0
    %5052 = vmatpush1.bf16.msra.mxu0 0
    %5053 = vmatprep.subr.bf16.mxu0 0
    %5054 = vmatpush1.bf16.msra.mxu0 0
    %5055 = vmatprep.subr.bf16.mxu0 0
    %5056 = vmatpush1.bf16.msra.mxu0 0
    %5057 = vmatprep.subr.bf16.mxu0 0
    %5058 = vmatpush1.bf16.msra.mxu0 0
    %5059 = vmatprep.subr.bf16.mxu0 0
    %5060 = vmatpush1.bf16.msra.mxu0 %v5043
    %5061 = vmatprep.subr.bf16.mxu0 0
    %5062 = vmatpush2.bf16.msra.mxu0 0
    %5063 = vmatprep.subr.bf16.mxu0 0
    %5064 = vmatpush2.bf16.msra.mxu0 0
    %5065 = vmatprep.subr.bf16.mxu0 0
    %5066 = vmatpush2.bf16.msra.mxu0 0
    %5067 = vmatprep.subr.bf16.mxu0 0
    %5068 = vmatpush2.bf16.msra.mxu0 0
    %5069 = vmatprep.subr.bf16.mxu0 0
    %5070 = vmatpush2.bf16.msra.mxu0 0
    %5071 = vmatprep.subr.bf16.mxu0 0
    %5072 = vmatpush2.bf16.msra.mxu0 0
    %5073 = vmatprep.subr.bf16.mxu0 0
    %5074 = vmatpush2.bf16.msra.mxu0 0
    %5075 = vmatprep.subr.bf16.mxu0 0
    %5076 = vmatpush2.bf16.msra.mxu0 0
    %5077 = vmatprep.mubr.bf16.mxu0 0
    %5078 = vmatmul.mubr.bf16.gmra.mxu0 %v5040
    %v5079 = vpop.f32.mrf.mxu0
    %v5080 = vadd.f32 0.0, %v5079
    %v5081 = vpop.f32.mrf.mxu0
    %v5082 = vpop.f32.mrf.mxu0
    %v5083 = vadd.f32 0.0, %v5082
    %v5084 = vpop.f32.mrf.mxu0
    %5085 = vdwg.mxu0
    %v5087 = vsel %vm3470, %v3384, 0
    %v5090 = vsel %vm3474, %v4978, 0
    %5092 = vmatprep.subr.bf16.mxu0 0
    %5093 = vmatpush1.bf16.msra.mxu0 0
    %5094 = vmatprep.subr.bf16.mxu0 0
    %5095 = vmatpush1.bf16.msra.mxu0 0
    %5096 = vmatprep.subr.bf16.mxu0 0
    %5097 = vmatpush1.bf16.msra.mxu0 0
    %5098 = vmatprep.subr.bf16.mxu0 0
    %5099 = vmatpush1.bf16.msra.mxu0 0
    %5100 = vmatprep.subr.bf16.mxu0 0
    %5101 = vmatpush1.bf16.msra.mxu0 0
    %5102 = vmatprep.subr.bf16.mxu0 0
    %5103 = vmatpush1.bf16.msra.mxu0 0
    %5104 = vmatprep.subr.bf16.mxu0 0
    %5105 = vmatpush1.bf16.msra.mxu0 0
    %5106 = vmatprep.subr.bf16.mxu0 0
    %5107 = vmatpush1.bf16.msra.mxu0 %v5090
    %5108 = vmatprep.subr.bf16.mxu0 0
    %5109 = vmatpush2.bf16.msra.mxu0 0
    %5110 = vmatprep.subr.bf16.mxu0 0
    %5111 = vmatpush2.bf16.msra.mxu0 0
    %5112 = vmatprep.subr.bf16.mxu0 0
    %5113 = vmatpush2.bf16.msra.mxu0 0
    %5114 = vmatprep.subr.bf16.mxu0 0
    %5115 = vmatpush2.bf16.msra.mxu0 0
    %5116 = vmatprep.subr.bf16.mxu0 0
    %5117 = vmatpush2.bf16.msra.mxu0 0
    %5118 = vmatprep.subr.bf16.mxu0 0
    %5119 = vmatpush2.bf16.msra.mxu0 0
    %5120 = vmatprep.subr.bf16.mxu0 0
    %5121 = vmatpush2.bf16.msra.mxu0 0
    %5122 = vmatprep.subr.bf16.mxu0 0
    %5123 = vmatpush2.bf16.msra.mxu0 0
    %5124 = vmatprep.mubr.bf16.mxu0 0
    %5125 = vmatmul.mubr.bf16.gmra.mxu0 %v5087
    %v5126 = vpop.f32.mrf.mxu0
    %v5127 = vadd.f32 0.0, %v5126
    %v5128 = vpop.f32.mrf.mxu0
    %v5129 = vpop.f32.mrf.mxu0
    %v5130 = vadd.f32 0.0, %v5129
    %v5131 = vpop.f32.mrf.mxu0
    %5132 = vdwg.mxu0
    %v5134 = vsel %vm3470, %v3388, 0
    %v5137 = vsel %vm3474, %v4979, 0
    %5139 = vmatprep.subr.bf16.mxu0 0
    %5140 = vmatpush1.bf16.msra.mxu0 0
    %5141 = vmatprep.subr.bf16.mxu0 0
    %5142 = vmatpush1.bf16.msra.mxu0 0
    %5143 = vmatprep.subr.bf16.mxu0 0
    %5144 = vmatpush1.bf16.msra.mxu0 0
    %5145 = vmatprep.subr.bf16.mxu0 0
    %5146 = vmatpush1.bf16.msra.mxu0 0
    %5147 = vmatprep.subr.bf16.mxu0 0
    %5148 = vmatpush1.bf16.msra.mxu0 0
    %5149 = vmatprep.subr.bf16.mxu0 0
    %5150 = vmatpush1.bf16.msra.mxu0 0
    %5151 = vmatprep.subr.bf16.mxu0 0
    %5152 = vmatpush1.bf16.msra.mxu0 0
    %5153 = vmatprep.subr.bf16.mxu0 0
    %5154 = vmatpush1.bf16.msra.mxu0 %v5137
    %5155 = vmatprep.subr.bf16.mxu0 0
    %5156 = vmatpush2.bf16.msra.mxu0 0
    %5157 = vmatprep.subr.bf16.mxu0 0
    %5158 = vmatpush2.bf16.msra.mxu0 0
    %5159 = vmatprep.subr.bf16.mxu0 0
    %5160 = vmatpush2.bf16.msra.mxu0 0
    %5161 = vmatprep.subr.bf16.mxu0 0
    %5162 = vmatpush2.bf16.msra.mxu0 0
    %5163 = vmatprep.subr.bf16.mxu0 0
    %5164 = vmatpush2.bf16.msra.mxu0 0
    %5165 = vmatprep.subr.bf16.mxu0 0
    %5166 = vmatpush2.bf16.msra.mxu0 0
    %5167 = vmatprep.subr.bf16.mxu0 0
    %5168 = vmatpush2.bf16.msra.mxu0 0
    %5169 = vmatprep.subr.bf16.mxu0 0
    %5170 = vmatpush2.bf16.msra.mxu0 0
    %5171 = vmatprep.mubr.bf16.mxu0 0
    %5172 = vmatmul.mubr.bf16.gmra.mxu0 %v5134
    %v5173 = vpop.f32.mrf.mxu0
    %v5174 = vadd.f32 0.0, %v5173
    %v5175 = vpop.f32.mrf.mxu0
    %v5176 = vpop.f32.mrf.mxu0
    %v5177 = vadd.f32 0.0, %v5176
    %v5178 = vpop.f32.mrf.mxu0
    %5179 = vdwg.mxu0
    %v5181 = vsel %vm3470, %v3392, 0
    %v5184 = vsel %vm3474, %v4980, 0
    %5186 = vmatprep.subr.bf16.mxu0 0
    %5187 = vmatpush1.bf16.msra.mxu0 0
    %5188 = vmatprep.subr.bf16.mxu0 0
    %5189 = vmatpush1.bf16.msra.mxu0 0
    %5190 = vmatprep.subr.bf16.mxu0 0
    %5191 = vmatpush1.bf16.msra.mxu0 0
    %5192 = vmatprep.subr.bf16.mxu0 0
    %5193 = vmatpush1.bf16.msra.mxu0 0
    %5194 = vmatprep.subr.bf16.mxu0 0
    %5195 = vmatpush1.bf16.msra.mxu0 0
    %5196 = vmatprep.subr.bf16.mxu0 0
    %5197 = vmatpush1.bf16.msra.mxu0 0
    %5198 = vmatprep.subr.bf16.mxu0 0
    %5199 = vmatpush1.bf16.msra.mxu0 0
    %5200 = vmatprep.subr.bf16.mxu0 0
    %5201 = vmatpush1.bf16.msra.mxu0 %v5184
    %5202 = vmatprep.subr.bf16.mxu0 0
    %5203 = vmatpush2.bf16.msra.mxu0 0
    %5204 = vmatprep.subr.bf16.mxu0 0
    %5205 = vmatpush2.bf16.msra.mxu0 0
    %5206 = vmatprep.subr.bf16.mxu0 0
    %5207 = vmatpush2.bf16.msra.mxu0 0
    %5208 = vmatprep.subr.bf16.mxu0 0
    %5209 = vmatpush2.bf16.msra.mxu0 0
    %5210 = vmatprep.subr.bf16.mxu0 0
    %5211 = vmatpush2.bf16.msra.mxu0 0
    %5212 = vmatprep.subr.bf16.mxu0 0
    %5213 = vmatpush2.bf16.msra.mxu0 0
    %5214 = vmatprep.subr.bf16.mxu0 0
    %5215 = vmatpush2.bf16.msra.mxu0 0
    %5216 = vmatprep.subr.bf16.mxu0 0
    %5217 = vmatpush2.bf16.msra.mxu0 0
    %5218 = vmatprep.mubr.bf16.mxu0 0
    %5219 = vmatmul.mubr.bf16.gmra.mxu0 %v5181
    %v5220 = vpop.f32.mrf.mxu0
    %v5221 = vadd.f32 0.0, %v5220
    %v5222 = vpop.f32.mrf.mxu0
    %v5223 = vpop.f32.mrf.mxu0
    %v5224 = vadd.f32 0.0, %v5223
    %v5225 = vpop.f32.mrf.mxu0
    %5226 = vdwg.mxu0
    %v5228 = vsel %vm3470, %v3396, 0
    %v5231 = vsel %vm3474, %v4981, 0
    %5233 = vmatprep.subr.bf16.mxu0 0
    %5234 = vmatpush1.bf16.msra.mxu0 0
    %5235 = vmatprep.subr.bf16.mxu0 0
    %5236 = vmatpush1.bf16.msra.mxu0 0
    %5237 = vmatprep.subr.bf16.mxu0 0
    %5238 = vmatpush1.bf16.msra.mxu0 0
    %5239 = vmatprep.subr.bf16.mxu0 0
    %5240 = vmatpush1.bf16.msra.mxu0 0
    %5241 = vmatprep.subr.bf16.mxu0 0
    %5242 = vmatpush1.bf16.msra.mxu0 0
    %5243 = vmatprep.subr.bf16.mxu0 0
    %5244 = vmatpush1.bf16.msra.mxu0 0
    %5245 = vmatprep.subr.bf16.mxu0 0
    %5246 = vmatpush1.bf16.msra.mxu0 0
    %5247 = vmatprep.subr.bf16.mxu0 0
    %5248 = vmatpush1.bf16.msra.mxu0 %v5231
    %5249 = vmatprep.subr.bf16.mxu0 0
    %5250 = vmatpush2.bf16.msra.mxu0 0
    %5251 = vmatprep.subr.bf16.mxu0 0
    %5252 = vmatpush2.bf16.msra.mxu0 0
    %5253 = vmatprep.subr.bf16.mxu0 0
    %5254 = vmatpush2.bf16.msra.mxu0 0
    %5255 = vmatprep.subr.bf16.mxu0 0
    %5256 = vmatpush2.bf16.msra.mxu0 0
    %5257 = vmatprep.subr.bf16.mxu0 0
    %5258 = vmatpush2.bf16.msra.mxu0 0
    %5259 = vmatprep.subr.bf16.mxu0 0
    %5260 = vmatpush2.bf16.msra.mxu0 0
    %5261 = vmatprep.subr.bf16.mxu0 0
    %5262 = vmatpush2.bf16.msra.mxu0 0
    %5263 = vmatprep.subr.bf16.mxu0 0
    %5264 = vmatpush2.bf16.msra.mxu0 0
    %5265 = vmatprep.mubr.bf16.mxu0 0
    %5266 = vmatmul.mubr.bf16.gmra.mxu0 %v5228
    %v5267 = vpop.f32.mrf.mxu0
    %v5268 = vadd.f32 0.0, %v5267
    %v5269 = vpop.f32.mrf.mxu0
    %v5270 = vpop.f32.mrf.mxu0
    %v5271 = vadd.f32 0.0, %v5270
    %v5272 = vpop.f32.mrf.mxu0
    %5273 = vdwg.mxu0
    %v5275 = vsel %vm3470, %v3400, 0
    %v5278 = vsel %vm3474, %v4982, 0
    %5280 = vmatprep.subr.bf16.mxu0 0
    %5281 = vmatpush1.bf16.msra.mxu0 0
    %5282 = vmatprep.subr.bf16.mxu0 0
    %5283 = vmatpush1.bf16.msra.mxu0 0
    %5284 = vmatprep.subr.bf16.mxu0 0
    %5285 = vmatpush1.bf16.msra.mxu0 0
    %5286 = vmatprep.subr.bf16.mxu0 0
    %5287 = vmatpush1.bf16.msra.mxu0 0
    %5288 = vmatprep.subr.bf16.mxu0 0
    %5289 = vmatpush1.bf16.msra.mxu0 0
    %5290 = vmatprep.subr.bf16.mxu0 0
    %5291 = vmatpush1.bf16.msra.mxu0 0
    %5292 = vmatprep.subr.bf16.mxu0 0
    %5293 = vmatpush1.bf16.msra.mxu0 0
    %5294 = vmatprep.subr.bf16.mxu0 0
    %5295 = vmatpush1.bf16.msra.mxu0 %v5278
    %5296 = vmatprep.subr.bf16.mxu0 0
    %5297 = vmatpush2.bf16.msra.mxu0 0
    %5298 = vmatprep.subr.bf16.mxu0 0
    %5299 = vmatpush2.bf16.msra.mxu0 0
    %5300 = vmatprep.subr.bf16.mxu0 0
    %5301 = vmatpush2.bf16.msra.mxu0 0
    %5302 = vmatprep.subr.bf16.mxu0 0
    %5303 = vmatpush2.bf16.msra.mxu0 0
    %5304 = vmatprep.subr.bf16.mxu0 0
    %5305 = vmatpush2.bf16.msra.mxu0 0
    %5306 = vmatprep.subr.bf16.mxu0 0
    %5307 = vmatpush2.bf16.msra.mxu0 0
    %5308 = vmatprep.subr.bf16.mxu0 0
    %5309 = vmatpush2.bf16.msra.mxu0 0
    %5310 = vmatprep.subr.bf16.mxu0 0
    %5311 = vmatpush2.bf16.msra.mxu0 0
    %5312 = vmatprep.mubr.bf16.mxu0 0
    %5313 = vmatmul.mubr.bf16.gmra.mxu0 %v5275
    %v5314 = vpop.f32.mrf.mxu0
    %v5315 = vadd.f32 0.0, %v5314
    %v5316 = vpop.f32.mrf.mxu0
    %v5317 = vpop.f32.mrf.mxu0
    %v5318 = vadd.f32 0.0, %v5317
    %v5319 = vpop.f32.mrf.mxu0
    %5320 = vdwg.mxu0
    %v5322 = vsel %vm3470, %v3404, 0
    %v5325 = vsel %vm3474, %v4983, 0
    %5327 = vmatprep.subr.bf16.mxu0 0
    %5328 = vmatpush1.bf16.msra.mxu0 0
    %5329 = vmatprep.subr.bf16.mxu0 0
    %5330 = vmatpush1.bf16.msra.mxu0 0
    %5331 = vmatprep.subr.bf16.mxu0 0
    %5332 = vmatpush1.bf16.msra.mxu0 0
    %5333 = vmatprep.subr.bf16.mxu0 0
    %5334 = vmatpush1.bf16.msra.mxu0 0
    %5335 = vmatprep.subr.bf16.mxu0 0
    %5336 = vmatpush1.bf16.msra.mxu0 0
    %5337 = vmatprep.subr.bf16.mxu0 0
    %5338 = vmatpush1.bf16.msra.mxu0 0
    %5339 = vmatprep.subr.bf16.mxu0 0
    %5340 = vmatpush1.bf16.msra.mxu0 0
    %5341 = vmatprep.subr.bf16.mxu0 0
    %5342 = vmatpush1.bf16.msra.mxu0 %v5325
    %5343 = vmatprep.subr.bf16.mxu0 0
    %5344 = vmatpush2.bf16.msra.mxu0 0
    %5345 = vmatprep.subr.bf16.mxu0 0
    %5346 = vmatpush2.bf16.msra.mxu0 0
    %5347 = vmatprep.subr.bf16.mxu0 0
    %5348 = vmatpush2.bf16.msra.mxu0 0
    %5349 = vmatprep.subr.bf16.mxu0 0
    %5350 = vmatpush2.bf16.msra.mxu0 0
    %5351 = vmatprep.subr.bf16.mxu0 0
    %5352 = vmatpush2.bf16.msra.mxu0 0
    %5353 = vmatprep.subr.bf16.mxu0 0
    %5354 = vmatpush2.bf16.msra.mxu0 0
    %5355 = vmatprep.subr.bf16.mxu0 0
    %5356 = vmatpush2.bf16.msra.mxu0 0
    %5357 = vmatprep.subr.bf16.mxu0 0
    %5358 = vmatpush2.bf16.msra.mxu0 0
    %5359 = vmatprep.mubr.bf16.mxu0 0
    %5360 = vmatmul.mubr.bf16.gmra.mxu0 %v5322
    %v5361 = vpop.f32.mrf.mxu0
    %v5362 = vadd.f32 0.0, %v5361
    %v5363 = vpop.f32.mrf.mxu0
    %v5364 = vpop.f32.mrf.mxu0
    %v5365 = vadd.f32 0.0, %v5364
    %v5366 = vpop.f32.mrf.mxu0
    %5367 = vdwg.mxu0
    %v5369 = vsel %vm3470, %v3408, 0
    %v5372 = vsel %vm3474, %v4984, 0
    %5374 = vmatprep.subr.bf16.mxu0 0
    %5375 = vmatpush1.bf16.msra.mxu0 0
    %5376 = vmatprep.subr.bf16.mxu0 0
    %5377 = vmatpush1.bf16.msra.mxu0 0
    %5378 = vmatprep.subr.bf16.mxu0 0
    %5379 = vmatpush1.bf16.msra.mxu0 0
    %5380 = vmatprep.subr.bf16.mxu0 0
    %5381 = vmatpush1.bf16.msra.mxu0 0
    %5382 = vmatprep.subr.bf16.mxu0 0
    %5383 = vmatpush1.bf16.msra.mxu0 0
    %5384 = vmatprep.subr.bf16.mxu0 0
    %5385 = vmatpush1.bf16.msra.mxu0 0
    %5386 = vmatprep.subr.bf16.mxu0 0
    %5387 = vmatpush1.bf16.msra.mxu0 0
    %5388 = vmatprep.subr.bf16.mxu0 0
    %5389 = vmatpush1.bf16.msra.mxu0 %v5372
    %5390 = vmatprep.subr.bf16.mxu0 0
    %5391 = vmatpush2.bf16.msra.mxu0 0
    %5392 = vmatprep.subr.bf16.mxu0 0
    %5393 = vmatpush2.bf16.msra.mxu0 0
    %5394 = vmatprep.subr.bf16.mxu0 0
    %5395 = vmatpush2.bf16.msra.mxu0 0
    %5396 = vmatprep.subr.bf16.mxu0 0
    %5397 = vmatpush2.bf16.msra.mxu0 0
    %5398 = vmatprep.subr.bf16.mxu0 0
    %5399 = vmatpush2.bf16.msra.mxu0 0
    %5400 = vmatprep.subr.bf16.mxu0 0
    %5401 = vmatpush2.bf16.msra.mxu0 0
    %5402 = vmatprep.subr.bf16.mxu0 0
    %5403 = vmatpush2.bf16.msra.mxu0 0
    %5404 = vmatprep.subr.bf16.mxu0 0
    %5405 = vmatpush2.bf16.msra.mxu0 0
    %5406 = vmatprep.mubr.bf16.mxu0 0
    %5407 = vmatmul.mubr.bf16.gmra.mxu0 %v5369
    %v5408 = vpop.f32.mrf.mxu0
    %v5409 = vadd.f32 0.0, %v5408
    %v5410 = vpop.f32.mrf.mxu0
    %v5411 = vpop.f32.mrf.mxu0
    %v5412 = vadd.f32 0.0, %v5411
    %v5413 = vpop.f32.mrf.mxu0
    %5414 = vdwg.mxu0
    %v5416 = vsel %vm3470, %v3412, 0
    %v5419 = vsel %vm3474, %v4985, 0
    %5421 = vmatprep.subr.bf16.mxu0 0
    %5422 = vmatpush1.bf16.msra.mxu0 0
    %5423 = vmatprep.subr.bf16.mxu0 0
    %5424 = vmatpush1.bf16.msra.mxu0 0
    %5425 = vmatprep.subr.bf16.mxu0 0
    %5426 = vmatpush1.bf16.msra.mxu0 0
    %5427 = vmatprep.subr.bf16.mxu0 0
    %5428 = vmatpush1.bf16.msra.mxu0 0
    %5429 = vmatprep.subr.bf16.mxu0 0
    %5430 = vmatpush1.bf16.msra.mxu0 0
    %5431 = vmatprep.subr.bf16.mxu0 0
    %5432 = vmatpush1.bf16.msra.mxu0 0
    %5433 = vmatprep.subr.bf16.mxu0 0
    %5434 = vmatpush1.bf16.msra.mxu0 0
    %5435 = vmatprep.subr.bf16.mxu0 0
    %5436 = vmatpush1.bf16.msra.mxu0 %v5419
    %5437 = vmatprep.subr.bf16.mxu0 0
    %5438 = vmatpush2.bf16.msra.mxu0 0
    %5439 = vmatprep.subr.bf16.mxu0 0
    %5440 = vmatpush2.bf16.msra.mxu0 0
    %5441 = vmatprep.subr.bf16.mxu0 0
    %5442 = vmatpush2.bf16.msra.mxu0 0
    %5443 = vmatprep.subr.bf16.mxu0 0
    %5444 = vmatpush2.bf16.msra.mxu0 0
    %5445 = vmatprep.subr.bf16.mxu0 0
    %5446 = vmatpush2.bf16.msra.mxu0 0
    %5447 = vmatprep.subr.bf16.mxu0 0
    %5448 = vmatpush2.bf16.msra.mxu0 0
    %5449 = vmatprep.subr.bf16.mxu0 0
    %5450 = vmatpush2.bf16.msra.mxu0 0
    %5451 = vmatprep.subr.bf16.mxu0 0
    %5452 = vmatpush2.bf16.msra.mxu0 0
    %5453 = vmatprep.mubr.bf16.mxu0 0
    %5454 = vmatmul.mubr.bf16.gmra.mxu0 %v5416
    %v5455 = vpop.f32.mrf.mxu0
    %v5456 = vadd.f32 0.0, %v5455
    %v5457 = vpop.f32.mrf.mxu0
    %v5458 = vpop.f32.mrf.mxu0
    %v5459 = vadd.f32 0.0, %v5458
    %v5460 = vpop.f32.mrf.mxu0
    %5461 = vdwg.mxu0
    %v5463 = vsel %vm3470, %v3416, 0
    %v5466 = vsel %vm3474, %v4986, 0
    %5468 = vmatprep.subr.bf16.mxu0 0
    %5469 = vmatpush1.bf16.msra.mxu0 0
    %5470 = vmatprep.subr.bf16.mxu0 0
    %5471 = vmatpush1.bf16.msra.mxu0 0
    %5472 = vmatprep.subr.bf16.mxu0 0
    %5473 = vmatpush1.bf16.msra.mxu0 0
    %5474 = vmatprep.subr.bf16.mxu0 0
    %5475 = vmatpush1.bf16.msra.mxu0 0
    %5476 = vmatprep.subr.bf16.mxu0 0
    %5477 = vmatpush1.bf16.msra.mxu0 0
    %5478 = vmatprep.subr.bf16.mxu0 0
    %5479 = vmatpush1.bf16.msra.mxu0 0
    %5480 = vmatprep.subr.bf16.mxu0 0
    %5481 = vmatpush1.bf16.msra.mxu0 0
    %5482 = vmatprep.subr.bf16.mxu0 0
    %5483 = vmatpush1.bf16.msra.mxu0 %v5466
    %5484 = vmatprep.subr.bf16.mxu0 0
    %5485 = vmatpush2.bf16.msra.mxu0 0
    %5486 = vmatprep.subr.bf16.mxu0 0
    %5487 = vmatpush2.bf16.msra.mxu0 0
    %5488 = vmatprep.subr.bf16.mxu0 0
    %5489 = vmatpush2.bf16.msra.mxu0 0
    %5490 = vmatprep.subr.bf16.mxu0 0
    %5491 = vmatpush2.bf16.msra.mxu0 0
    %5492 = vmatprep.subr.bf16.mxu0 0
    %5493 = vmatpush2.bf16.msra.mxu0 0
    %5494 = vmatprep.subr.bf16.mxu0 0
    %5495 = vmatpush2.bf16.msra.mxu0 0
    %5496 = vmatprep.subr.bf16.mxu0 0
    %5497 = vmatpush2.bf16.msra.mxu0 0
    %5498 = vmatprep.subr.bf16.mxu0 0
    %5499 = vmatpush2.bf16.msra.mxu0 0
    %5500 = vmatprep.mubr.bf16.mxu0 0
    %5501 = vmatmul.mubr.bf16.gmra.mxu0 %v5463
    %v5502 = vpop.f32.mrf.mxu0
    %v5503 = vadd.f32 0.0, %v5502
    %v5504 = vpop.f32.mrf.mxu0
    %v5505 = vpop.f32.mrf.mxu0
    %v5506 = vadd.f32 0.0, %v5505
    %v5507 = vpop.f32.mrf.mxu0
    %5508 = vdwg.mxu0
    %v5510 = vsel %vm3470, %v3420, 0
    %v5513 = vsel %vm3474, %v4987, 0
    %5515 = vmatprep.subr.bf16.mxu0 0
    %5516 = vmatpush1.bf16.msra.mxu0 0
    %5517 = vmatprep.subr.bf16.mxu0 0
    %5518 = vmatpush1.bf16.msra.mxu0 0
    %5519 = vmatprep.subr.bf16.mxu0 0
    %5520 = vmatpush1.bf16.msra.mxu0 0
    %5521 = vmatprep.subr.bf16.mxu0 0
    %5522 = vmatpush1.bf16.msra.mxu0 0
    %5523 = vmatprep.subr.bf16.mxu0 0
    %5524 = vmatpush1.bf16.msra.mxu0 0
    %5525 = vmatprep.subr.bf16.mxu0 0
    %5526 = vmatpush1.bf16.msra.mxu0 0
    %5527 = vmatprep.subr.bf16.mxu0 0
    %5528 = vmatpush1.bf16.msra.mxu0 0
    %5529 = vmatprep.subr.bf16.mxu0 0
    %5530 = vmatpush1.bf16.msra.mxu0 %v5513
    %5531 = vmatprep.subr.bf16.mxu0 0
    %5532 = vmatpush2.bf16.msra.mxu0 0
    %5533 = vmatprep.subr.bf16.mxu0 0
    %5534 = vmatpush2.bf16.msra.mxu0 0
    %5535 = vmatprep.subr.bf16.mxu0 0
    %5536 = vmatpush2.bf16.msra.mxu0 0
    %5537 = vmatprep.subr.bf16.mxu0 0
    %5538 = vmatpush2.bf16.msra.mxu0 0
    %5539 = vmatprep.subr.bf16.mxu0 0
    %5540 = vmatpush2.bf16.msra.mxu0 0
    %5541 = vmatprep.subr.bf16.mxu0 0
    %5542 = vmatpush2.bf16.msra.mxu0 0
    %5543 = vmatprep.subr.bf16.mxu0 0
    %5544 = vmatpush2.bf16.msra.mxu0 0
    %5545 = vmatprep.subr.bf16.mxu0 0
    %5546 = vmatpush2.bf16.msra.mxu0 0
    %5547 = vmatprep.mubr.bf16.mxu0 0
    %5548 = vmatmul.mubr.bf16.gmra.mxu0 %v5510
    %v5549 = vpop.f32.mrf.mxu0
    %v5550 = vadd.f32 0.0, %v5549
    %v5551 = vpop.f32.mrf.mxu0
    %v5552 = vpop.f32.mrf.mxu0
    %v5553 = vadd.f32 0.0, %v5552
    %v5554 = vpop.f32.mrf.mxu0
    %5555 = vdwg.mxu0
    %v5557 = vsel %vm3470, %v3424, 0
    %v5560 = vsel %vm3474, %v4988, 0
    %5562 = vmatprep.subr.bf16.mxu0 0
    %5563 = vmatpush1.bf16.msra.mxu0 0
    %5564 = vmatprep.subr.bf16.mxu0 0
    %5565 = vmatpush1.bf16.msra.mxu0 0
    %5566 = vmatprep.subr.bf16.mxu0 0
    %5567 = vmatpush1.bf16.msra.mxu0 0
    %5568 = vmatprep.subr.bf16.mxu0 0
    %5569 = vmatpush1.bf16.msra.mxu0 0
    %5570 = vmatprep.subr.bf16.mxu0 0
    %5571 = vmatpush1.bf16.msra.mxu0 0
    %5572 = vmatprep.subr.bf16.mxu0 0
    %5573 = vmatpush1.bf16.msra.mxu0 0
    %5574 = vmatprep.subr.bf16.mxu0 0
    %5575 = vmatpush1.bf16.msra.mxu0 0
    %5576 = vmatprep.subr.bf16.mxu0 0
    %5577 = vmatpush1.bf16.msra.mxu0 %v5560
    %5578 = vmatprep.subr.bf16.mxu0 0
    %5579 = vmatpush2.bf16.msra.mxu0 0
    %5580 = vmatprep.subr.bf16.mxu0 0
    %5581 = vmatpush2.bf16.msra.mxu0 0
    %5582 = vmatprep.subr.bf16.mxu0 0
    %5583 = vmatpush2.bf16.msra.mxu0 0
    %5584 = vmatprep.subr.bf16.mxu0 0
    %5585 = vmatpush2.bf16.msra.mxu0 0
    %5586 = vmatprep.subr.bf16.mxu0 0
    %5587 = vmatpush2.bf16.msra.mxu0 0
    %5588 = vmatprep.subr.bf16.mxu0 0
    %5589 = vmatpush2.bf16.msra.mxu0 0
    %5590 = vmatprep.subr.bf16.mxu0 0
    %5591 = vmatpush2.bf16.msra.mxu0 0
    %5592 = vmatprep.subr.bf16.mxu0 0
    %5593 = vmatpush2.bf16.msra.mxu0 0
    %5594 = vmatprep.mubr.bf16.mxu0 0
    %5595 = vmatmul.mubr.bf16.gmra.mxu0 %v5557
    %v5596 = vpop.f32.mrf.mxu0
    %v5597 = vadd.f32 0.0, %v5596
    %v5598 = vpop.f32.mrf.mxu0
    %v5599 = vpop.f32.mrf.mxu0
    %v5600 = vadd.f32 0.0, %v5599
    %v5601 = vpop.f32.mrf.mxu0
    %5602 = vdwg.mxu0
    %v5604 = vsel %vm3470, %v3428, 0
    %v5607 = vsel %vm3474, %v4989, 0
    %5609 = vmatprep.subr.bf16.mxu0 0
    %5610 = vmatpush1.bf16.msra.mxu0 0
    %5611 = vmatprep.subr.bf16.mxu0 0
    %5612 = vmatpush1.bf16.msra.mxu0 0
    %5613 = vmatprep.subr.bf16.mxu0 0
    %5614 = vmatpush1.bf16.msra.mxu0 0
    %5615 = vmatprep.subr.bf16.mxu0 0
    %5616 = vmatpush1.bf16.msra.mxu0 0
    %5617 = vmatprep.subr.bf16.mxu0 0
    %5618 = vmatpush1.bf16.msra.mxu0 0
    %5619 = vmatprep.subr.bf16.mxu0 0
    %5620 = vmatpush1.bf16.msra.mxu0 0
    %5621 = vmatprep.subr.bf16.mxu0 0
    %5622 = vmatpush1.bf16.msra.mxu0 0
    %5623 = vmatprep.subr.bf16.mxu0 0
    %5624 = vmatpush1.bf16.msra.mxu0 %v5607
    %5625 = vmatprep.subr.bf16.mxu0 0
    %5626 = vmatpush2.bf16.msra.mxu0 0
    %5627 = vmatprep.subr.bf16.mxu0 0
    %5628 = vmatpush2.bf16.msra.mxu0 0
    %5629 = vmatprep.subr.bf16.mxu0 0
    %5630 = vmatpush2.bf16.msra.mxu0 0
    %5631 = vmatprep.subr.bf16.mxu0 0
    %5632 = vmatpush2.bf16.msra.mxu0 0
    %5633 = vmatprep.subr.bf16.mxu0 0
    %5634 = vmatpush2.bf16.msra.mxu0 0
    %5635 = vmatprep.subr.bf16.mxu0 0
    %5636 = vmatpush2.bf16.msra.mxu0 0
    %5637 = vmatprep.subr.bf16.mxu0 0
    %5638 = vmatpush2.bf16.msra.mxu0 0
    %5639 = vmatprep.subr.bf16.mxu0 0
    %5640 = vmatpush2.bf16.msra.mxu0 0
    %5641 = vmatprep.mubr.bf16.mxu0 0
    %5642 = vmatmul.mubr.bf16.gmra.mxu0 %v5604
    %v5643 = vpop.f32.mrf.mxu0
    %v5644 = vadd.f32 0.0, %v5643
    %v5645 = vpop.f32.mrf.mxu0
    %v5646 = vpop.f32.mrf.mxu0
    %v5647 = vadd.f32 0.0, %v5646
    %v5648 = vpop.f32.mrf.mxu0
    %5649 = vdwg.mxu0
    %v5651 = vsel %vm3470, %v3432, 0
    %v5654 = vsel %vm3474, %v4990, 0
    %5656 = vmatprep.subr.bf16.mxu0 0
    %5657 = vmatpush1.bf16.msra.mxu0 0
    %5658 = vmatprep.subr.bf16.mxu0 0
    %5659 = vmatpush1.bf16.msra.mxu0 0
    %5660 = vmatprep.subr.bf16.mxu0 0
    %5661 = vmatpush1.bf16.msra.mxu0 0
    %5662 = vmatprep.subr.bf16.mxu0 0
    %5663 = vmatpush1.bf16.msra.mxu0 0
    %5664 = vmatprep.subr.bf16.mxu0 0
    %5665 = vmatpush1.bf16.msra.mxu0 0
    %5666 = vmatprep.subr.bf16.mxu0 0
    %5667 = vmatpush1.bf16.msra.mxu0 0
    %5668 = vmatprep.subr.bf16.mxu0 0
    %5669 = vmatpush1.bf16.msra.mxu0 0
    %5670 = vmatprep.subr.bf16.mxu0 0
    %5671 = vmatpush1.bf16.msra.mxu0 %v5654
    %5672 = vmatprep.subr.bf16.mxu0 0
    %5673 = vmatpush2.bf16.msra.mxu0 0
    %5674 = vmatprep.subr.bf16.mxu0 0
    %5675 = vmatpush2.bf16.msra.mxu0 0
    %5676 = vmatprep.subr.bf16.mxu0 0
    %5677 = vmatpush2.bf16.msra.mxu0 0
    %5678 = vmatprep.subr.bf16.mxu0 0
    %5679 = vmatpush2.bf16.msra.mxu0 0
    %5680 = vmatprep.subr.bf16.mxu0 0
    %5681 = vmatpush2.bf16.msra.mxu0 0
    %5682 = vmatprep.subr.bf16.mxu0 0
    %5683 = vmatpush2.bf16.msra.mxu0 0
    %5684 = vmatprep.subr.bf16.mxu0 0
    %5685 = vmatpush2.bf16.msra.mxu0 0
    %5686 = vmatprep.subr.bf16.mxu0 0
    %5687 = vmatpush2.bf16.msra.mxu0 0
    %5688 = vmatprep.mubr.bf16.mxu0 0
    %5689 = vmatmul.mubr.bf16.gmra.mxu0 %v5651
    %v5690 = vpop.f32.mrf.mxu0
    %v5691 = vadd.f32 0.0, %v5690
    %v5692 = vpop.f32.mrf.mxu0
    %v5693 = vpop.f32.mrf.mxu0
    %v5694 = vadd.f32 0.0, %v5693
    %v5695 = vpop.f32.mrf.mxu0
    %5696 = vdwg.mxu0
    %v5698 = vsel %vm3470, %v3436, 0
    %v5701 = vsel %vm3474, %v4991, 0
    %5703 = vmatprep.subr.bf16.mxu0 0
    %5704 = vmatpush1.bf16.msra.mxu0 0
    %5705 = vmatprep.subr.bf16.mxu0 0
    %5706 = vmatpush1.bf16.msra.mxu0 0
    %5707 = vmatprep.subr.bf16.mxu0 0
    %5708 = vmatpush1.bf16.msra.mxu0 0
    %5709 = vmatprep.subr.bf16.mxu0 0
    %5710 = vmatpush1.bf16.msra.mxu0 0
    %5711 = vmatprep.subr.bf16.mxu0 0
    %5712 = vmatpush1.bf16.msra.mxu0 0
    %5713 = vmatprep.subr.bf16.mxu0 0
    %5714 = vmatpush1.bf16.msra.mxu0 0
    %5715 = vmatprep.subr.bf16.mxu0 0
    %5716 = vmatpush1.bf16.msra.mxu0 0
    %5717 = vmatprep.subr.bf16.mxu0 0
    %5718 = vmatpush1.bf16.msra.mxu0 %v5701
    %5719 = vmatprep.subr.bf16.mxu0 0
    %5720 = vmatpush2.bf16.msra.mxu0 0
    %5721 = vmatprep.subr.bf16.mxu0 0
    %5722 = vmatpush2.bf16.msra.mxu0 0
    %5723 = vmatprep.subr.bf16.mxu0 0
    %5724 = vmatpush2.bf16.msra.mxu0 0
    %5725 = vmatprep.subr.bf16.mxu0 0
    %5726 = vmatpush2.bf16.msra.mxu0 0
    %5727 = vmatprep.subr.bf16.mxu0 0
    %5728 = vmatpush2.bf16.msra.mxu0 0
    %5729 = vmatprep.subr.bf16.mxu0 0
    %5730 = vmatpush2.bf16.msra.mxu0 0
    %5731 = vmatprep.subr.bf16.mxu0 0
    %5732 = vmatpush2.bf16.msra.mxu0 0
    %5733 = vmatprep.subr.bf16.mxu0 0
    %5734 = vmatpush2.bf16.msra.mxu0 0
    %5735 = vmatprep.mubr.bf16.mxu0 0
    %5736 = vmatmul.mubr.bf16.gmra.mxu0 %v5698
    %v5737 = vpop.f32.mrf.mxu0
    %v5738 = vadd.f32 0.0, %v5737
    %v5739 = vpop.f32.mrf.mxu0
    %v5740 = vpop.f32.mrf.mxu0
    %v5741 = vadd.f32 0.0, %v5740
    %v5742 = vpop.f32.mrf.mxu0
    %5743 = vdwg.mxu0
    %v5744 = vadd.f32 %v4265, %v5033
    %v5745 = vadd.f32 %v4268, %v5036
    %v5746 = vadd.f32 %v4312, %v5080
    %v5747 = vadd.f32 %v4315, %v5083
    %v5748 = vadd.f32 %v4359, %v5127
    %v5749 = vadd.f32 %v4362, %v5130
    %v5750 = vadd.f32 %v4406, %v5174
    %v5751 = vadd.f32 %v4409, %v5177
    %v5752 = vadd.f32 %v4453, %v5221
    %v5753 = vadd.f32 %v4456, %v5224
    %v5754 = vadd.f32 %v4500, %v5268
    %v5755 = vadd.f32 %v4503, %v5271
    %v5756 = vadd.f32 %v4547, %v5315
    %v5757 = vadd.f32 %v4550, %v5318
    %v5758 = vadd.f32 %v4594, %v5362
    %v5759 = vadd.f32 %v4597, %v5365
    %v5760 = vadd.f32 %v4641, %v5409
    %v5761 = vadd.f32 %v4644, %v5412
    %v5762 = vadd.f32 %v4688, %v5456
    %v5763 = vadd.f32 %v4691, %v5459
    %v5764 = vadd.f32 %v4735, %v5503
    %v5765 = vadd.f32 %v4738, %v5506
    %v5766 = vadd.f32 %v4782, %v5550
    %v5767 = vadd.f32 %v4785, %v5553
    %v5768 = vadd.f32 %v4829, %v5597
    %v5769 = vadd.f32 %v4832, %v5600
    %v5770 = vadd.f32 %v4876, %v5644
    %v5771 = vadd.f32 %v4879, %v5647
    %v5772 = vadd.f32 %v4923, %v5691
    %v5773 = vadd.f32 %v4926, %v5694
    %v5774 = vadd.f32 %v4970, %v5738
    %v5775 = vadd.f32 %v4973, %v5741
    %v5776 = vpack.c.bf16 %v2326, %v2326
    %v5777 = vpack.c.bf16 %v2329, %v2329
    %v5778 = vpack.c.bf16 %v2334, %v2334
    %v5779 = vpack.c.bf16 %v2337, %v2337
    %v5780 = vpack.c.bf16 %v2342, %v2342
    %v5781 = vpack.c.bf16 %v2345, %v2345
    %v5782 = vpack.c.bf16 %v2350, %v2350
    %v5783 = vpack.c.bf16 %v2353, %v2353
    %v5784 = vpack.c.bf16 %v2358, %v2358
    %v5785 = vpack.c.bf16 %v2361, %v2361
    %v5786 = vpack.c.bf16 %v2366, %v2366
    %v5787 = vpack.c.bf16 %v2369, %v2369
    %v5788 = vpack.c.bf16 %v2374, %v2374
    %v5789 = vpack.c.bf16 %v2377, %v2377
    %v5790 = vpack.c.bf16 %v2382, %v2382
    %v5791 = vpack.c.bf16 %v2385, %v2385
    %v5793 = vsel %vm3470, %v3377, 0
    %v5796 = vsel %vm3474, %v5776, 0
    %5798 = vmatprep.subr.bf16.mxu0 0
    %5799 = vmatpush1.bf16.msra.mxu0 0
    %5800 = vmatprep.subr.bf16.mxu0 0
    %5801 = vmatpush1.bf16.msra.mxu0 0
    %5802 = vmatprep.subr.bf16.mxu0 0
    %5803 = vmatpush1.bf16.msra.mxu0 0
    %5804 = vmatprep.subr.bf16.mxu0 0
    %5805 = vmatpush1.bf16.msra.mxu0 0
    %5806 = vmatprep.subr.bf16.mxu0 0
    %5807 = vmatpush1.bf16.msra.mxu0 0
    %5808 = vmatprep.subr.bf16.mxu0 0
    %5809 = vmatpush1.bf16.msra.mxu0 0
    %5810 = vmatprep.subr.bf16.mxu0 0
    %5811 = vmatpush1.bf16.msra.mxu0 0
    %5812 = vmatprep.subr.bf16.mxu0 0
    %5813 = vmatpush1.bf16.msra.mxu0 %v5796
    %5814 = vmatprep.subr.bf16.mxu0 0
    %5815 = vmatpush2.bf16.msra.mxu0 0
    %5816 = vmatprep.subr.bf16.mxu0 0
    %5817 = vmatpush2.bf16.msra.mxu0 0
    %5818 = vmatprep.subr.bf16.mxu0 0
    %5819 = vmatpush2.bf16.msra.mxu0 0
    %5820 = vmatprep.subr.bf16.mxu0 0
    %5821 = vmatpush2.bf16.msra.mxu0 0
    %5822 = vmatprep.subr.bf16.mxu0 0
    %5823 = vmatpush2.bf16.msra.mxu0 0
    %5824 = vmatprep.subr.bf16.mxu0 0
    %5825 = vmatpush2.bf16.msra.mxu0 0
    %5826 = vmatprep.subr.bf16.mxu0 0
    %5827 = vmatpush2.bf16.msra.mxu0 0
    %5828 = vmatprep.subr.bf16.mxu0 0
    %5829 = vmatpush2.bf16.msra.mxu0 0
    %5830 = vmatprep.mubr.bf16.mxu0 0
    %5831 = vmatmul.mubr.bf16.gmra.mxu0 %v5793
    %v5832 = vpop.f32.mrf.mxu0
    %v5833 = vadd.f32 0.0, %v5832
    %v5834 = vpop.f32.mrf.mxu0
    %v5835 = vpop.f32.mrf.mxu0
    %v5836 = vadd.f32 0.0, %v5835
    %v5837 = vpop.f32.mrf.mxu0
    %5838 = vdwg.mxu0
    %v5840 = vsel %vm3470, %v3381, 0
    %v5843 = vsel %vm3474, %v5777, 0
    %5845 = vmatprep.subr.bf16.mxu0 0
    %5846 = vmatpush1.bf16.msra.mxu0 0
    %5847 = vmatprep.subr.bf16.mxu0 0
    %5848 = vmatpush1.bf16.msra.mxu0 0
    %5849 = vmatprep.subr.bf16.mxu0 0
    %5850 = vmatpush1.bf16.msra.mxu0 0
    %5851 = vmatprep.subr.bf16.mxu0 0
    %5852 = vmatpush1.bf16.msra.mxu0 0
    %5853 = vmatprep.subr.bf16.mxu0 0
    %5854 = vmatpush1.bf16.msra.mxu0 0
    %5855 = vmatprep.subr.bf16.mxu0 0
    %5856 = vmatpush1.bf16.msra.mxu0 0
    %5857 = vmatprep.subr.bf16.mxu0 0
    %5858 = vmatpush1.bf16.msra.mxu0 0
    %5859 = vmatprep.subr.bf16.mxu0 0
    %5860 = vmatpush1.bf16.msra.mxu0 %v5843
    %5861 = vmatprep.subr.bf16.mxu0 0
    %5862 = vmatpush2.bf16.msra.mxu0 0
    %5863 = vmatprep.subr.bf16.mxu0 0
    %5864 = vmatpush2.bf16.msra.mxu0 0
    %5865 = vmatprep.subr.bf16.mxu0 0
    %5866 = vmatpush2.bf16.msra.mxu0 0
    %5867 = vmatprep.subr.bf16.mxu0 0
    %5868 = vmatpush2.bf16.msra.mxu0 0
    %5869 = vmatprep.subr.bf16.mxu0 0
    %5870 = vmatpush2.bf16.msra.mxu0 0
    %5871 = vmatprep.subr.bf16.mxu0 0
    %5872 = vmatpush2.bf16.msra.mxu0 0
    %5873 = vmatprep.subr.bf16.mxu0 0
    %5874 = vmatpush2.bf16.msra.mxu0 0
    %5875 = vmatprep.subr.bf16.mxu0 0
    %5876 = vmatpush2.bf16.msra.mxu0 0
    %5877 = vmatprep.mubr.bf16.mxu0 0
    %5878 = vmatmul.mubr.bf16.gmra.mxu0 %v5840
    %v5879 = vpop.f32.mrf.mxu0
    %v5880 = vadd.f32 0.0, %v5879
    %v5881 = vpop.f32.mrf.mxu0
    %v5882 = vpop.f32.mrf.mxu0
    %v5883 = vadd.f32 0.0, %v5882
    %v5884 = vpop.f32.mrf.mxu0
    %5885 = vdwg.mxu0
    %v5887 = vsel %vm3470, %v3385, 0
    %v5890 = vsel %vm3474, %v5778, 0
    %5892 = vmatprep.subr.bf16.mxu0 0
    %5893 = vmatpush1.bf16.msra.mxu0 0
    %5894 = vmatprep.subr.bf16.mxu0 0
    %5895 = vmatpush1.bf16.msra.mxu0 0
    %5896 = vmatprep.subr.bf16.mxu0 0
    %5897 = vmatpush1.bf16.msra.mxu0 0
    %5898 = vmatprep.subr.bf16.mxu0 0
    %5899 = vmatpush1.bf16.msra.mxu0 0
    %5900 = vmatprep.subr.bf16.mxu0 0
    %5901 = vmatpush1.bf16.msra.mxu0 0
    %5902 = vmatprep.subr.bf16.mxu0 0
    %5903 = vmatpush1.bf16.msra.mxu0 0
    %5904 = vmatprep.subr.bf16.mxu0 0
    %5905 = vmatpush1.bf16.msra.mxu0 0
    %5906 = vmatprep.subr.bf16.mxu0 0
    %5907 = vmatpush1.bf16.msra.mxu0 %v5890
    %5908 = vmatprep.subr.bf16.mxu0 0
    %5909 = vmatpush2.bf16.msra.mxu0 0
    %5910 = vmatprep.subr.bf16.mxu0 0
    %5911 = vmatpush2.bf16.msra.mxu0 0
    %5912 = vmatprep.subr.bf16.mxu0 0
    %5913 = vmatpush2.bf16.msra.mxu0 0
    %5914 = vmatprep.subr.bf16.mxu0 0
    %5915 = vmatpush2.bf16.msra.mxu0 0
    %5916 = vmatprep.subr.bf16.mxu0 0
    %5917 = vmatpush2.bf16.msra.mxu0 0
    %5918 = vmatprep.subr.bf16.mxu0 0
    %5919 = vmatpush2.bf16.msra.mxu0 0
    %5920 = vmatprep.subr.bf16.mxu0 0
    %5921 = vmatpush2.bf16.msra.mxu0 0
    %5922 = vmatprep.subr.bf16.mxu0 0
    %5923 = vmatpush2.bf16.msra.mxu0 0
    %5924 = vmatprep.mubr.bf16.mxu0 0
    %5925 = vmatmul.mubr.bf16.gmra.mxu0 %v5887
    %v5926 = vpop.f32.mrf.mxu0
    %v5927 = vadd.f32 0.0, %v5926
    %v5928 = vpop.f32.mrf.mxu0
    %v5929 = vpop.f32.mrf.mxu0
    %v5930 = vadd.f32 0.0, %v5929
    %v5931 = vpop.f32.mrf.mxu0
    %5932 = vdwg.mxu0
    %v5934 = vsel %vm3470, %v3389, 0
    %v5937 = vsel %vm3474, %v5779, 0
    %5939 = vmatprep.subr.bf16.mxu0 0
    %5940 = vmatpush1.bf16.msra.mxu0 0
    %5941 = vmatprep.subr.bf16.mxu0 0
    %5942 = vmatpush1.bf16.msra.mxu0 0
    %5943 = vmatprep.subr.bf16.mxu0 0
    %5944 = vmatpush1.bf16.msra.mxu0 0
    %5945 = vmatprep.subr.bf16.mxu0 0
    %5946 = vmatpush1.bf16.msra.mxu0 0
    %5947 = vmatprep.subr.bf16.mxu0 0
    %5948 = vmatpush1.bf16.msra.mxu0 0
    %5949 = vmatprep.subr.bf16.mxu0 0
    %5950 = vmatpush1.bf16.msra.mxu0 0
    %5951 = vmatprep.subr.bf16.mxu0 0
    %5952 = vmatpush1.bf16.msra.mxu0 0
    %5953 = vmatprep.subr.bf16.mxu0 0
    %5954 = vmatpush1.bf16.msra.mxu0 %v5937
    %5955 = vmatprep.subr.bf16.mxu0 0
    %5956 = vmatpush2.bf16.msra.mxu0 0
    %5957 = vmatprep.subr.bf16.mxu0 0
    %5958 = vmatpush2.bf16.msra.mxu0 0
    %5959 = vmatprep.subr.bf16.mxu0 0
    %5960 = vmatpush2.bf16.msra.mxu0 0
    %5961 = vmatprep.subr.bf16.mxu0 0
    %5962 = vmatpush2.bf16.msra.mxu0 0
    %5963 = vmatprep.subr.bf16.mxu0 0
    %5964 = vmatpush2.bf16.msra.mxu0 0
    %5965 = vmatprep.subr.bf16.mxu0 0
    %5966 = vmatpush2.bf16.msra.mxu0 0
    %5967 = vmatprep.subr.bf16.mxu0 0
    %5968 = vmatpush2.bf16.msra.mxu0 0
    %5969 = vmatprep.subr.bf16.mxu0 0
    %5970 = vmatpush2.bf16.msra.mxu0 0
    %5971 = vmatprep.mubr.bf16.mxu0 0
    %5972 = vmatmul.mubr.bf16.gmra.mxu0 %v5934
    %v5973 = vpop.f32.mrf.mxu0
    %v5974 = vadd.f32 0.0, %v5973
    %v5975 = vpop.f32.mrf.mxu0
    %v5976 = vpop.f32.mrf.mxu0
    %v5977 = vadd.f32 0.0, %v5976
    %v5978 = vpop.f32.mrf.mxu0
    %5979 = vdwg.mxu0
    %v5981 = vsel %vm3470, %v3393, 0
    %v5984 = vsel %vm3474, %v5780, 0
    %5986 = vmatprep.subr.bf16.mxu0 0
    %5987 = vmatpush1.bf16.msra.mxu0 0
    %5988 = vmatprep.subr.bf16.mxu0 0
    %5989 = vmatpush1.bf16.msra.mxu0 0
    %5990 = vmatprep.subr.bf16.mxu0 0
    %5991 = vmatpush1.bf16.msra.mxu0 0
    %5992 = vmatprep.subr.bf16.mxu0 0
    %5993 = vmatpush1.bf16.msra.mxu0 0
    %5994 = vmatprep.subr.bf16.mxu0 0
    %5995 = vmatpush1.bf16.msra.mxu0 0
    %5996 = vmatprep.subr.bf16.mxu0 0
    %5997 = vmatpush1.bf16.msra.mxu0 0
    %5998 = vmatprep.subr.bf16.mxu0 0
    %5999 = vmatpush1.bf16.msra.mxu0 0
    %6000 = vmatprep.subr.bf16.mxu0 0
    %6001 = vmatpush1.bf16.msra.mxu0 %v5984
    %6002 = vmatprep.subr.bf16.mxu0 0
    %6003 = vmatpush2.bf16.msra.mxu0 0
    %6004 = vmatprep.subr.bf16.mxu0 0
    %6005 = vmatpush2.bf16.msra.mxu0 0
    %6006 = vmatprep.subr.bf16.mxu0 0
    %6007 = vmatpush2.bf16.msra.mxu0 0
    %6008 = vmatprep.subr.bf16.mxu0 0
    %6009 = vmatpush2.bf16.msra.mxu0 0
    %6010 = vmatprep.subr.bf16.mxu0 0
    %6011 = vmatpush2.bf16.msra.mxu0 0
    %6012 = vmatprep.subr.bf16.mxu0 0
    %6013 = vmatpush2.bf16.msra.mxu0 0
    %6014 = vmatprep.subr.bf16.mxu0 0
    %6015 = vmatpush2.bf16.msra.mxu0 0
    %6016 = vmatprep.subr.bf16.mxu0 0
    %6017 = vmatpush2.bf16.msra.mxu0 0
    %6018 = vmatprep.mubr.bf16.mxu0 0
    %6019 = vmatmul.mubr.bf16.gmra.mxu0 %v5981
    %v6020 = vpop.f32.mrf.mxu0
    %v6021 = vadd.f32 0.0, %v6020
    %v6022 = vpop.f32.mrf.mxu0
    %v6023 = vpop.f32.mrf.mxu0
    %v6024 = vadd.f32 0.0, %v6023
    %v6025 = vpop.f32.mrf.mxu0
    %6026 = vdwg.mxu0
    %v6028 = vsel %vm3470, %v3397, 0
    %v6031 = vsel %vm3474, %v5781, 0
    %6033 = vmatprep.subr.bf16.mxu0 0
    %6034 = vmatpush1.bf16.msra.mxu0 0
    %6035 = vmatprep.subr.bf16.mxu0 0
    %6036 = vmatpush1.bf16.msra.mxu0 0
    %6037 = vmatprep.subr.bf16.mxu0 0
    %6038 = vmatpush1.bf16.msra.mxu0 0
    %6039 = vmatprep.subr.bf16.mxu0 0
    %6040 = vmatpush1.bf16.msra.mxu0 0
    %6041 = vmatprep.subr.bf16.mxu0 0
    %6042 = vmatpush1.bf16.msra.mxu0 0
    %6043 = vmatprep.subr.bf16.mxu0 0
    %6044 = vmatpush1.bf16.msra.mxu0 0
    %6045 = vmatprep.subr.bf16.mxu0 0
    %6046 = vmatpush1.bf16.msra.mxu0 0
    %6047 = vmatprep.subr.bf16.mxu0 0
    %6048 = vmatpush1.bf16.msra.mxu0 %v6031
    %6049 = vmatprep.subr.bf16.mxu0 0
    %6050 = vmatpush2.bf16.msra.mxu0 0
    %6051 = vmatprep.subr.bf16.mxu0 0
    %6052 = vmatpush2.bf16.msra.mxu0 0
    %6053 = vmatprep.subr.bf16.mxu0 0
    %6054 = vmatpush2.bf16.msra.mxu0 0
    %6055 = vmatprep.subr.bf16.mxu0 0
    %6056 = vmatpush2.bf16.msra.mxu0 0
    %6057 = vmatprep.subr.bf16.mxu0 0
    %6058 = vmatpush2.bf16.msra.mxu0 0
    %6059 = vmatprep.subr.bf16.mxu0 0
    %6060 = vmatpush2.bf16.msra.mxu0 0
    %6061 = vmatprep.subr.bf16.mxu0 0
    %6062 = vmatpush2.bf16.msra.mxu0 0
    %6063 = vmatprep.subr.bf16.mxu0 0
    %6064 = vmatpush2.bf16.msra.mxu0 0
    %6065 = vmatprep.mubr.bf16.mxu0 0
    %6066 = vmatmul.mubr.bf16.gmra.mxu0 %v6028
    %v6067 = vpop.f32.mrf.mxu0
    %v6068 = vadd.f32 0.0, %v6067
    %v6069 = vpop.f32.mrf.mxu0
    %v6070 = vpop.f32.mrf.mxu0
    %v6071 = vadd.f32 0.0, %v6070
    %v6072 = vpop.f32.mrf.mxu0
    %6073 = vdwg.mxu0
    %v6075 = vsel %vm3470, %v3401, 0
    %v6078 = vsel %vm3474, %v5782, 0
    %6080 = vmatprep.subr.bf16.mxu0 0
    %6081 = vmatpush1.bf16.msra.mxu0 0
    %6082 = vmatprep.subr.bf16.mxu0 0
    %6083 = vmatpush1.bf16.msra.mxu0 0
    %6084 = vmatprep.subr.bf16.mxu0 0
    %6085 = vmatpush1.bf16.msra.mxu0 0
    %6086 = vmatprep.subr.bf16.mxu0 0
    %6087 = vmatpush1.bf16.msra.mxu0 0
    %6088 = vmatprep.subr.bf16.mxu0 0
    %6089 = vmatpush1.bf16.msra.mxu0 0
    %6090 = vmatprep.subr.bf16.mxu0 0
    %6091 = vmatpush1.bf16.msra.mxu0 0
    %6092 = vmatprep.subr.bf16.mxu0 0
    %6093 = vmatpush1.bf16.msra.mxu0 0
    %6094 = vmatprep.subr.bf16.mxu0 0
    %6095 = vmatpush1.bf16.msra.mxu0 %v6078
    %6096 = vmatprep.subr.bf16.mxu0 0
    %6097 = vmatpush2.bf16.msra.mxu0 0
    %6098 = vmatprep.subr.bf16.mxu0 0
    %6099 = vmatpush2.bf16.msra.mxu0 0
    %6100 = vmatprep.subr.bf16.mxu0 0
    %6101 = vmatpush2.bf16.msra.mxu0 0
    %6102 = vmatprep.subr.bf16.mxu0 0
    %6103 = vmatpush2.bf16.msra.mxu0 0
    %6104 = vmatprep.subr.bf16.mxu0 0
    %6105 = vmatpush2.bf16.msra.mxu0 0
    %6106 = vmatprep.subr.bf16.mxu0 0
    %6107 = vmatpush2.bf16.msra.mxu0 0
    %6108 = vmatprep.subr.bf16.mxu0 0
    %6109 = vmatpush2.bf16.msra.mxu0 0
    %6110 = vmatprep.subr.bf16.mxu0 0
    %6111 = vmatpush2.bf16.msra.mxu0 0
    %6112 = vmatprep.mubr.bf16.mxu0 0
    %6113 = vmatmul.mubr.bf16.gmra.mxu0 %v6075
    %v6114 = vpop.f32.mrf.mxu0
    %v6115 = vadd.f32 0.0, %v6114
    %v6116 = vpop.f32.mrf.mxu0
    %v6117 = vpop.f32.mrf.mxu0
    %v6118 = vadd.f32 0.0, %v6117
    %v6119 = vpop.f32.mrf.mxu0
    %6120 = vdwg.mxu0
    %v6122 = vsel %vm3470, %v3405, 0
    %v6125 = vsel %vm3474, %v5783, 0
    %6127 = vmatprep.subr.bf16.mxu0 0
    %6128 = vmatpush1.bf16.msra.mxu0 0
    %6129 = vmatprep.subr.bf16.mxu0 0
    %6130 = vmatpush1.bf16.msra.mxu0 0
    %6131 = vmatprep.subr.bf16.mxu0 0
    %6132 = vmatpush1.bf16.msra.mxu0 0
    %6133 = vmatprep.subr.bf16.mxu0 0
    %6134 = vmatpush1.bf16.msra.mxu0 0
    %6135 = vmatprep.subr.bf16.mxu0 0
    %6136 = vmatpush1.bf16.msra.mxu0 0
    %6137 = vmatprep.subr.bf16.mxu0 0
    %6138 = vmatpush1.bf16.msra.mxu0 0
    %6139 = vmatprep.subr.bf16.mxu0 0
    %6140 = vmatpush1.bf16.msra.mxu0 0
    %6141 = vmatprep.subr.bf16.mxu0 0
    %6142 = vmatpush1.bf16.msra.mxu0 %v6125
    %6143 = vmatprep.subr.bf16.mxu0 0
    %6144 = vmatpush2.bf16.msra.mxu0 0
    %6145 = vmatprep.subr.bf16.mxu0 0
    %6146 = vmatpush2.bf16.msra.mxu0 0
    %6147 = vmatprep.subr.bf16.mxu0 0
    %6148 = vmatpush2.bf16.msra.mxu0 0
    %6149 = vmatprep.subr.bf16.mxu0 0
    %6150 = vmatpush2.bf16.msra.mxu0 0
    %6151 = vmatprep.subr.bf16.mxu0 0
    %6152 = vmatpush2.bf16.msra.mxu0 0
    %6153 = vmatprep.subr.bf16.mxu0 0
    %6154 = vmatpush2.bf16.msra.mxu0 0
    %6155 = vmatprep.subr.bf16.mxu0 0
    %6156 = vmatpush2.bf16.msra.mxu0 0
    %6157 = vmatprep.subr.bf16.mxu0 0
    %6158 = vmatpush2.bf16.msra.mxu0 0
    %6159 = vmatprep.mubr.bf16.mxu0 0
    %6160 = vmatmul.mubr.bf16.gmra.mxu0 %v6122
    %v6161 = vpop.f32.mrf.mxu0
    %v6162 = vadd.f32 0.0, %v6161
    %v6163 = vpop.f32.mrf.mxu0
    %v6164 = vpop.f32.mrf.mxu0
    %v6165 = vadd.f32 0.0, %v6164
    %v6166 = vpop.f32.mrf.mxu0
    %6167 = vdwg.mxu0
    %v6169 = vsel %vm3470, %v3409, 0
    %v6172 = vsel %vm3474, %v5784, 0
    %6174 = vmatprep.subr.bf16.mxu0 0
    %6175 = vmatpush1.bf16.msra.mxu0 0
    %6176 = vmatprep.subr.bf16.mxu0 0
    %6177 = vmatpush1.bf16.msra.mxu0 0
    %6178 = vmatprep.subr.bf16.mxu0 0
    %6179 = vmatpush1.bf16.msra.mxu0 0
    %6180 = vmatprep.subr.bf16.mxu0 0
    %6181 = vmatpush1.bf16.msra.mxu0 0
    %6182 = vmatprep.subr.bf16.mxu0 0
    %6183 = vmatpush1.bf16.msra.mxu0 0
    %6184 = vmatprep.subr.bf16.mxu0 0
    %6185 = vmatpush1.bf16.msra.mxu0 0
    %6186 = vmatprep.subr.bf16.mxu0 0
    %6187 = vmatpush1.bf16.msra.mxu0 0
    %6188 = vmatprep.subr.bf16.mxu0 0
    %6189 = vmatpush1.bf16.msra.mxu0 %v6172
    %6190 = vmatprep.subr.bf16.mxu0 0
    %6191 = vmatpush2.bf16.msra.mxu0 0
    %6192 = vmatprep.subr.bf16.mxu0 0
    %6193 = vmatpush2.bf16.msra.mxu0 0
    %6194 = vmatprep.subr.bf16.mxu0 0
    %6195 = vmatpush2.bf16.msra.mxu0 0
    %6196 = vmatprep.subr.bf16.mxu0 0
    %6197 = vmatpush2.bf16.msra.mxu0 0
    %6198 = vmatprep.subr.bf16.mxu0 0
    %6199 = vmatpush2.bf16.msra.mxu0 0
    %6200 = vmatprep.subr.bf16.mxu0 0
    %6201 = vmatpush2.bf16.msra.mxu0 0
    %6202 = vmatprep.subr.bf16.mxu0 0
    %6203 = vmatpush2.bf16.msra.mxu0 0
    %6204 = vmatprep.subr.bf16.mxu0 0
    %6205 = vmatpush2.bf16.msra.mxu0 0
    %6206 = vmatprep.mubr.bf16.mxu0 0
    %6207 = vmatmul.mubr.bf16.gmra.mxu0 %v6169
    %v6208 = vpop.f32.mrf.mxu0
    %v6209 = vadd.f32 0.0, %v6208
    %v6210 = vpop.f32.mrf.mxu0
    %v6211 = vpop.f32.mrf.mxu0
    %v6212 = vadd.f32 0.0, %v6211
    %v6213 = vpop.f32.mrf.mxu0
    %6214 = vdwg.mxu0
    %v6216 = vsel %vm3470, %v3413, 0
    %v6219 = vsel %vm3474, %v5785, 0
    %6221 = vmatprep.subr.bf16.mxu0 0
    %6222 = vmatpush1.bf16.msra.mxu0 0
    %6223 = vmatprep.subr.bf16.mxu0 0
    %6224 = vmatpush1.bf16.msra.mxu0 0
    %6225 = vmatprep.subr.bf16.mxu0 0
    %6226 = vmatpush1.bf16.msra.mxu0 0
    %6227 = vmatprep.subr.bf16.mxu0 0
    %6228 = vmatpush1.bf16.msra.mxu0 0
    %6229 = vmatprep.subr.bf16.mxu0 0
    %6230 = vmatpush1.bf16.msra.mxu0 0
    %6231 = vmatprep.subr.bf16.mxu0 0
    %6232 = vmatpush1.bf16.msra.mxu0 0
    %6233 = vmatprep.subr.bf16.mxu0 0
    %6234 = vmatpush1.bf16.msra.mxu0 0
    %6235 = vmatprep.subr.bf16.mxu0 0
    %6236 = vmatpush1.bf16.msra.mxu0 %v6219
    %6237 = vmatprep.subr.bf16.mxu0 0
    %6238 = vmatpush2.bf16.msra.mxu0 0
    %6239 = vmatprep.subr.bf16.mxu0 0
    %6240 = vmatpush2.bf16.msra.mxu0 0
    %6241 = vmatprep.subr.bf16.mxu0 0
    %6242 = vmatpush2.bf16.msra.mxu0 0
    %6243 = vmatprep.subr.bf16.mxu0 0
    %6244 = vmatpush2.bf16.msra.mxu0 0
    %6245 = vmatprep.subr.bf16.mxu0 0
    %6246 = vmatpush2.bf16.msra.mxu0 0
    %6247 = vmatprep.subr.bf16.mxu0 0
    %6248 = vmatpush2.bf16.msra.mxu0 0
    %6249 = vmatprep.subr.bf16.mxu0 0
    %6250 = vmatpush2.bf16.msra.mxu0 0
    %6251 = vmatprep.subr.bf16.mxu0 0
    %6252 = vmatpush2.bf16.msra.mxu0 0
    %6253 = vmatprep.mubr.bf16.mxu0 0
    %6254 = vmatmul.mubr.bf16.gmra.mxu0 %v6216
    %v6255 = vpop.f32.mrf.mxu0
    %v6256 = vadd.f32 0.0, %v6255
    %v6257 = vpop.f32.mrf.mxu0
    %v6258 = vpop.f32.mrf.mxu0
    %v6259 = vadd.f32 0.0, %v6258
    %v6260 = vpop.f32.mrf.mxu0
    %6261 = vdwg.mxu0
    %v6263 = vsel %vm3470, %v3417, 0
    %v6266 = vsel %vm3474, %v5786, 0
    %6268 = vmatprep.subr.bf16.mxu0 0
    %6269 = vmatpush1.bf16.msra.mxu0 0
    %6270 = vmatprep.subr.bf16.mxu0 0
    %6271 = vmatpush1.bf16.msra.mxu0 0
    %6272 = vmatprep.subr.bf16.mxu0 0
    %6273 = vmatpush1.bf16.msra.mxu0 0
    %6274 = vmatprep.subr.bf16.mxu0 0
    %6275 = vmatpush1.bf16.msra.mxu0 0
    %6276 = vmatprep.subr.bf16.mxu0 0
    %6277 = vmatpush1.bf16.msra.mxu0 0
    %6278 = vmatprep.subr.bf16.mxu0 0
    %6279 = vmatpush1.bf16.msra.mxu0 0
    %6280 = vmatprep.subr.bf16.mxu0 0
    %6281 = vmatpush1.bf16.msra.mxu0 0
    %6282 = vmatprep.subr.bf16.mxu0 0
    %6283 = vmatpush1.bf16.msra.mxu0 %v6266
    %6284 = vmatprep.subr.bf16.mxu0 0
    %6285 = vmatpush2.bf16.msra.mxu0 0
    %6286 = vmatprep.subr.bf16.mxu0 0
    %6287 = vmatpush2.bf16.msra.mxu0 0
    %6288 = vmatprep.subr.bf16.mxu0 0
    %6289 = vmatpush2.bf16.msra.mxu0 0
    %6290 = vmatprep.subr.bf16.mxu0 0
    %6291 = vmatpush2.bf16.msra.mxu0 0
    %6292 = vmatprep.subr.bf16.mxu0 0
    %6293 = vmatpush2.bf16.msra.mxu0 0
    %6294 = vmatprep.subr.bf16.mxu0 0
    %6295 = vmatpush2.bf16.msra.mxu0 0
    %6296 = vmatprep.subr.bf16.mxu0 0
    %6297 = vmatpush2.bf16.msra.mxu0 0
    %6298 = vmatprep.subr.bf16.mxu0 0
    %6299 = vmatpush2.bf16.msra.mxu0 0
    %6300 = vmatprep.mubr.bf16.mxu0 0
    %6301 = vmatmul.mubr.bf16.gmra.mxu0 %v6263
    %v6302 = vpop.f32.mrf.mxu0
    %v6303 = vadd.f32 0.0, %v6302
    %v6304 = vpop.f32.mrf.mxu0
    %v6305 = vpop.f32.mrf.mxu0
    %v6306 = vadd.f32 0.0, %v6305
    %v6307 = vpop.f32.mrf.mxu0
    %6308 = vdwg.mxu0
    %v6310 = vsel %vm3470, %v3421, 0
    %v6313 = vsel %vm3474, %v5787, 0
    %6315 = vmatprep.subr.bf16.mxu0 0
    %6316 = vmatpush1.bf16.msra.mxu0 0
    %6317 = vmatprep.subr.bf16.mxu0 0
    %6318 = vmatpush1.bf16.msra.mxu0 0
    %6319 = vmatprep.subr.bf16.mxu0 0
    %6320 = vmatpush1.bf16.msra.mxu0 0
    %6321 = vmatprep.subr.bf16.mxu0 0
    %6322 = vmatpush1.bf16.msra.mxu0 0
    %6323 = vmatprep.subr.bf16.mxu0 0
    %6324 = vmatpush1.bf16.msra.mxu0 0
    %6325 = vmatprep.subr.bf16.mxu0 0
    %6326 = vmatpush1.bf16.msra.mxu0 0
    %6327 = vmatprep.subr.bf16.mxu0 0
    %6328 = vmatpush1.bf16.msra.mxu0 0
    %6329 = vmatprep.subr.bf16.mxu0 0
    %6330 = vmatpush1.bf16.msra.mxu0 %v6313
    %6331 = vmatprep.subr.bf16.mxu0 0
    %6332 = vmatpush2.bf16.msra.mxu0 0
    %6333 = vmatprep.subr.bf16.mxu0 0
    %6334 = vmatpush2.bf16.msra.mxu0 0
    %6335 = vmatprep.subr.bf16.mxu0 0
    %6336 = vmatpush2.bf16.msra.mxu0 0
    %6337 = vmatprep.subr.bf16.mxu0 0
    %6338 = vmatpush2.bf16.msra.mxu0 0
    %6339 = vmatprep.subr.bf16.mxu0 0
    %6340 = vmatpush2.bf16.msra.mxu0 0
    %6341 = vmatprep.subr.bf16.mxu0 0
    %6342 = vmatpush2.bf16.msra.mxu0 0
    %6343 = vmatprep.subr.bf16.mxu0 0
    %6344 = vmatpush2.bf16.msra.mxu0 0
    %6345 = vmatprep.subr.bf16.mxu0 0
    %6346 = vmatpush2.bf16.msra.mxu0 0
    %6347 = vmatprep.mubr.bf16.mxu0 0
    %6348 = vmatmul.mubr.bf16.gmra.mxu0 %v6310
    %v6349 = vpop.f32.mrf.mxu0
    %v6350 = vadd.f32 0.0, %v6349
    %v6351 = vpop.f32.mrf.mxu0
    %v6352 = vpop.f32.mrf.mxu0
    %v6353 = vadd.f32 0.0, %v6352
    %v6354 = vpop.f32.mrf.mxu0
    %6355 = vdwg.mxu0
    %v6357 = vsel %vm3470, %v3425, 0
    %v6360 = vsel %vm3474, %v5788, 0
    %6362 = vmatprep.subr.bf16.mxu0 0
    %6363 = vmatpush1.bf16.msra.mxu0 0
    %6364 = vmatprep.subr.bf16.mxu0 0
    %6365 = vmatpush1.bf16.msra.mxu0 0
    %6366 = vmatprep.subr.bf16.mxu0 0
    %6367 = vmatpush1.bf16.msra.mxu0 0
    %6368 = vmatprep.subr.bf16.mxu0 0
    %6369 = vmatpush1.bf16.msra.mxu0 0
    %6370 = vmatprep.subr.bf16.mxu0 0
    %6371 = vmatpush1.bf16.msra.mxu0 0
    %6372 = vmatprep.subr.bf16.mxu0 0
    %6373 = vmatpush1.bf16.msra.mxu0 0
    %6374 = vmatprep.subr.bf16.mxu0 0
    %6375 = vmatpush1.bf16.msra.mxu0 0
    %6376 = vmatprep.subr.bf16.mxu0 0
    %6377 = vmatpush1.bf16.msra.mxu0 %v6360
    %6378 = vmatprep.subr.bf16.mxu0 0
    %6379 = vmatpush2.bf16.msra.mxu0 0
    %6380 = vmatprep.subr.bf16.mxu0 0
    %6381 = vmatpush2.bf16.msra.mxu0 0
    %6382 = vmatprep.subr.bf16.mxu0 0
    %6383 = vmatpush2.bf16.msra.mxu0 0
    %6384 = vmatprep.subr.bf16.mxu0 0
    %6385 = vmatpush2.bf16.msra.mxu0 0
    %6386 = vmatprep.subr.bf16.mxu0 0
    %6387 = vmatpush2.bf16.msra.mxu0 0
    %6388 = vmatprep.subr.bf16.mxu0 0
    %6389 = vmatpush2.bf16.msra.mxu0 0
    %6390 = vmatprep.subr.bf16.mxu0 0
    %6391 = vmatpush2.bf16.msra.mxu0 0
    %6392 = vmatprep.subr.bf16.mxu0 0
    %6393 = vmatpush2.bf16.msra.mxu0 0
    %6394 = vmatprep.mubr.bf16.mxu0 0
    %6395 = vmatmul.mubr.bf16.gmra.mxu0 %v6357
    %v6396 = vpop.f32.mrf.mxu0
    %v6397 = vadd.f32 0.0, %v6396
    %v6398 = vpop.f32.mrf.mxu0
    %v6399 = vpop.f32.mrf.mxu0
    %v6400 = vadd.f32 0.0, %v6399
    %v6401 = vpop.f32.mrf.mxu0
    %6402 = vdwg.mxu0
    %v6404 = vsel %vm3470, %v3429, 0
    %v6407 = vsel %vm3474, %v5789, 0
    %6409 = vmatprep.subr.bf16.mxu0 0
    %6410 = vmatpush1.bf16.msra.mxu0 0
    %6411 = vmatprep.subr.bf16.mxu0 0
    %6412 = vmatpush1.bf16.msra.mxu0 0
    %6413 = vmatprep.subr.bf16.mxu0 0
    %6414 = vmatpush1.bf16.msra.mxu0 0
    %6415 = vmatprep.subr.bf16.mxu0 0
    %6416 = vmatpush1.bf16.msra.mxu0 0
    %6417 = vmatprep.subr.bf16.mxu0 0
    %6418 = vmatpush1.bf16.msra.mxu0 0
    %6419 = vmatprep.subr.bf16.mxu0 0
    %6420 = vmatpush1.bf16.msra.mxu0 0
    %6421 = vmatprep.subr.bf16.mxu0 0
    %6422 = vmatpush1.bf16.msra.mxu0 0
    %6423 = vmatprep.subr.bf16.mxu0 0
    %6424 = vmatpush1.bf16.msra.mxu0 %v6407
    %6425 = vmatprep.subr.bf16.mxu0 0
    %6426 = vmatpush2.bf16.msra.mxu0 0
    %6427 = vmatprep.subr.bf16.mxu0 0
    %6428 = vmatpush2.bf16.msra.mxu0 0
    %6429 = vmatprep.subr.bf16.mxu0 0
    %6430 = vmatpush2.bf16.msra.mxu0 0
    %6431 = vmatprep.subr.bf16.mxu0 0
    %6432 = vmatpush2.bf16.msra.mxu0 0
    %6433 = vmatprep.subr.bf16.mxu0 0
    %6434 = vmatpush2.bf16.msra.mxu0 0
    %6435 = vmatprep.subr.bf16.mxu0 0
    %6436 = vmatpush2.bf16.msra.mxu0 0
    %6437 = vmatprep.subr.bf16.mxu0 0
    %6438 = vmatpush2.bf16.msra.mxu0 0
    %6439 = vmatprep.subr.bf16.mxu0 0
    %6440 = vmatpush2.bf16.msra.mxu0 0
    %6441 = vmatprep.mubr.bf16.mxu0 0
    %6442 = vmatmul.mubr.bf16.gmra.mxu0 %v6404
    %v6443 = vpop.f32.mrf.mxu0
    %v6444 = vadd.f32 0.0, %v6443
    %v6445 = vpop.f32.mrf.mxu0
    %v6446 = vpop.f32.mrf.mxu0
    %v6447 = vadd.f32 0.0, %v6446
    %v6448 = vpop.f32.mrf.mxu0
    %6449 = vdwg.mxu0
    %v6451 = vsel %vm3470, %v3433, 0
    %v6454 = vsel %vm3474, %v5790, 0
    %6456 = vmatprep.subr.bf16.mxu0 0
    %6457 = vmatpush1.bf16.msra.mxu0 0
    %6458 = vmatprep.subr.bf16.mxu0 0
    %6459 = vmatpush1.bf16.msra.mxu0 0
    %6460 = vmatprep.subr.bf16.mxu0 0
    %6461 = vmatpush1.bf16.msra.mxu0 0
    %6462 = vmatprep.subr.bf16.mxu0 0
    %6463 = vmatpush1.bf16.msra.mxu0 0
    %6464 = vmatprep.subr.bf16.mxu0 0
    %6465 = vmatpush1.bf16.msra.mxu0 0
    %6466 = vmatprep.subr.bf16.mxu0 0
    %6467 = vmatpush1.bf16.msra.mxu0 0
    %6468 = vmatprep.subr.bf16.mxu0 0
    %6469 = vmatpush1.bf16.msra.mxu0 0
    %6470 = vmatprep.subr.bf16.mxu0 0
    %6471 = vmatpush1.bf16.msra.mxu0 %v6454
    %6472 = vmatprep.subr.bf16.mxu0 0
    %6473 = vmatpush2.bf16.msra.mxu0 0
    %6474 = vmatprep.subr.bf16.mxu0 0
    %6475 = vmatpush2.bf16.msra.mxu0 0
    %6476 = vmatprep.subr.bf16.mxu0 0
    %6477 = vmatpush2.bf16.msra.mxu0 0
    %6478 = vmatprep.subr.bf16.mxu0 0
    %6479 = vmatpush2.bf16.msra.mxu0 0
    %6480 = vmatprep.subr.bf16.mxu0 0
    %6481 = vmatpush2.bf16.msra.mxu0 0
    %6482 = vmatprep.subr.bf16.mxu0 0
    %6483 = vmatpush2.bf16.msra.mxu0 0
    %6484 = vmatprep.subr.bf16.mxu0 0
    %6485 = vmatpush2.bf16.msra.mxu0 0
    %6486 = vmatprep.subr.bf16.mxu0 0
    %6487 = vmatpush2.bf16.msra.mxu0 0
    %6488 = vmatprep.mubr.bf16.mxu0 0
    %6489 = vmatmul.mubr.bf16.gmra.mxu0 %v6451
    %v6490 = vpop.f32.mrf.mxu0
    %v6491 = vadd.f32 0.0, %v6490
    %v6492 = vpop.f32.mrf.mxu0
    %v6493 = vpop.f32.mrf.mxu0
    %v6494 = vadd.f32 0.0, %v6493
    %v6495 = vpop.f32.mrf.mxu0
    %6496 = vdwg.mxu0
    %v6498 = vsel %vm3470, %v3437, 0
    %v6501 = vsel %vm3474, %v5791, 0
    %6503 = vmatprep.subr.bf16.mxu0 0
    %6504 = vmatpush1.bf16.msra.mxu0 0
    %6505 = vmatprep.subr.bf16.mxu0 0
    %6506 = vmatpush1.bf16.msra.mxu0 0
    %6507 = vmatprep.subr.bf16.mxu0 0
    %6508 = vmatpush1.bf16.msra.mxu0 0
    %6509 = vmatprep.subr.bf16.mxu0 0
    %6510 = vmatpush1.bf16.msra.mxu0 0
    %6511 = vmatprep.subr.bf16.mxu0 0
    %6512 = vmatpush1.bf16.msra.mxu0 0
    %6513 = vmatprep.subr.bf16.mxu0 0
    %6514 = vmatpush1.bf16.msra.mxu0 0
    %6515 = vmatprep.subr.bf16.mxu0 0
    %6516 = vmatpush1.bf16.msra.mxu0 0
    %6517 = vmatprep.subr.bf16.mxu0 0
    %6518 = vmatpush1.bf16.msra.mxu0 %v6501
    %6519 = vmatprep.subr.bf16.mxu0 0
    %6520 = vmatpush2.bf16.msra.mxu0 0
    %6521 = vmatprep.subr.bf16.mxu0 0
    %6522 = vmatpush2.bf16.msra.mxu0 0
    %6523 = vmatprep.subr.bf16.mxu0 0
    %6524 = vmatpush2.bf16.msra.mxu0 0
    %6525 = vmatprep.subr.bf16.mxu0 0
    %6526 = vmatpush2.bf16.msra.mxu0 0
    %6527 = vmatprep.subr.bf16.mxu0 0
    %6528 = vmatpush2.bf16.msra.mxu0 0
    %6529 = vmatprep.subr.bf16.mxu0 0
    %6530 = vmatpush2.bf16.msra.mxu0 0
    %6531 = vmatprep.subr.bf16.mxu0 0
    %6532 = vmatpush2.bf16.msra.mxu0 0
    %6533 = vmatprep.subr.bf16.mxu0 0
    %6534 = vmatpush2.bf16.msra.mxu0 0
    %6535 = vmatprep.mubr.bf16.mxu0 0
    %6536 = vmatmul.mubr.bf16.gmra.mxu0 %v6498
    %v6537 = vpop.f32.mrf.mxu0
    %v6538 = vadd.f32 0.0, %v6537
    %v6539 = vpop.f32.mrf.mxu0
    %v6540 = vpop.f32.mrf.mxu0
    %v6541 = vadd.f32 0.0, %v6540
    %v6542 = vpop.f32.mrf.mxu0
    %6543 = vdwg.mxu0
    %v6544 = vadd.f32 %v5744, %v5833
    %v6545 = vadd.f32 %v5745, %v5836
    %v6546 = vadd.f32 %v5746, %v5880
    %v6547 = vadd.f32 %v5747, %v5883
    %v6548 = vadd.f32 %v5748, %v5927
    %v6549 = vadd.f32 %v5749, %v5930
    %v6550 = vadd.f32 %v5750, %v5974
    %v6551 = vadd.f32 %v5751, %v5977
    %v6552 = vadd.f32 %v5752, %v6021
    %v6553 = vadd.f32 %v5753, %v6024
    %v6554 = vadd.f32 %v5754, %v6068
    %v6555 = vadd.f32 %v5755, %v6071
    %v6556 = vadd.f32 %v5756, %v6115
    %v6557 = vadd.f32 %v5757, %v6118
    %v6558 = vadd.f32 %v5758, %v6162
    %v6559 = vadd.f32 %v5759, %v6165
    %v6560 = vadd.f32 %v5760, %v6209
    %v6561 = vadd.f32 %v5761, %v6212
    %v6562 = vadd.f32 %v5762, %v6256
    %v6563 = vadd.f32 %v5763, %v6259
    %v6564 = vadd.f32 %v5764, %v6303
    %v6565 = vadd.f32 %v5765, %v6306
    %v6566 = vadd.f32 %v5766, %v6350
    %v6567 = vadd.f32 %v5767, %v6353
    %v6568 = vadd.f32 %v5768, %v6397
    %v6569 = vadd.f32 %v5769, %v6400
    %v6570 = vadd.f32 %v5770, %v6444
    %v6571 = vadd.f32 %v5771, %v6447
    %v6572 = vadd.f32 %v5772, %v6491
    %v6573 = vadd.f32 %v5773, %v6494
    %v6574 = vadd.f32 %v5774, %v6538
    %v6575 = vadd.f32 %v5775, %v6541
    %v6576 = vld [vmem:[%s3] sm:$0x1]
    %v6578 = vlaneseq
    %v6579 = vshrl.u32 %v6578, 7
    %v6580 = vsub.s32 0, %v6579
    %v6581 = vrot.slane %v6576, %v6580
    %v6583 = vadd.f32 %v6544, %v6581
    %v6584 = vadd.f32 %v6545, %v6581
    %v6585 = vadd.f32 %v6546, %v6581
    %v6586 = vadd.f32 %v6547, %v6581
    %v6587 = vadd.f32 %v6548, %v6581
    %v6588 = vadd.f32 %v6549, %v6581
    %v6589 = vadd.f32 %v6550, %v6581
    %v6590 = vadd.f32 %v6551, %v6581
    %v6591 = vadd.f32 %v6552, %v6581
    %v6592 = vadd.f32 %v6553, %v6581
    %v6593 = vadd.f32 %v6554, %v6581
    %v6594 = vadd.f32 %v6555, %v6581
    %v6595 = vadd.f32 %v6556, %v6581
    %v6596 = vadd.f32 %v6557, %v6581
    %v6597 = vadd.f32 %v6558, %v6581
    %v6598 = vadd.f32 %v6559, %v6581
    %v6599 = vadd.f32 %v6560, %v6581
    %v6600 = vadd.f32 %v6561, %v6581
    %v6601 = vadd.f32 %v6562, %v6581
    %v6602 = vadd.f32 %v6563, %v6581
    %v6603 = vadd.f32 %v6564, %v6581
    %v6604 = vadd.f32 %v6565, %v6581
    %v6605 = vadd.f32 %v6566, %v6581
    %v6606 = vadd.f32 %v6567, %v6581
    %v6607 = vadd.f32 %v6568, %v6581
    %v6608 = vadd.f32 %v6569, %v6581
    %v6609 = vadd.f32 %v6570, %v6581
    %v6610 = vadd.f32 %v6571, %v6581
    %v6611 = vadd.f32 %v6572, %v6581
    %v6612 = vadd.f32 %v6573, %v6581
    %v6613 = vadd.f32 %v6574, %v6581
    %v6614 = vadd.f32 %v6575, %v6581
    %6615 = vst [vmem:[#allocation2] sm:$0xff] %v6583
    %6616 = vst [vmem:[#allocation2 + $0x8] sm:$0xff] %v6584
    %6617 = vst [vmem:[#allocation2 + $0x10] sm:$0xff] %v6585
    %6618 = vst [vmem:[#allocation2 + $0x18] sm:$0xff] %v6586
    %6619 = vst [vmem:[#allocation2 + $0x20] sm:$0xff] %v6587
    %6620 = vst [vmem:[#allocation2 + $0x28] sm:$0xff] %v6588
    %6621 = vst [vmem:[#allocation2 + $0x30] sm:$0xff] %v6589
    %6622 = vst [vmem:[#allocation2 + $0x38] sm:$0xff] %v6590
    %6623 = vst [vmem:[#allocation2 + $0x40] sm:$0xff] %v6591
    %6624 = vst [vmem:[#allocation2 + $0x48] sm:$0xff] %v6592
    %6625 = vst [vmem:[#allocation2 + $0x50] sm:$0xff] %v6593
    %6626 = vst [vmem:[#allocation2 + $0x58] sm:$0xff] %v6594
    %6627 = vst [vmem:[#allocation2 + $0x60] sm:$0xff] %v6595
    %6628 = vst [vmem:[#allocation2 + $0x68] sm:$0xff] %v6596
    %6629 = vst [vmem:[#allocation2 + $0x70] sm:$0xff] %v6597
    %6630 = vst [vmem:[#allocation2 + $0x78] sm:$0xff] %v6598
    %6631 = vst [vmem:[#allocation2 + $0x80] sm:$0xff] %v6599
    %6632 = vst [vmem:[#allocation2 + $0x88] sm:$0xff] %v6600
    %6633 = vst [vmem:[#allocation2 + $0x90] sm:$0xff] %v6601
    %6634 = vst [vmem:[#allocation2 + $0x98] sm:$0xff] %v6602
    %6635 = vst [vmem:[#allocation2 + $0xa0] sm:$0xff] %v6603
    %6636 = vst [vmem:[#allocation2 + $0xa8] sm:$0xff] %v6604
    %6637 = vst [vmem:[#allocation2 + $0xb0] sm:$0xff] %v6605
    %6638 = vst [vmem:[#allocation2 + $0xb8] sm:$0xff] %v6606
    %6639 = vst [vmem:[#allocation2 + $0xc0] sm:$0xff] %v6607
    %6640 = vst [vmem:[#allocation2 + $0xc8] sm:$0xff] %v6608
    %6641 = vst [vmem:[#allocation2 + $0xd0] sm:$0xff] %v6609
    %6642 = vst [vmem:[#allocation2 + $0xd8] sm:$0xff] %v6610
    %6643 = vst [vmem:[#allocation2 + $0xe0] sm:$0xff] %v6611
    %6644 = vst [vmem:[#allocation2 + $0xe8] sm:$0xff] %v6612
    %6645 = vst [vmem:[#allocation2 + $0xf0] sm:$0xff] %v6613
    %6646 = vst [vmem:[#allocation2 + $0xf8] sm:$0xff] %v6614
    // Predicated region
    $region18: #{_qformer_pallas.1} parent=1 // pred_check
      _
    $region19: #{_qformer_pallas.1} parent=1 // pred_check_branch
      %6648 = sbr.rel (0) target = $region21
    $region20: #{_qformer_pallas.1} parent=1 // pred_region
      %s6650 = ssub.s32 4096, 4096
      %6651 = vsyncadd [#allocation3], %s6650
      %s6652 = sshll.u32 [#allocation2], 4
      %s6653 = int_to_ptr.vmem [resolvable:$true] %s6652
      %6658 = dma.vmem_to_hbm [thread:$0]  %s6653, 4096, %s4, [#allocation3], 128, 128, 8
    $region21: #{_qformer_pallas.1} parent=1 // pred_fallthru
      _
    // Predicated region
    $region22: #{_qformer_pallas.1} parent=1 // pred_check
      _
    $region23: #{_qformer_pallas.1} parent=1 // pred_check_branch
      %6660 = sbr.rel (0) target = $region25
    $region24: #{_qformer_pallas.1} parent=1 // pred_region
      %6661 = dma.done [#allocation3], 4096
    $region25: #{_qformer_pallas.1} parent=1 // pred_fallthru
      _
    %6662 = vsyncpa [#allocation3], 1

</llo_original>
